<compile_context>
chip_gen: v6e
topology: v6e:2x2x1
jax: 0.10.0
libtpu: 0.0.40
codegen_flags: <defaults>
</compile_context>

<pallas_src>
import functools
import math

import jax
import jax.numpy as jnp
from jax.experimental import pallas as pl
from jax.experimental.pallas import tpu as pltpu

# ----------------------------- tiny BERT config ------------------------------
VOCAB_SIZE = 50
TYPE_VOCAB_SIZE = 2
MAX_POSITIONS = 16
HIDDEN = 32
NUM_LAYERS = 2
NUM_HEADS = 4
HEAD_DIM = HIDDEN // NUM_HEADS
INTERMEDIATE = 64
LN_EPS = 1e-12
NEG_FILL = -10000000.0  # value used by masked_fill_ in the reference module


# ------------------------------ fused Pallas kernel ------------------------------
def _bert_qa_kernel(
    x_ref,            # (B*S, H)  summed embeddings (pre-LayerNorm)
    mask_bs_ref,      # (B, S)    attention mask as float (1.0 valid, 0.0 pad)
    mask_m1_ref,      # (B*S, 1)  same mask, row-major, for the QA masked-fill
    emb_g_ref, emb_b_ref,            # (1, H)
    qkv_w_ref, qkv_b_ref,            # (L, H, 3H), (L, 1, 3H)
    o_w_ref, o_b_ref,                # (L, H, H),  (L, 1, H)
    ln1_g_ref, ln1_b_ref,            # (L, 1, H)
    i_w_ref, i_b_ref,                # (L, H, I),  (L, 1, I)
    f_w_ref, f_b_ref,                # (L, I, H),  (L, 1, H)
    ln2_g_ref, ln2_b_ref,            # (L, 1, H)
    qa_w_ref, qa_b_ref,              # (H, 2), (1, 2)
    logits_ref,                      # out: (B*S, 2)
    ctx_ref,                         # scratch: (B*S, H) f32
    *, batch, seq,
):
    def layer_norm(x, g, b):
        mean = jnp.mean(x, axis=-1, keepdims=True)
        var = jnp.mean((x - mean) ** 2, axis=-1, keepdims=True)
        return (x - mean) * jax.lax.rsqrt(var + LN_EPS) * g + b

    def gelu(x):
        # TODO(synk): HF BERT "gelu" is erf-based; tanh approximation used here.
        return 0.5 * x * (1.0 + jnp.tanh(0.7978845608028654 * (x + 0.044715 * x * x * x)))

    # Additive attention bias, HF convention: (1 - mask) * -10000
    bias = (1.0 - mask_bs_ref[...].astype(jnp.float32)) * -10000.0   # (B, S)
    scale = 1.0 / math.sqrt(HEAD_DIM)

    # Embedding LayerNorm.
    x = layer_norm(x_ref[...].astype(jnp.float32), emb_g_ref[...], emb_b_ref[...])

    # Encoder layers (fully unrolled at trace time; weights stay in VMEM).
    for l in range(NUM_LAYERS):
        # Fused QKV projection: one (M, H) x (H, 3H) MXU matmul.
        qkv = jnp.dot(x, qkv_w_ref[l], preferred_element_type=jnp.float32) + qkv_b_ref[l]
        q = qkv[:, 0 * HIDDEN:1 * HIDDEN]
        k = qkv[:, 1 * HIDDEN:2 * HIDDEN]
        v = qkv[:, 2 * HIDDEN:3 * HIDDEN]

        # Per-(batch, head) attention via in-VMEM column/row slicing.
        for b in range(batch):
            rows = slice(b * seq, (b + 1) * seq)
            bias_b = bias[b:b + 1, :]                         # (1, S)
            for h in range(NUM_HEADS):
                cols = slice(h * HEAD_DIM, (h + 1) * HEAD_DIM)
                qh = q[rows, cols]                            # (S, dh)
                kh = k[rows, cols]                            # (S, dh)
                vh = v[rows, cols]                            # (S, dh)
                s = jnp.dot(qh, kh.T, preferred_element_type=jnp.float32) * scale + bias_b
                s = s - jnp.max(s, axis=-1, keepdims=True)
                p = jnp.exp(s)
                p = p * pl.reciprocal(jnp.sum(p, axis=-1, keepdims=True), approx=True)
                ctx_ref[rows, cols] = jnp.dot(p, vh, preferred_element_type=jnp.float32)

        # Output projection + residual + LayerNorm.
        attn = jnp.dot(ctx_ref[...], o_w_ref[l], preferred_element_type=jnp.float32) + o_b_ref[l]
        x = layer_norm(attn + x, ln1_g_ref[l], ln1_b_ref[l])

        # Feed-forward (dense -> GELU -> dense) + residual + LayerNorm.
        ff = gelu(jnp.dot(x, i_w_ref[l], preferred_element_type=jnp.float32) + i_b_ref[l])
        ff = jnp.dot(ff, f_w_ref[l], preferred_element_type=jnp.float32) + f_b_ref[l]
        x = layer_norm(ff + x, ln2_g_ref[l], ln2_b_ref[l])

    # QA head + masked_fill_(mask==0, -1e7); single lane-contiguous (M, 2) store.
    logits = jnp.dot(x, qa_w_ref[...], preferred_element_type=jnp.float32) + qa_b_ref[...]
    valid = mask_m1_ref[...] > 0.0                            # (M, 1)
    logits_ref[...] = jnp.where(valid, logits, NEG_FILL).astype(logits_ref.dtype)


# ------------------------------- model wrapper -------------------------------
def bert_qa_forward(params, token_ids, segment_ids, attention_mask):
    B, S = token_ids.shape
    pos_ids = jnp.arange(S)
    # Embedding gathers stay in plain JAX (glue); everything else is one kernel.
    emb = (params["word_emb"][token_ids]
           + params["pos_emb"][pos_ids][None, :, :]
           + params["type_emb"][segment_ids])                 # (B, S, H)
    x = emb.reshape(B * S, HIDDEN)

    mask_bs = attention_mask.astype(jnp.float32)              # (B, S)
    mask_m1 = mask_bs.reshape(B * S, 1)                       # (B*S, 1)

    kern = functools.partial(_bert_qa_kernel, batch=B, seq=S)
    n_inputs = 19
    vmem_spec = pl.BlockSpec(memory_space=pltpu.MemorySpace.VMEM)

    logits = pl.pallas_call(
        kern,
        out_shape=jax.ShapeDtypeStruct((B * S, 2), jnp.float32),
        in_specs=[vmem_spec] * n_inputs,
        out_specs=vmem_spec,
        scratch_shapes=[pltpu.VMEM((B * S, HIDDEN), jnp.float32)],
    )(
        x, mask_bs, mask_m1,
        params["emb_ln_g"], params["emb_ln_b"],
        params["qkv_w"], params["qkv_b"],
        params["o_w"], params["o_b"],
        params["ln1_g"], params["ln1_b"],
        params["i_w"], params["i_b"],
        params["f_w"], params["f_b"],
        params["ln2_g"], params["ln2_b"],
        params["qa_w"], params["qa_b"],
    )

    start_logits = logits[:, 0].reshape(B, S)
    end_logits = logits[:, 1].reshape(B, S)
    return start_logits, end_logits


# ------------------------------- parameters -------------------------------
def init_params(key):
    std = 0.02
    keys = iter(jax.random.split(key, 4 + NUM_LAYERS * 6))
    p = {}
    p["word_emb"] = jax.random.normal(next(keys), (VOCAB_SIZE, HIDDEN), jnp.float32) * std
    p["pos_emb"] = jax.random.normal(next(keys), (MAX_POSITIONS, HIDDEN), jnp.float32) * std
    p["type_emb"] = jax.random.normal(next(keys), (TYPE_VOCAB_SIZE, HIDDEN), jnp.float32) * std
    p["emb_ln_g"] = jnp.ones((1, HIDDEN), jnp.float32)
    p["emb_ln_b"] = jnp.zeros((1, HIDDEN), jnp.float32)

    qkv_w, o_w, i_w, f_w = [], [], [], []
    for _ in range(NUM_LAYERS):
        qw = jax.random.normal(next(keys), (HIDDEN, HIDDEN), jnp.float32) * std
        kw = jax.random.normal(next(keys), (HIDDEN, HIDDEN), jnp.float32) * std
        vw = jax.random.normal(next(keys), (HIDDEN, HIDDEN), jnp.float32) * std
        qkv_w.append(jnp.concatenate([qw, kw, vw], axis=1))   # (H, 3H)
        o_w.append(jax.random.normal(next(keys), (HIDDEN, HIDDEN), jnp.float32) * std)
        i_w.append(jax.random.normal(next(keys), (HIDDEN, INTERMEDIATE), jnp.float32) * std)
        f_w.append(jax.random.normal(next(keys), (INTERMEDIATE, HIDDEN), jnp.float32) * std)

    p["qkv_w"] = jnp.stack(qkv_w)                                  # (L, H, 3H)
    p["qkv_b"] = jnp.zeros((NUM_LAYERS, 1, 3 * HIDDEN), jnp.float32)
    p["o_w"] = jnp.stack(o_w)                                      # (L, H, H)
    p["o_b"] = jnp.zeros((NUM_LAYERS, 1, HIDDEN), jnp.float32)
    p["ln1_g"] = jnp.ones((NUM_LAYERS, 1, HIDDEN), jnp.float32)
    p["ln1_b"] = jnp.zeros((NUM_LAYERS, 1, HIDDEN), jnp.float32)
    p["i_w"] = jnp.stack(i_w)                                      # (L, H, I)
    p["i_b"] = jnp.zeros((NUM_LAYERS, 1, INTERMEDIATE), jnp.float32)
    p["f_w"] = jnp.stack(f_w)                                      # (L, I, H)
    p["f_b"] = jnp.zeros((NUM_LAYERS, 1, HIDDEN), jnp.float32)
    p["ln2_g"] = jnp.ones((NUM_LAYERS, 1, HIDDEN), jnp.float32)
    p["ln2_b"] = jnp.zeros((NUM_LAYERS, 1, HIDDEN), jnp.float32)

    # qa_outputs = Linear(hidden, 2): normal(0, 0.02) weight, zero bias.
    p["qa_w"] = jax.random.normal(next(keys), (HIDDEN, 2), jnp.float32) * std
    p["qa_b"] = jnp.zeros((1, 2), jnp.float32)
    return p


# ----------------------------------- main -----------------------------------
if __name__ == "__main__":
    B, S = 2, 8
    key = jax.random.PRNGKey(0)
    k_param, k_tok, k_seg = jax.random.split(key, 3)

    params = init_params(k_param)
    token_ids = jax.random.randint(k_tok, (B, S), 0, VOCAB_SIZE, dtype=jnp.int32)
    segment_ids = jax.random.randint(k_seg, (B, S), 0, TYPE_VOCAB_SIZE, dtype=jnp.int32)
    # attention_mask ("lengths"): first row fully valid, second row padded after 5 tokens
    attention_mask = jnp.array([[1] * S, [1] * 5 + [0] * (S - 5)], dtype=jnp.int32)

    fwd = jax.jit(bert_qa_forward)
    start_logits, end_logits = fwd(params, token_ids, segment_ids, attention_mask)
    jax.block_until_ready((start_logits, end_logits))

    assert start_logits.shape == (B, S) and end_logits.shape == (B, S)
    # Padded positions must carry the masked_fill_ value.
    assert bool(jnp.all(start_logits[1, 5:] == NEG_FILL))
    assert bool(jnp.all(end_logits[1, 5:] == NEG_FILL))
    print("KERNEL_OK")
</pallas_src>

<mosaic_0001>
module attributes {stable_mosaic.version = 11 : i64} {
  func.func @_bert_qa_kernel(%arg0: memref<16x32xf32, #tpu.memory_space<vmem>>, %arg1: memref<2x8xf32, #tpu.memory_space<vmem>>, %arg2: memref<16x1xf32, #tpu.memory_space<vmem>>, %arg3: memref<1x32xf32, #tpu.memory_space<vmem>>, %arg4: memref<1x32xf32, #tpu.memory_space<vmem>>, %arg5: memref<2x32x96xf32, #tpu.memory_space<vmem>>, %arg6: memref<2x1x96xf32, #tpu.memory_space<vmem>>, %arg7: memref<2x32x32xf32, #tpu.memory_space<vmem>>, %arg8: memref<2x1x32xf32, #tpu.memory_space<vmem>>, %arg9: memref<2x1x32xf32, #tpu.memory_space<vmem>>, %arg10: memref<2x1x32xf32, #tpu.memory_space<vmem>>, %arg11: memref<2x32x64xf32, #tpu.memory_space<vmem>>, %arg12: memref<2x1x64xf32, #tpu.memory_space<vmem>>, %arg13: memref<2x64x32xf32, #tpu.memory_space<vmem>>, %arg14: memref<2x1x32xf32, #tpu.memory_space<vmem>>, %arg15: memref<2x1x32xf32, #tpu.memory_space<vmem>>, %arg16: memref<2x1x32xf32, #tpu.memory_space<vmem>>, %arg17: memref<32x2xf32, #tpu.memory_space<vmem>>, %arg18: memref<1x2xf32, #tpu.memory_space<vmem>>, %arg19: memref<16x2xf32, #tpu.memory_space<vmem>>, %arg20: memref<16x32xf32, #tpu.memory_space<vmem>>) attributes {dimension_semantics = [], scalar_prefetch = 0 : i64, scratch_operands = 1 : i64, tpu.core_type = #tpu.core_type<tc>} {
    %c0 = arith.constant 0 : index
    %c0_0 = arith.constant 0 : index
    %0 = vector.load %arg1[%c0, %c0_0] : memref<2x8xf32, #tpu.memory_space<vmem>>, vector<2x8xf32>
    %cst = arith.constant 1.000000e+00 : f32
    %1 = vector.broadcast %cst : f32 to vector<2x8xf32>
    %2 = arith.subf %1, %0 : vector<2x8xf32>
    %cst_1 = arith.constant -1.000000e+04 : f32
    %3 = vector.broadcast %cst_1 : f32 to vector<2x8xf32>
    %4 = arith.mulf %2, %3 : vector<2x8xf32>
    %c0_2 = arith.constant 0 : index
    %c0_3 = arith.constant 0 : index
    %5 = vector.load %arg0[%c0_2, %c0_3] : memref<16x32xf32, #tpu.memory_space<vmem>>, vector<16x32xf32>
    %c0_4 = arith.constant 0 : index
    %c0_5 = arith.constant 0 : index
    %6 = vector.load %arg3[%c0_4, %c0_5] : memref<1x32xf32, #tpu.memory_space<vmem>>, vector<1x32xf32>
    %c0_6 = arith.constant 0 : index
    %c0_7 = arith.constant 0 : index
    %7 = vector.load %arg4[%c0_6, %c0_7] : memref<1x32xf32, #tpu.memory_space<vmem>>, vector<1x32xf32>
    %cst_8 = arith.constant dense<0.000000e+00> : vector<16xf32>
    %8 = vector.multi_reduction <add>, %5, %cst_8 [1] : vector<16x32xf32> to vector<16xf32>
    %9 = vector.shape_cast %8 : vector<16xf32> to vector<16x1xf32>
    %cst_9 = arith.constant 3.200000e+01 : f32
    %10 = vector.broadcast %cst_9 : f32 to vector<16x1xf32>
    %11 = arith.divf %9, %10 : vector<16x1xf32>
    %12 = vector.broadcast %11 : vector<16x1xf32> to vector<16x32xf32>
    %13 = arith.subf %5, %12 : vector<16x32xf32>
    %14 = arith.mulf %13, %13 : vector<16x32xf32>
    %cst_10 = arith.constant dense<0.000000e+00> : vector<16xf32>
    %15 = vector.multi_reduction <add>, %14, %cst_10 [1] : vector<16x32xf32> to vector<16xf32>
    %16 = vector.shape_cast %15 : vector<16xf32> to vector<16x1xf32>
    %cst_11 = arith.constant 3.200000e+01 : f32
    %17 = vector.broadcast %cst_11 : f32 to vector<16x1xf32>
    %18 = arith.divf %16, %17 : vector<16x1xf32>
    %19 = vector.broadcast %11 : vector<16x1xf32> to vector<16x32xf32>
    %20 = arith.subf %5, %19 : vector<16x32xf32>
    %cst_12 = arith.constant 9.99999996E-13 : f32
    %21 = vector.broadcast %cst_12 : f32 to vector<16x1xf32>
    %22 = arith.addf %18, %21 : vector<16x1xf32>
    %23 = math.rsqrt %22 : vector<16x1xf32>
    %24 = vector.broadcast %23 : vector<16x1xf32> to vector<16x32xf32>
    %25 = arith.mulf %20, %24 : vector<16x32xf32>
    %26 = vector.broadcast %6 : vector<1x32xf32> to vector<16x32xf32>
    %27 = arith.mulf %25, %26 : vector<16x32xf32>
    %28 = vector.broadcast %7 : vector<1x32xf32> to vector<16x32xf32>
    %29 = arith.addf %27, %28 : vector<16x32xf32>
    %c0_13 = arith.constant 0 : index
    %c0_14 = arith.constant 0 : index
    %c0_15 = arith.constant 0 : index
    %30 = vector.load %arg5[%c0_13, %c0_14, %c0_15] : memref<2x32x96xf32, #tpu.memory_space<vmem>>, vector<1x32x96xf32>
    %31 = vector.shape_cast %30 : vector<1x32x96xf32> to vector<32x96xf32>
    %cst_16 = arith.constant dense<0.000000e+00> : vector<16x96xf32>
    %32 = tpu.matmul %29, %31, %cst_16 {dimension_numbers = #tpu.dot_dimension_numbers<[1], [0], [0], [1], [0, 0, 1, 1], [], []>} : vector<16x32xf32>, vector<32x96xf32>, vector<16x96xf32> -> vector<16x96xf32>
    %c0_17 = arith.constant 0 : index
    %c0_18 = arith.constant 0 : index
    %c0_19 = arith.constant 0 : index
    %33 = vector.load %arg6[%c0_17, %c0_18, %c0_19] : memref<2x1x96xf32, #tpu.memory_space<vmem>>, vector<1x1x96xf32>
    %34 = vector.shape_cast %33 : vector<1x1x96xf32> to vector<1x96xf32>
    %35 = vector.broadcast %34 : vector<1x96xf32> to vector<16x96xf32>
    %36 = arith.addf %32, %35 : vector<16x96xf32>
    %37 = vector.extract_strided_slice %36 {offsets = [0, 0], sizes = [16, 32], strides = [1, 1]} : vector<16x96xf32> to vector<16x32xf32>
    %38 = vector.extract_strided_slice %36 {offsets = [0, 32], sizes = [16, 32], strides = [1, 1]} : vector<16x96xf32> to vector<16x32xf32>
    %39 = vector.extract_strided_slice %36 {offsets = [0, 64], sizes = [16, 32], strides = [1, 1]} : vector<16x96xf32> to vector<16x32xf32>
    %40 = vector.extract_strided_slice %4 {offsets = [0, 0], sizes = [1, 8], strides = [1, 1]} : vector<2x8xf32> to vector<1x8xf32>
    %41 = vector.extract_strided_slice %37 {offsets = [0, 0], sizes = [8, 8], strides = [1, 1]} : vector<16x32xf32> to vector<8x8xf32>
    %42 = vector.extract_strided_slice %38 {offsets = [0, 0], sizes = [8, 8], strides = [1, 1]} : vector<16x32xf32> to vector<8x8xf32>
    %43 = vector.extract_strided_slice %39 {offsets = [0, 0], sizes = [8, 8], strides = [1, 1]} : vector<16x32xf32> to vector<8x8xf32>
    %44 = tpu.transpose %42, [1, 0] : vector<8x8xf32> -> vector<8x8xf32>
    %cst_20 = arith.constant dense<0.000000e+00> : vector<8x8xf32>
    %45 = tpu.matmul %41, %44, %cst_20 {dimension_numbers = #tpu.dot_dimension_numbers<[1], [0], [0], [1], [0, 0, 1, 1], [], []>} : vector<8x8xf32>, vector<8x8xf32>, vector<8x8xf32> -> vector<8x8xf32>
    %cst_21 = arith.constant 0.353553385 : f32
    %46 = vector.broadcast %cst_21 : f32 to vector<8x8xf32>
    %47 = arith.mulf %45, %46 : vector<8x8xf32>
    %48 = vector.broadcast %40 : vector<1x8xf32> to vector<8x8xf32>
    %49 = arith.addf %47, %48 : vector<8x8xf32>
    %cst_22 = arith.constant dense<0xFF800000> : vector<8xf32>
    %50 = vector.multi_reduction <maximumf>, %49, %cst_22 [1] : vector<8x8xf32> to vector<8xf32>
    %51 = vector.shape_cast %50 : vector<8xf32> to vector<8x1xf32>
    %52 = vector.broadcast %51 : vector<8x1xf32> to vector<8x8xf32>
    %53 = arith.subf %49, %52 : vector<8x8xf32>
    %54 = math.exp %53 : vector<8x8xf32>
    %cst_23 = arith.constant dense<0.000000e+00> : vector<8xf32>
    %55 = vector.multi_reduction <add>, %54, %cst_23 [1] : vector<8x8xf32> to vector<8xf32>
    %56 = vector.shape_cast %55 : vector<8xf32> to vector<8x1xf32>
    %57 = tpu.reciprocal %56 {approx = true} : vector<8x1xf32> -> vector<8x1xf32>
    %58 = vector.broadcast %57 : vector<8x1xf32> to vector<8x8xf32>
    %59 = arith.mulf %54, %58 : vector<8x8xf32>
    %cst_24 = arith.constant dense<0.000000e+00> : vector<8x8xf32>
    %60 = tpu.matmul %59, %43, %cst_24 {dimension_numbers = #tpu.dot_dimension_numbers<[1], [0], [0], [1], [0, 0, 1, 1], [], []>} : vector<8x8xf32>, vector<8x8xf32>, vector<8x8xf32> -> vector<8x8xf32>
    %c0_25 = arith.constant 0 : index
    %c0_26 = arith.constant 0 : index
    %61 = vector.load %arg20[%c0_25, %c0_26] : memref<16x32xf32, #tpu.memory_space<vmem>>, vector<8x8xf32>
    tpu.vector_store %arg20[%c0_25, %c0_26], %60 {strides = array<i32>} : memref<16x32xf32, #tpu.memory_space<vmem>>, vector<8x8xf32>,
    %62 = vector.extract_strided_slice %37 {offsets = [0, 8], sizes = [8, 8], strides = [1, 1]} : vector<16x32xf32> to vector<8x8xf32>
    %63 = vector.extract_strided_slice %38 {offsets = [0, 8], sizes = [8, 8], strides = [1, 1]} : vector<16x32xf32> to vector<8x8xf32>
    %64 = vector.extract_strided_slice %39 {offsets = [0, 8], sizes = [8, 8], strides = [1, 1]} : vector<16x32xf32> to vector<8x8xf32>
    %65 = tpu.transpose %63, [1, 0] : vector<8x8xf32> -> vector<8x8xf32>
    %cst_27 = arith.constant dense<0.000000e+00> : vector<8x8xf32>
    %66 = tpu.matmul %62, %65, %cst_27 {dimension_numbers = #tpu.dot_dimension_numbers<[1], [0], [0], [1], [0, 0, 1, 1], [], []>} : vector<8x8xf32>, vector<8x8xf32>, vector<8x8xf32> -> vector<8x8xf32>
    %cst_28 = arith.constant 0.353553385 : f32
    %67 = vector.broadcast %cst_28 : f32 to vector<8x8xf32>
    %68 = arith.mulf %66, %67 : vector<8x8xf32>
    %69 = vector.broadcast %40 : vector<1x8xf32> to vector<8x8xf32>
    %70 = arith.addf %68, %69 : vector<8x8xf32>
    %cst_29 = arith.constant dense<0xFF800000> : vector<8xf32>
    %71 = vector.multi_reduction <maximumf>, %70, %cst_29 [1] : vector<8x8xf32> to vector<8xf32>
    %72 = vector.shape_cast %71 : vector<8xf32> to vector<8x1xf32>
    %73 = vector.broadcast %72 : vector<8x1xf32> to vector<8x8xf32>
    %74 = arith.subf %70, %73 : vector<8x8xf32>
    %75 = math.exp %74 : vector<8x8xf32>
    %cst_30 = arith.constant dense<0.000000e+00> : vector<8xf32>
    %76 = vector.multi_reduction <add>, %75, %cst_30 [1] : vector<8x8xf32> to vector<8xf32>
    %77 = vector.shape_cast %76 : vector<8xf32> to vector<8x1xf32>
    %78 = tpu.reciprocal %77 {approx = true} : vector<8x1xf32> -> vector<8x1xf32>
    %79 = vector.broadcast %78 : vector<8x1xf32> to vector<8x8xf32>
    %80 = arith.mulf %75, %79 : vector<8x8xf32>
    %cst_31 = arith.constant dense<0.000000e+00> : vector<8x8xf32>
    %81 = tpu.matmul %80, %64, %cst_31 {dimension_numbers = #tpu.dot_dimension_numbers<[1], [0], [0], [1], [0, 0, 1, 1], [], []>} : vector<8x8xf32>, vector<8x8xf32>, vector<8x8xf32> -> vector<8x8xf32>
    %c0_32 = arith.constant 0 : index
    %c8 = arith.constant 8 : index
    %82 = vector.load %arg20[%c0_32, %c8] : memref<16x32xf32, #tpu.memory_space<vmem>>, vector<8x8xf32>
    tpu.vector_store %arg20[%c0_32, %c8], %81 {strides = array<i32>} : memref<16x32xf32, #tpu.memory_space<vmem>>, vector<8x8xf32>,
    %83 = vector.extract_strided_slice %37 {offsets = [0, 16], sizes = [8, 8], strides = [1, 1]} : vector<16x32xf32> to vector<8x8xf32>
    %84 = vector.extract_strided_slice %38 {offsets = [0, 16], sizes = [8, 8], strides = [1, 1]} : vector<16x32xf32> to vector<8x8xf32>
    %85 = vector.extract_strided_slice %39 {offsets = [0, 16], sizes = [8, 8], strides = [1, 1]} : vector<16x32xf32> to vector<8x8xf32>
    %86 = tpu.transpose %84, [1, 0] : vector<8x8xf32> -> vector<8x8xf32>
    %cst_33 = arith.constant dense<0.000000e+00> : vector<8x8xf32>
    %87 = tpu.matmul %83, %86, %cst_33 {dimension_numbers = #tpu.dot_dimension_numbers<[1], [0], [0], [1], [0, 0, 1, 1], [], []>} : vector<8x8xf32>, vector<8x8xf32>, vector<8x8xf32> -> vector<8x8xf32>
    %cst_34 = arith.constant 0.353553385 : f32
    %88 = vector.broadcast %cst_34 : f32 to vector<8x8xf32>
    %89 = arith.mulf %87, %88 : vector<8x8xf32>
    %90 = vector.broadcast %40 : vector<1x8xf32> to vector<8x8xf32>
    %91 = arith.addf %89, %90 : vector<8x8xf32>
    %cst_35 = arith.constant dense<0xFF800000> : vector<8xf32>
    %92 = vector.multi_reduction <maximumf>, %91, %cst_35 [1] : vector<8x8xf32> to vector<8xf32>
    %93 = vector.shape_cast %92 : vector<8xf32> to vector<8x1xf32>
    %94 = vector.broadcast %93 : vector<8x1xf32> to vector<8x8xf32>
    %95 = arith.subf %91, %94 : vector<8x8xf32>
    %96 = math.exp %95 : vector<8x8xf32>
    %cst_36 = arith.constant dense<0.000000e+00> : vector<8xf32>
    %97 = vector.multi_reduction <add>, %96, %cst_36 [1] : vector<8x8xf32> to vector<8xf32>
    %98 = vector.shape_cast %97 : vector<8xf32> to vector<8x1xf32>
    %99 = tpu.reciprocal %98 {approx = true} : vector<8x1xf32> -> vector<8x1xf32>
    %100 = vector.broadcast %99 : vector<8x1xf32> to vector<8x8xf32>
    %101 = arith.mulf %96, %100 : vector<8x8xf32>
    %cst_37 = arith.constant dense<0.000000e+00> : vector<8x8xf32>
    %102 = tpu.matmul %101, %85, %cst_37 {dimension_numbers = #tpu.dot_dimension_numbers<[1], [0], [0], [1], [0, 0, 1, 1], [], []>} : vector<8x8xf32>, vector<8x8xf32>, vector<8x8xf32> -> vector<8x8xf32>
    %c0_38 = arith.constant 0 : index
    %c16 = arith.constant 16 : index
    %103 = vector.load %arg20[%c0_38, %c16] : memref<16x32xf32, #tpu.memory_space<vmem>>, vector<8x8xf32>
    tpu.vector_store %arg20[%c0_38, %c16], %102 {strides = array<i32>} : memref<16x32xf32, #tpu.memory_space<vmem>>, vector<8x8xf32>,
    %104 = vector.extract_strided_slice %37 {offsets = [0, 24], sizes = [8, 8], strides = [1, 1]} : vector<16x32xf32> to vector<8x8xf32>
    %105 = vector.extract_strided_slice %38 {offsets = [0, 24], sizes = [8, 8], strides = [1, 1]} : vector<16x32xf32> to vector<8x8xf32>
    %106 = vector.extract_strided_slice %39 {offsets = [0, 24], sizes = [8, 8], strides = [1, 1]} : vector<16x32xf32> to vector<8x8xf32>
    %107 = tpu.transpose %105, [1, 0] : vector<8x8xf32> -> vector<8x8xf32>
    %cst_39 = arith.constant dense<0.000000e+00> : vector<8x8xf32>
    %108 = tpu.matmul %104, %107, %cst_39 {dimension_numbers = #tpu.dot_dimension_numbers<[1], [0], [0], [1], [0, 0, 1, 1], [], []>} : vector<8x8xf32>, vector<8x8xf32>, vector<8x8xf32> -> vector<8x8xf32>
    %cst_40 = arith.constant 0.353553385 : f32
    %109 = vector.broadcast %cst_40 : f32 to vector<8x8xf32>
    %110 = arith.mulf %108, %109 : vector<8x8xf32>
    %111 = vector.broadcast %40 : vector<1x8xf32> to vector<8x8xf32>
    %112 = arith.addf %110, %111 : vector<8x8xf32>
    %cst_41 = arith.constant dense<0xFF800000> : vector<8xf32>
    %113 = vector.multi_reduction <maximumf>, %112, %cst_41 [1] : vector<8x8xf32> to vector<8xf32>
    %114 = vector.shape_cast %113 : vector<8xf32> to vector<8x1xf32>
    %115 = vector.broadcast %114 : vector<8x1xf32> to vector<8x8xf32>
    %116 = arith.subf %112, %115 : vector<8x8xf32>
    %117 = math.exp %116 : vector<8x8xf32>
    %cst_42 = arith.constant dense<0.000000e+00> : vector<8xf32>
    %118 = vector.multi_reduction <add>, %117, %cst_42 [1] : vector<8x8xf32> to vector<8xf32>
    %119 = vector.shape_cast %118 : vector<8xf32> to vector<8x1xf32>
    %120 = tpu.reciprocal %119 {approx = true} : vector<8x1xf32> -> vector<8x1xf32>
    %121 = vector.broadcast %120 : vector<8x1xf32> to vector<8x8xf32>
    %122 = arith.mulf %117, %121 : vector<8x8xf32>
    %cst_43 = arith.constant dense<0.000000e+00> : vector<8x8xf32>
    %123 = tpu.matmul %122, %106, %cst_43 {dimension_numbers = #tpu.dot_dimension_numbers<[1], [0], [0], [1], [0, 0, 1, 1], [], []>} : vector<8x8xf32>, vector<8x8xf32>, vector<8x8xf32> -> vector<8x8xf32>
    %c0_44 = arith.constant 0 : index
    %c24 = arith.constant 24 : index
    %124 = vector.load %arg20[%c0_44, %c24] : memref<16x32xf32, #tpu.memory_space<vmem>>, vector<8x8xf32>
    tpu.vector_store %arg20[%c0_44, %c24], %123 {strides = array<i32>} : memref<16x32xf32, #tpu.memory_space<vmem>>, vector<8x8xf32>,
    %125 = vector.extract_strided_slice %4 {offsets = [1, 0], sizes = [1, 8], strides = [1, 1]} : vector<2x8xf32> to vector<1x8xf32>
    %126 = vector.extract_strided_slice %37 {offsets = [8, 0], sizes = [8, 8], strides = [1, 1]} : vector<16x32xf32> to vector<8x8xf32>
    %127 = vector.extract_strided_slice %38 {offsets = [8, 0], sizes = [8, 8], strides = [1, 1]} : vector<16x32xf32> to vector<8x8xf32>
    %128 = vector.extract_strided_slice %39 {offsets = [8, 0], sizes = [8, 8], strides = [1, 1]} : vector<16x32xf32> to vector<8x8xf32>
    %129 = tpu.transpose %127, [1, 0] : vector<8x8xf32> -> vector<8x8xf32>
    %cst_45 = arith.constant dense<0.000000e+00> : vector<8x8xf32>
    %130 = tpu.matmul %126, %129, %cst_45 {dimension_numbers = #tpu.dot_dimension_numbers<[1], [0], [0], [1], [0, 0, 1, 1], [], []>} : vector<8x8xf32>, vector<8x8xf32>, vector<8x8xf32> -> vector<8x8xf32>
    %cst_46 = arith.constant 0.353553385 : f32
    %131 = vector.broadcast %cst_46 : f32 to vector<8x8xf32>
    %132 = arith.mulf %130, %131 : vector<8x8xf32>
    %133 = vector.broadcast %125 : vector<1x8xf32> to vector<8x8xf32>
    %134 = arith.addf %132, %133 : vector<8x8xf32>
    %cst_47 = arith.constant dense<0xFF800000> : vector<8xf32>
    %135 = vector.multi_reduction <maximumf>, %134, %cst_47 [1] : vector<8x8xf32> to vector<8xf32>
    %136 = vector.shape_cast %135 : vector<8xf32> to vector<8x1xf32>
    %137 = vector.broadcast %136 : vector<8x1xf32> to vector<8x8xf32>
    %138 = arith.subf %134, %137 : vector<8x8xf32>
    %139 = math.exp %138 : vector<8x8xf32>
    %cst_48 = arith.constant dense<0.000000e+00> : vector<8xf32>
    %140 = vector.multi_reduction <add>, %139, %cst_48 [1] : vector<8x8xf32> to vector<8xf32>
    %141 = vector.shape_cast %140 : vector<8xf32> to vector<8x1xf32>
    %142 = tpu.reciprocal %141 {approx = true} : vector<8x1xf32> -> vector<8x1xf32>
    %143 = vector.broadcast %142 : vector<8x1xf32> to vector<8x8xf32>
    %144 = arith.mulf %139, %143 : vector<8x8xf32>
    %cst_49 = arith.constant dense<0.000000e+00> : vector<8x8xf32>
    %145 = tpu.matmul %144, %128, %cst_49 {dimension_numbers = #tpu.dot_dimension_numbers<[1], [0], [0], [1], [0, 0, 1, 1], [], []>} : vector<8x8xf32>, vector<8x8xf32>, vector<8x8xf32> -> vector<8x8xf32>
    %c8_50 = arith.constant 8 : index
    %c0_51 = arith.constant 0 : index
    %146 = vector.load %arg20[%c8_50, %c0_51] : memref<16x32xf32, #tpu.memory_space<vmem>>, vector<8x8xf32>
    tpu.vector_store %arg20[%c8_50, %c0_51], %145 {strides = array<i32>} : memref<16x32xf32, #tpu.memory_space<vmem>>, vector<8x8xf32>,
    %147 = vector.extract_strided_slice %37 {offsets = [8, 8], sizes = [8, 8], strides = [1, 1]} : vector<16x32xf32> to vector<8x8xf32>
    %148 = vector.extract_strided_slice %38 {offsets = [8, 8], sizes = [8, 8], strides = [1, 1]} : vector<16x32xf32> to vector<8x8xf32>
    %149 = vector.extract_strided_slice %39 {offsets = [8, 8], sizes = [8, 8], strides = [1, 1]} : vector<16x32xf32> to vector<8x8xf32>
    %150 = tpu.transpose %148, [1, 0] : vector<8x8xf32> -> vector<8x8xf32>
    %cst_52 = arith.constant dense<0.000000e+00> : vector<8x8xf32>
    %151 = tpu.matmul %147, %150, %cst_52 {dimension_numbers = #tpu.dot_dimension_numbers<[1], [0], [0], [1], [0, 0, 1, 1], [], []>} : vector<8x8xf32>, vector<8x8xf32>, vector<8x8xf32> -> vector<8x8xf32>
    %cst_53 = arith.constant 0.353553385 : f32
    %152 = vector.broadcast %cst_53 : f32 to vector<8x8xf32>
    %153 = arith.mulf %151, %152 : vector<8x8xf32>
    %154 = vector.broadcast %125 : vector<1x8xf32> to vector<8x8xf32>
    %155 = arith.addf %153, %154 : vector<8x8xf32>
    %cst_54 = arith.constant dense<0xFF800000> : vector<8xf32>
    %156 = vector.multi_reduction <maximumf>, %155, %cst_54 [1] : vector<8x8xf32> to vector<8xf32>
    %157 = vector.shape_cast %156 : vector<8xf32> to vector<8x1xf32>
    %158 = vector.broadcast %157 : vector<8x1xf32> to vector<8x8xf32>
    %159 = arith.subf %155, %158 : vector<8x8xf32>
    %160 = math.exp %159 : vector<8x8xf32>
    %cst_55 = arith.constant dense<0.000000e+00> : vector<8xf32>
    %161 = vector.multi_reduction <add>, %160, %cst_55 [1] : vector<8x8xf32> to vector<8xf32>
    %162 = vector.shape_cast %161 : vector<8xf32> to vector<8x1xf32>
    %163 = tpu.reciprocal %162 {approx = true} : vector<8x1xf32> -> vector<8x1xf32>
    %164 = vector.broadcast %163 : vector<8x1xf32> to vector<8x8xf32>
    %165 = arith.mulf %160, %164 : vector<8x8xf32>
    %cst_56 = arith.constant dense<0.000000e+00> : vector<8x8xf32>
    %166 = tpu.matmul %165, %149, %cst_56 {dimension_numbers = #tpu.dot_dimension_numbers<[1], [0], [0], [1], [0, 0, 1, 1], [], []>} : vector<8x8xf32>, vector<8x8xf32>, vector<8x8xf32> -> vector<8x8xf32>
    %c8_57 = arith.constant 8 : index
    %c8_58 = arith.constant 8 : index
    %167 = vector.load %arg20[%c8_57, %c8_58] : memref<16x32xf32, #tpu.memory_space<vmem>>, vector<8x8xf32>
    tpu.vector_store %arg20[%c8_57, %c8_58], %166 {strides = array<i32>} : memref<16x32xf32, #tpu.memory_space<vmem>>, vector<8x8xf32>,
    %168 = vector.extract_strided_slice %37 {offsets = [8, 16], sizes = [8, 8], strides = [1, 1]} : vector<16x32xf32> to vector<8x8xf32>
    %169 = vector.extract_strided_slice %38 {offsets = [8, 16], sizes = [8, 8], strides = [1, 1]} : vector<16x32xf32> to vector<8x8xf32>
    %170 = vector.extract_strided_slice %39 {offsets = [8, 16], sizes = [8, 8], strides = [1, 1]} : vector<16x32xf32> to vector<8x8xf32>
    %171 = tpu.transpose %169, [1, 0] : vector<8x8xf32> -> vector<8x8xf32>
    %cst_59 = arith.constant dense<0.000000e+00> : vector<8x8xf32>
    %172 = tpu.matmul %168, %171, %cst_59 {dimension_numbers = #tpu.dot_dimension_numbers<[1], [0], [0], [1], [0, 0, 1, 1], [], []>} : vector<8x8xf32>, vector<8x8xf32>, vector<8x8xf32> -> vector<8x8xf32>
    %cst_60 = arith.constant 0.353553385 : f32
    %173 = vector.broadcast %cst_60 : f32 to vector<8x8xf32>
    %174 = arith.mulf %172, %173 : vector<8x8xf32>
    %175 = vector.broadcast %125 : vector<1x8xf32> to vector<8x8xf32>
    %176 = arith.addf %174, %175 : vector<8x8xf32>
    %cst_61 = arith.constant dense<0xFF800000> : vector<8xf32>
    %177 = vector.multi_reduction <maximumf>, %176, %cst_61 [1] : vector<8x8xf32> to vector<8xf32>
    %178 = vector.shape_cast %177 : vector<8xf32> to vector<8x1xf32>
    %179 = vector.broadcast %178 : vector<8x1xf32> to vector<8x8xf32>
    %180 = arith.subf %176, %179 : vector<8x8xf32>
    %181 = math.exp %180 : vector<8x8xf32>
    %cst_62 = arith.constant dense<0.000000e+00> : vector<8xf32>
    %182 = vector.multi_reduction <add>, %181, %cst_62 [1] : vector<8x8xf32> to vector<8xf32>
    %183 = vector.shape_cast %182 : vector<8xf32> to vector<8x1xf32>
    %184 = tpu.reciprocal %183 {approx = true} : vector<8x1xf32> -> vector<8x1xf32>
    %185 = vector.broadcast %184 : vector<8x1xf32> to vector<8x8xf32>
    %186 = arith.mulf %181, %185 : vector<8x8xf32>
    %cst_63 = arith.constant dense<0.000000e+00> : vector<8x8xf32>
    %187 = tpu.matmul %186, %170, %cst_63 {dimension_numbers = #tpu.dot_dimension_numbers<[1], [0], [0], [1], [0, 0, 1, 1], [], []>} : vector<8x8xf32>, vector<8x8xf32>, vector<8x8xf32> -> vector<8x8xf32>
    %c8_64 = arith.constant 8 : index
    %c16_65 = arith.constant 16 : index
    %188 = vector.load %arg20[%c8_64, %c16_65] : memref<16x32xf32, #tpu.memory_space<vmem>>, vector<8x8xf32>
    tpu.vector_store %arg20[%c8_64, %c16_65], %187 {strides = array<i32>} : memref<16x32xf32, #tpu.memory_space<vmem>>, vector<8x8xf32>,
    %189 = vector.extract_strided_slice %37 {offsets = [8, 24], sizes = [8, 8], strides = [1, 1]} : vector<16x32xf32> to vector<8x8xf32>
    %190 = vector.extract_strided_slice %38 {offsets = [8, 24], sizes = [8, 8], strides = [1, 1]} : vector<16x32xf32> to vector<8x8xf32>
    %191 = vector.extract_strided_slice %39 {offsets = [8, 24], sizes = [8, 8], strides = [1, 1]} : vector<16x32xf32> to vector<8x8xf32>
    %192 = tpu.transpose %190, [1, 0] : vector<8x8xf32> -> vector<8x8xf32>
    %cst_66 = arith.constant dense<0.000000e+00> : vector<8x8xf32>
    %193 = tpu.matmul %189, %192, %cst_66 {dimension_numbers = #tpu.dot_dimension_numbers<[1], [0], [0], [1], [0, 0, 1, 1], [], []>} : vector<8x8xf32>, vector<8x8xf32>, vector<8x8xf32> -> vector<8x8xf32>
    %cst_67 = arith.constant 0.353553385 : f32
    %194 = vector.broadcast %cst_67 : f32 to vector<8x8xf32>
    %195 = arith.mulf %193, %194 : vector<8x8xf32>
    %196 = vector.broadcast %125 : vector<1x8xf32> to vector<8x8xf32>
    %197 = arith.addf %195, %196 : vector<8x8xf32>
    %cst_68 = arith.constant dense<0xFF800000> : vector<8xf32>
    %198 = vector.multi_reduction <maximumf>, %197, %cst_68 [1] : vector<8x8xf32> to vector<8xf32>
    %199 = vector.shape_cast %198 : vector<8xf32> to vector<8x1xf32>
    %200 = vector.broadcast %199 : vector<8x1xf32> to vector<8x8xf32>
    %201 = arith.subf %197, %200 : vector<8x8xf32>
    %202 = math.exp %201 : vector<8x8xf32>
    %cst_69 = arith.constant dense<0.000000e+00> : vector<8xf32>
    %203 = vector.multi_reduction <add>, %202, %cst_69 [1] : vector<8x8xf32> to vector<8xf32>
    %204 = vector.shape_cast %203 : vector<8xf32> to vector<8x1xf32>
    %205 = tpu.reciprocal %204 {approx = true} : vector<8x1xf32> -> vector<8x1xf32>
    %206 = vector.broadcast %205 : vector<8x1xf32> to vector<8x8xf32>
    %207 = arith.mulf %202, %206 : vector<8x8xf32>
    %cst_70 = arith.constant dense<0.000000e+00> : vector<8x8xf32>
    %208 = tpu.matmul %207, %191, %cst_70 {dimension_numbers = #tpu.dot_dimension_numbers<[1], [0], [0], [1], [0, 0, 1, 1], [], []>} : vector<8x8xf32>, vector<8x8xf32>, vector<8x8xf32> -> vector<8x8xf32>
    %c8_71 = arith.constant 8 : index
    %c24_72 = arith.constant 24 : index
    %209 = vector.load %arg20[%c8_71, %c24_72] : memref<16x32xf32, #tpu.memory_space<vmem>>, vector<8x8xf32>
    tpu.vector_store %arg20[%c8_71, %c24_72], %208 {strides = array<i32>} : memref<16x32xf32, #tpu.memory_space<vmem>>, vector<8x8xf32>,
    %c0_73 = arith.constant 0 : index
    %c0_74 = arith.constant 0 : index
    %210 = vector.load %arg20[%c0_73, %c0_74] : memref<16x32xf32, #tpu.memory_space<vmem>>, vector<16x32xf32>
    %c0_75 = arith.constant 0 : index
    %c0_76 = arith.constant 0 : index
    %c0_77 = arith.constant 0 : index
    %211 = vector.load %arg7[%c0_75, %c0_76, %c0_77] : memref<2x32x32xf32, #tpu.memory_space<vmem>>, vector<1x32x32xf32>
    %212 = vector.shape_cast %211 : vector<1x32x32xf32> to vector<32x32xf32>
    %cst_78 = arith.constant dense<0.000000e+00> : vector<16x32xf32>
    %213 = tpu.matmul %210, %212, %cst_78 {dimension_numbers = #tpu.dot_dimension_numbers<[1], [0], [0], [1], [0, 0, 1, 1], [], []>} : vector<16x32xf32>, vector<32x32xf32>, vector<16x32xf32> -> vector<16x32xf32>
    %c0_79 = arith.constant 0 : index
    %c0_80 = arith.constant 0 : index
    %c0_81 = arith.constant 0 : index
    %214 = vector.load %arg8[%c0_79, %c0_80, %c0_81] : memref<2x1x32xf32, #tpu.memory_space<vmem>>, vector<1x1x32xf32>
    %215 = vector.shape_cast %214 : vector<1x1x32xf32> to vector<1x32xf32>
    %216 = vector.broadcast %215 : vector<1x32xf32> to vector<16x32xf32>
    %217 = arith.addf %213, %216 : vector<16x32xf32>
    %218 = arith.addf %217, %29 : vector<16x32xf32>
    %c0_82 = arith.constant 0 : index
    %c0_83 = arith.constant 0 : index
    %c0_84 = arith.constant 0 : index
    %219 = vector.load %arg9[%c0_82, %c0_83, %c0_84] : memref<2x1x32xf32, #tpu.memory_space<vmem>>, vector<1x1x32xf32>
    %220 = vector.shape_cast %219 : vector<1x1x32xf32> to vector<1x32xf32>
    %c0_85 = arith.constant 0 : index
    %c0_86 = arith.constant 0 : index
    %c0_87 = arith.constant 0 : index
    %221 = vector.load %arg10[%c0_85, %c0_86, %c0_87] : memref<2x1x32xf32, #tpu.memory_space<vmem>>, vector<1x1x32xf32>
    %222 = vector.shape_cast %221 : vector<1x1x32xf32> to vector<1x32xf32>
    %cst_88 = arith.constant dense<0.000000e+00> : vector<16xf32>
    %223 = vector.multi_reduction <add>, %218, %cst_88 [1] : vector<16x32xf32> to vector<16xf32>
    %224 = vector.shape_cast %223 : vector<16xf32> to vector<16x1xf32>
    %cst_89 = arith.constant 3.200000e+01 : f32
    %225 = vector.broadcast %cst_89 : f32 to vector<16x1xf32>
    %226 = arith.divf %224, %225 : vector<16x1xf32>
    %227 = vector.broadcast %226 : vector<16x1xf32> to vector<16x32xf32>
    %228 = arith.subf %218, %227 : vector<16x32xf32>
    %229 = arith.mulf %228, %228 : vector<16x32xf32>
    %cst_90 = arith.constant dense<0.000000e+00> : vector<16xf32>
    %230 = vector.multi_reduction <add>, %229, %cst_90 [1] : vector<16x32xf32> to vector<16xf32>
    %231 = vector.shape_cast %230 : vector<16xf32> to vector<16x1xf32>
    %cst_91 = arith.constant 3.200000e+01 : f32
    %232 = vector.broadcast %cst_91 : f32 to vector<16x1xf32>
    %233 = arith.divf %231, %232 : vector<16x1xf32>
    %234 = vector.broadcast %226 : vector<16x1xf32> to vector<16x32xf32>
    %235 = arith.subf %218, %234 : vector<16x32xf32>
    %cst_92 = arith.constant 9.99999996E-13 : f32
    %236 = vector.broadcast %cst_92 : f32 to vector<16x1xf32>
    %237 = arith.addf %233, %236 : vector<16x1xf32>
    %238 = math.rsqrt %237 : vector<16x1xf32>
    %239 = vector.broadcast %238 : vector<16x1xf32> to vector<16x32xf32>
    %240 = arith.mulf %235, %239 : vector<16x32xf32>
    %241 = vector.broadcast %220 : vector<1x32xf32> to vector<16x32xf32>
    %242 = arith.mulf %240, %241 : vector<16x32xf32>
    %243 = vector.broadcast %222 : vector<1x32xf32> to vector<16x32xf32>
    %244 = arith.addf %242, %243 : vector<16x32xf32>
    %c0_93 = arith.constant 0 : index
    %c0_94 = arith.constant 0 : index
    %c0_95 = arith.constant 0 : index
    %245 = vector.load %arg11[%c0_93, %c0_94, %c0_95] : memref<2x32x64xf32, #tpu.memory_space<vmem>>, vector<1x32x64xf32>
    %246 = vector.shape_cast %245 : vector<1x32x64xf32> to vector<32x64xf32>
    %cst_96 = arith.constant dense<0.000000e+00> : vector<16x64xf32>
    %247 = tpu.matmul %244, %246, %cst_96 {dimension_numbers = #tpu.dot_dimension_numbers<[1], [0], [0], [1], [0, 0, 1, 1], [], []>} : vector<16x32xf32>, vector<32x64xf32>, vector<16x64xf32> -> vector<16x64xf32>
    %c0_97 = arith.constant 0 : index
    %c0_98 = arith.constant 0 : index
    %c0_99 = arith.constant 0 : index
    %248 = vector.load %arg12[%c0_97, %c0_98, %c0_99] : memref<2x1x64xf32, #tpu.memory_space<vmem>>, vector<1x1x64xf32>
    %249 = vector.shape_cast %248 : vector<1x1x64xf32> to vector<1x64xf32>
    %250 = vector.broadcast %249 : vector<1x64xf32> to vector<16x64xf32>
    %251 = arith.addf %247, %250 : vector<16x64xf32>
    %cst_100 = arith.constant 5.000000e-01 : f32
    %252 = vector.broadcast %cst_100 : f32 to vector<16x64xf32>
    %253 = arith.mulf %252, %251 : vector<16x64xf32>
    %cst_101 = arith.constant 4.471500e-02 : f32
    %254 = vector.broadcast %cst_101 : f32 to vector<16x64xf32>
    %255 = arith.mulf %254, %251 : vector<16x64xf32>
    %256 = arith.mulf %255, %251 : vector<16x64xf32>
    %257 = arith.mulf %256, %251 : vector<16x64xf32>
    %258 = arith.addf %251, %257 : vector<16x64xf32>
    %cst_102 = arith.constant 0.797884583 : f32
    %259 = vector.broadcast %cst_102 : f32 to vector<16x64xf32>
    %260 = arith.mulf %259, %258 : vector<16x64xf32>
    %261 = math.tanh %260 : vector<16x64xf32>
    %cst_103 = arith.constant 1.000000e+00 : f32
    %262 = vector.broadcast %cst_103 : f32 to vector<16x64xf32>
    %263 = arith.addf %262, %261 : vector<16x64xf32>
    %264 = arith.mulf %253, %263 : vector<16x64xf32>
    %c0_104 = arith.constant 0 : index
    %c0_105 = arith.constant 0 : index
    %c0_106 = arith.constant 0 : index
    %265 = vector.load %arg13[%c0_104, %c0_105, %c0_106] : memref<2x64x32xf32, #tpu.memory_space<vmem>>, vector<1x64x32xf32>
    %266 = vector.shape_cast %265 : vector<1x64x32xf32> to vector<64x32xf32>
    %cst_107 = arith.constant dense<0.000000e+00> : vector<16x32xf32>
    %267 = tpu.matmul %264, %266, %cst_107 {dimension_numbers = #tpu.dot_dimension_numbers<[1], [0], [0], [1], [0, 0, 1, 1], [], []>} : vector<16x64xf32>, vector<64x32xf32>, vector<16x32xf32> -> vector<16x32xf32>
    %c0_108 = arith.constant 0 : index
    %c0_109 = arith.constant 0 : index
    %c0_110 = arith.constant 0 : index
    %268 = vector.load %arg14[%c0_108, %c0_109, %c0_110] : memref<2x1x32xf32, #tpu.memory_space<vmem>>, vector<1x1x32xf32>
    %269 = vector.shape_cast %268 : vector<1x1x32xf32> to vector<1x32xf32>
    %270 = vector.broadcast %269 : vector<1x32xf32> to vector<16x32xf32>
    %271 = arith.addf %267, %270 : vector<16x32xf32>
    %272 = arith.addf %271, %244 : vector<16x32xf32>
    %c0_111 = arith.constant 0 : index
    %c0_112 = arith.constant 0 : index
    %c0_113 = arith.constant 0 : index
    %273 = vector.load %arg15[%c0_111, %c0_112, %c0_113] : memref<2x1x32xf32, #tpu.memory_space<vmem>>, vector<1x1x32xf32>
    %274 = vector.shape_cast %273 : vector<1x1x32xf32> to vector<1x32xf32>
    %c0_114 = arith.constant 0 : index
    %c0_115 = arith.constant 0 : index
    %c0_116 = arith.constant 0 : index
    %275 = vector.load %arg16[%c0_114, %c0_115, %c0_116] : memref<2x1x32xf32, #tpu.memory_space<vmem>>, vector<1x1x32xf32>
    %276 = vector.shape_cast %275 : vector<1x1x32xf32> to vector<1x32xf32>
    %cst_117 = arith.constant dense<0.000000e+00> : vector<16xf32>
    %277 = vector.multi_reduction <add>, %272, %cst_117 [1] : vector<16x32xf32> to vector<16xf32>
    %278 = vector.shape_cast %277 : vector<16xf32> to vector<16x1xf32>
    %cst_118 = arith.constant 3.200000e+01 : f32
    %279 = vector.broadcast %cst_118 : f32 to vector<16x1xf32>
    %280 = arith.divf %278, %279 : vector<16x1xf32>
    %281 = vector.broadcast %280 : vector<16x1xf32> to vector<16x32xf32>
    %282 = arith.subf %272, %281 : vector<16x32xf32>
    %283 = arith.mulf %282, %282 : vector<16x32xf32>
    %cst_119 = arith.constant dense<0.000000e+00> : vector<16xf32>
    %284 = vector.multi_reduction <add>, %283, %cst_119 [1] : vector<16x32xf32> to vector<16xf32>
    %285 = vector.shape_cast %284 : vector<16xf32> to vector<16x1xf32>
    %cst_120 = arith.constant 3.200000e+01 : f32
    %286 = vector.broadcast %cst_120 : f32 to vector<16x1xf32>
    %287 = arith.divf %285, %286 : vector<16x1xf32>
    %288 = vector.broadcast %280 : vector<16x1xf32> to vector<16x32xf32>
    %289 = arith.subf %272, %288 : vector<16x32xf32>
    %cst_121 = arith.constant 9.99999996E-13 : f32
    %290 = vector.broadcast %cst_121 : f32 to vector<16x1xf32>
    %291 = arith.addf %287, %290 : vector<16x1xf32>
    %292 = math.rsqrt %291 : vector<16x1xf32>
    %293 = vector.broadcast %292 : vector<16x1xf32> to vector<16x32xf32>
    %294 = arith.mulf %289, %293 : vector<16x32xf32>
    %295 = vector.broadcast %274 : vector<1x32xf32> to vector<16x32xf32>
    %296 = arith.mulf %294, %295 : vector<16x32xf32>
    %297 = vector.broadcast %276 : vector<1x32xf32> to vector<16x32xf32>
    %298 = arith.addf %296, %297 : vector<16x32xf32>
    %c1 = arith.constant 1 : index
    %c0_122 = arith.constant 0 : index
    %c0_123 = arith.constant 0 : index
    %299 = vector.load %arg5[%c1, %c0_122, %c0_123] : memref<2x32x96xf32, #tpu.memory_space<vmem>>, vector<1x32x96xf32>
    %300 = vector.shape_cast %299 : vector<1x32x96xf32> to vector<32x96xf32>
    %cst_124 = arith.constant dense<0.000000e+00> : vector<16x96xf32>
    %301 = tpu.matmul %298, %300, %cst_124 {dimension_numbers = #tpu.dot_dimension_numbers<[1], [0], [0], [1], [0, 0, 1, 1], [], []>} : vector<16x32xf32>, vector<32x96xf32>, vector<16x96xf32> -> vector<16x96xf32>
    %c1_125 = arith.constant 1 : index
    %c0_126 = arith.constant 0 : index
    %c0_127 = arith.constant 0 : index
    %302 = vector.load %arg6[%c1_125, %c0_126, %c0_127] : memref<2x1x96xf32, #tpu.memory_space<vmem>>, vector<1x1x96xf32>
    %303 = vector.shape_cast %302 : vector<1x1x96xf32> to vector<1x96xf32>
    %304 = vector.broadcast %303 : vector<1x96xf32> to vector<16x96xf32>
    %305 = arith.addf %301, %304 : vector<16x96xf32>
    %306 = vector.extract_strided_slice %305 {offsets = [0, 0], sizes = [16, 32], strides = [1, 1]} : vector<16x96xf32> to vector<16x32xf32>
    %307 = vector.extract_strided_slice %305 {offsets = [0, 32], sizes = [16, 32], strides = [1, 1]} : vector<16x96xf32> to vector<16x32xf32>
    %308 = vector.extract_strided_slice %305 {offsets = [0, 64], sizes = [16, 32], strides = [1, 1]} : vector<16x96xf32> to vector<16x32xf32>
    %309 = vector.extract_strided_slice %4 {offsets = [0, 0], sizes = [1, 8], strides = [1, 1]} : vector<2x8xf32> to vector<1x8xf32>
    %310 = vector.extract_strided_slice %306 {offsets = [0, 0], sizes = [8, 8], strides = [1, 1]} : vector<16x32xf32> to vector<8x8xf32>
    %311 = vector.extract_strided_slice %307 {offsets = [0, 0], sizes = [8, 8], strides = [1, 1]} : vector<16x32xf32> to vector<8x8xf32>
    %312 = vector.extract_strided_slice %308 {offsets = [0, 0], sizes = [8, 8], strides = [1, 1]} : vector<16x32xf32> to vector<8x8xf32>
    %313 = tpu.transpose %311, [1, 0] : vector<8x8xf32> -> vector<8x8xf32>
    %cst_128 = arith.constant dense<0.000000e+00> : vector<8x8xf32>
    %314 = tpu.matmul %310, %313, %cst_128 {dimension_numbers = #tpu.dot_dimension_numbers<[1], [0], [0], [1], [0, 0, 1, 1], [], []>} : vector<8x8xf32>, vector<8x8xf32>, vector<8x8xf32> -> vector<8x8xf32>
    %cst_129 = arith.constant 0.353553385 : f32
    %315 = vector.broadcast %cst_129 : f32 to vector<8x8xf32>
    %316 = arith.mulf %314, %315 : vector<8x8xf32>
    %317 = vector.broadcast %309 : vector<1x8xf32> to vector<8x8xf32>
    %318 = arith.addf %316, %317 : vector<8x8xf32>
    %cst_130 = arith.constant dense<0xFF800000> : vector<8xf32>
    %319 = vector.multi_reduction <maximumf>, %318, %cst_130 [1] : vector<8x8xf32> to vector<8xf32>
    %320 = vector.shape_cast %319 : vector<8xf32> to vector<8x1xf32>
    %321 = vector.broadcast %320 : vector<8x1xf32> to vector<8x8xf32>
    %322 = arith.subf %318, %321 : vector<8x8xf32>
    %323 = math.exp %322 : vector<8x8xf32>
    %cst_131 = arith.constant dense<0.000000e+00> : vector<8xf32>
    %324 = vector.multi_reduction <add>, %323, %cst_131 [1] : vector<8x8xf32> to vector<8xf32>
    %325 = vector.shape_cast %324 : vector<8xf32> to vector<8x1xf32>
    %326 = tpu.reciprocal %325 {approx = true} : vector<8x1xf32> -> vector<8x1xf32>
    %327 = vector.broadcast %326 : vector<8x1xf32> to vector<8x8xf32>
    %328 = arith.mulf %323, %327 : vector<8x8xf32>
    %cst_132 = arith.constant dense<0.000000e+00> : vector<8x8xf32>
    %329 = tpu.matmul %328, %312, %cst_132 {dimension_numbers = #tpu.dot_dimension_numbers<[1], [0], [0], [1], [0, 0, 1, 1], [], []>} : vector<8x8xf32>, vector<8x8xf32>, vector<8x8xf32> -> vector<8x8xf32>
    %c0_133 = arith.constant 0 : index
    %c0_134 = arith.constant 0 : index
    %330 = vector.load %arg20[%c0_133, %c0_134] : memref<16x32xf32, #tpu.memory_space<vmem>>, vector<8x8xf32>
    tpu.vector_store %arg20[%c0_133, %c0_134], %329 {strides = array<i32>} : memref<16x32xf32, #tpu.memory_space<vmem>>, vector<8x8xf32>,
    %331 = vector.extract_strided_slice %306 {offsets = [0, 8], sizes = [8, 8], strides = [1, 1]} : vector<16x32xf32> to vector<8x8xf32>
    %332 = vector.extract_strided_slice %307 {offsets = [0, 8], sizes = [8, 8], strides = [1, 1]} : vector<16x32xf32> to vector<8x8xf32>
    %333 = vector.extract_strided_slice %308 {offsets = [0, 8], sizes = [8, 8], strides = [1, 1]} : vector<16x32xf32> to vector<8x8xf32>
    %334 = tpu.transpose %332, [1, 0] : vector<8x8xf32> -> vector<8x8xf32>
    %cst_135 = arith.constant dense<0.000000e+00> : vector<8x8xf32>
    %335 = tpu.matmul %331, %334, %cst_135 {dimension_numbers = #tpu.dot_dimension_numbers<[1], [0], [0], [1], [0, 0, 1, 1], [], []>} : vector<8x8xf32>, vector<8x8xf32>, vector<8x8xf32> -> vector<8x8xf32>
    %cst_136 = arith.constant 0.353553385 : f32
    %336 = vector.broadcast %cst_136 : f32 to vector<8x8xf32>
    %337 = arith.mulf %335, %336 : vector<8x8xf32>
    %338 = vector.broadcast %309 : vector<1x8xf32> to vector<8x8xf32>
    %339 = arith.addf %337, %338 : vector<8x8xf32>
    %cst_137 = arith.constant dense<0xFF800000> : vector<8xf32>
    %340 = vector.multi_reduction <maximumf>, %339, %cst_137 [1] : vector<8x8xf32> to vector<8xf32>
    %341 = vector.shape_cast %340 : vector<8xf32> to vector<8x1xf32>
    %342 = vector.broadcast %341 : vector<8x1xf32> to vector<8x8xf32>
    %343 = arith.subf %339, %342 : vector<8x8xf32>
    %344 = math.exp %343 : vector<8x8xf32>
    %cst_138 = arith.constant dense<0.000000e+00> : vector<8xf32>
    %345 = vector.multi_reduction <add>, %344, %cst_138 [1] : vector<8x8xf32> to vector<8xf32>
    %346 = vector.shape_cast %345 : vector<8xf32> to vector<8x1xf32>
    %347 = tpu.reciprocal %346 {approx = true} : vector<8x1xf32> -> vector<8x1xf32>
    %348 = vector.broadcast %347 : vector<8x1xf32> to vector<8x8xf32>
    %349 = arith.mulf %344, %348 : vector<8x8xf32>
    %cst_139 = arith.constant dense<0.000000e+00> : vector<8x8xf32>
    %350 = tpu.matmul %349, %333, %cst_139 {dimension_numbers = #tpu.dot_dimension_numbers<[1], [0], [0], [1], [0, 0, 1, 1], [], []>} : vector<8x8xf32>, vector<8x8xf32>, vector<8x8xf32> -> vector<8x8xf32>
    %c0_140 = arith.constant 0 : index
    %c8_141 = arith.constant 8 : index
    %351 = vector.load %arg20[%c0_140, %c8_141] : memref<16x32xf32, #tpu.memory_space<vmem>>, vector<8x8xf32>
    tpu.vector_store %arg20[%c0_140, %c8_141], %350 {strides = array<i32>} : memref<16x32xf32, #tpu.memory_space<vmem>>, vector<8x8xf32>,
    %352 = vector.extract_strided_slice %306 {offsets = [0, 16], sizes = [8, 8], strides = [1, 1]} : vector<16x32xf32> to vector<8x8xf32>
    %353 = vector.extract_strided_slice %307 {offsets = [0, 16], sizes = [8, 8], strides = [1, 1]} : vector<16x32xf32> to vector<8x8xf32>
    %354 = vector.extract_strided_slice %308 {offsets = [0, 16], sizes = [8, 8], strides = [1, 1]} : vector<16x32xf32> to vector<8x8xf32>
    %355 = tpu.transpose %353, [1, 0] : vector<8x8xf32> -> vector<8x8xf32>
    %cst_142 = arith.constant dense<0.000000e+00> : vector<8x8xf32>
    %356 = tpu.matmul %352, %355, %cst_142 {dimension_numbers = #tpu.dot_dimension_numbers<[1], [0], [0], [1], [0, 0, 1, 1], [], []>} : vector<8x8xf32>, vector<8x8xf32>, vector<8x8xf32> -> vector<8x8xf32>
    %cst_143 = arith.constant 0.353553385 : f32
    %357 = vector.broadcast %cst_143 : f32 to vector<8x8xf32>
    %358 = arith.mulf %356, %357 : vector<8x8xf32>
    %359 = vector.broadcast %309 : vector<1x8xf32> to vector<8x8xf32>
    %360 = arith.addf %358, %359 : vector<8x8xf32>
    %cst_144 = arith.constant dense<0xFF800000> : vector<8xf32>
    %361 = vector.multi_reduction <maximumf>, %360, %cst_144 [1] : vector<8x8xf32> to vector<8xf32>
    %362 = vector.shape_cast %361 : vector<8xf32> to vector<8x1xf32>
    %363 = vector.broadcast %362 : vector<8x1xf32> to vector<8x8xf32>
    %364 = arith.subf %360, %363 : vector<8x8xf32>
    %365 = math.exp %364 : vector<8x8xf32>
    %cst_145 = arith.constant dense<0.000000e+00> : vector<8xf32>
    %366 = vector.multi_reduction <add>, %365, %cst_145 [1] : vector<8x8xf32> to vector<8xf32>
    %367 = vector.shape_cast %366 : vector<8xf32> to vector<8x1xf32>
    %368 = tpu.reciprocal %367 {approx = true} : vector<8x1xf32> -> vector<8x1xf32>
    %369 = vector.broadcast %368 : vector<8x1xf32> to vector<8x8xf32>
    %370 = arith.mulf %365, %369 : vector<8x8xf32>
    %cst_146 = arith.constant dense<0.000000e+00> : vector<8x8xf32>
    %371 = tpu.matmul %370, %354, %cst_146 {dimension_numbers = #tpu.dot_dimension_numbers<[1], [0], [0], [1], [0, 0, 1, 1], [], []>} : vector<8x8xf32>, vector<8x8xf32>, vector<8x8xf32> -> vector<8x8xf32>
    %c0_147 = arith.constant 0 : index
    %c16_148 = arith.constant 16 : index
    %372 = vector.load %arg20[%c0_147, %c16_148] : memref<16x32xf32, #tpu.memory_space<vmem>>, vector<8x8xf32>
    tpu.vector_store %arg20[%c0_147, %c16_148], %371 {strides = array<i32>} : memref<16x32xf32, #tpu.memory_space<vmem>>, vector<8x8xf32>,
    %373 = vector.extract_strided_slice %306 {offsets = [0, 24], sizes = [8, 8], strides = [1, 1]} : vector<16x32xf32> to vector<8x8xf32>
    %374 = vector.extract_strided_slice %307 {offsets = [0, 24], sizes = [8, 8], strides = [1, 1]} : vector<16x32xf32> to vector<8x8xf32>
    %375 = vector.extract_strided_slice %308 {offsets = [0, 24], sizes = [8, 8], strides = [1, 1]} : vector<16x32xf32> to vector<8x8xf32>
    %376 = tpu.transpose %374, [1, 0] : vector<8x8xf32> -> vector<8x8xf32>
    %cst_149 = arith.constant dense<0.000000e+00> : vector<8x8xf32>
    %377 = tpu.matmul %373, %376, %cst_149 {dimension_numbers = #tpu.dot_dimension_numbers<[1], [0], [0], [1], [0, 0, 1, 1], [], []>} : vector<8x8xf32>, vector<8x8xf32>, vector<8x8xf32> -> vector<8x8xf32>
    %cst_150 = arith.constant 0.353553385 : f32
    %378 = vector.broadcast %cst_150 : f32 to vector<8x8xf32>
    %379 = arith.mulf %377, %378 : vector<8x8xf32>
    %380 = vector.broadcast %309 : vector<1x8xf32> to vector<8x8xf32>
    %381 = arith.addf %379, %380 : vector<8x8xf32>
    %cst_151 = arith.constant dense<0xFF800000> : vector<8xf32>
    %382 = vector.multi_reduction <maximumf>, %381, %cst_151 [1] : vector<8x8xf32> to vector<8xf32>
    %383 = vector.shape_cast %382 : vector<8xf32> to vector<8x1xf32>
    %384 = vector.broadcast %383 : vector<8x1xf32> to vector<8x8xf32>
    %385 = arith.subf %381, %384 : vector<8x8xf32>
    %386 = math.exp %385 : vector<8x8xf32>
    %cst_152 = arith.constant dense<0.000000e+00> : vector<8xf32>
    %387 = vector.multi_reduction <add>, %386, %cst_152 [1] : vector<8x8xf32> to vector<8xf32>
    %388 = vector.shape_cast %387 : vector<8xf32> to vector<8x1xf32>
    %389 = tpu.reciprocal %388 {approx = true} : vector<8x1xf32> -> vector<8x1xf32>
    %390 = vector.broadcast %389 : vector<8x1xf32> to vector<8x8xf32>
    %391 = arith.mulf %386, %390 : vector<8x8xf32>
    %cst_153 = arith.constant dense<0.000000e+00> : vector<8x8xf32>
    %392 = tpu.matmul %391, %375, %cst_153 {dimension_numbers = #tpu.dot_dimension_numbers<[1], [0], [0], [1], [0, 0, 1, 1], [], []>} : vector<8x8xf32>, vector<8x8xf32>, vector<8x8xf32> -> vector<8x8xf32>
    %c0_154 = arith.constant 0 : index
    %c24_155 = arith.constant 24 : index
    %393 = vector.load %arg20[%c0_154, %c24_155] : memref<16x32xf32, #tpu.memory_space<vmem>>, vector<8x8xf32>
    tpu.vector_store %arg20[%c0_154, %c24_155], %392 {strides = array<i32>} : memref<16x32xf32, #tpu.memory_space<vmem>>, vector<8x8xf32>,
    %394 = vector.extract_strided_slice %4 {offsets = [1, 0], sizes = [1, 8], strides = [1, 1]} : vector<2x8xf32> to vector<1x8xf32>
    %395 = vector.extract_strided_slice %306 {offsets = [8, 0], sizes = [8, 8], strides = [1, 1]} : vector<16x32xf32> to vector<8x8xf32>
    %396 = vector.extract_strided_slice %307 {offsets = [8, 0], sizes = [8, 8], strides = [1, 1]} : vector<16x32xf32> to vector<8x8xf32>
    %397 = vector.extract_strided_slice %308 {offsets = [8, 0], sizes = [8, 8], strides = [1, 1]} : vector<16x32xf32> to vector<8x8xf32>
    %398 = tpu.transpose %396, [1, 0] : vector<8x8xf32> -> vector<8x8xf32>
    %cst_156 = arith.constant dense<0.000000e+00> : vector<8x8xf32>
    %399 = tpu.matmul %395, %398, %cst_156 {dimension_numbers = #tpu.dot_dimension_numbers<[1], [0], [0], [1], [0, 0, 1, 1], [], []>} : vector<8x8xf32>, vector<8x8xf32>, vector<8x8xf32> -> vector<8x8xf32>
    %cst_157 = arith.constant 0.353553385 : f32
    %400 = vector.broadcast %cst_157 : f32 to vector<8x8xf32>
    %401 = arith.mulf %399, %400 : vector<8x8xf32>
    %402 = vector.broadcast %394 : vector<1x8xf32> to vector<8x8xf32>
    %403 = arith.addf %401, %402 : vector<8x8xf32>
    %cst_158 = arith.constant dense<0xFF800000> : vector<8xf32>
    %404 = vector.multi_reduction <maximumf>, %403, %cst_158 [1] : vector<8x8xf32> to vector<8xf32>
    %405 = vector.shape_cast %404 : vector<8xf32> to vector<8x1xf32>
    %406 = vector.broadcast %405 : vector<8x1xf32> to vector<8x8xf32>
    %407 = arith.subf %403, %406 : vector<8x8xf32>
    %408 = math.exp %407 : vector<8x8xf32>
    %cst_159 = arith.constant dense<0.000000e+00> : vector<8xf32>
    %409 = vector.multi_reduction <add>, %408, %cst_159 [1] : vector<8x8xf32> to vector<8xf32>
    %410 = vector.shape_cast %409 : vector<8xf32> to vector<8x1xf32>
    %411 = tpu.reciprocal %410 {approx = true} : vector<8x1xf32> -> vector<8x1xf32>
    %412 = vector.broadcast %411 : vector<8x1xf32> to vector<8x8xf32>
    %413 = arith.mulf %408, %412 : vector<8x8xf32>
    %cst_160 = arith.constant dense<0.000000e+00> : vector<8x8xf32>
    %414 = tpu.matmul %413, %397, %cst_160 {dimension_numbers = #tpu.dot_dimension_numbers<[1], [0], [0], [1], [0, 0, 1, 1], [], []>} : vector<8x8xf32>, vector<8x8xf32>, vector<8x8xf32> -> vector<8x8xf32>
    %c8_161 = arith.constant 8 : index
    %c0_162 = arith.constant 0 : index
    %415 = vector.load %arg20[%c8_161, %c0_162] : memref<16x32xf32, #tpu.memory_space<vmem>>, vector<8x8xf32>
    tpu.vector_store %arg20[%c8_161, %c0_162], %414 {strides = array<i32>} : memref<16x32xf32, #tpu.memory_space<vmem>>, vector<8x8xf32>,
    %416 = vector.extract_strided_slice %306 {offsets = [8, 8], sizes = [8, 8], strides = [1, 1]} : vector<16x32xf32> to vector<8x8xf32>
    %417 = vector.extract_strided_slice %307 {offsets = [8, 8], sizes = [8, 8], strides = [1, 1]} : vector<16x32xf32> to vector<8x8xf32>
    %418 = vector.extract_strided_slice %308 {offsets = [8, 8], sizes = [8, 8], strides = [1, 1]} : vector<16x32xf32> to vector<8x8xf32>
    %419 = tpu.transpose %417, [1, 0] : vector<8x8xf32> -> vector<8x8xf32>
    %cst_163 = arith.constant dense<0.000000e+00> : vector<8x8xf32>
    %420 = tpu.matmul %416, %419, %cst_163 {dimension_numbers = #tpu.dot_dimension_numbers<[1], [0], [0], [1], [0, 0, 1, 1], [], []>} : vector<8x8xf32>, vector<8x8xf32>, vector<8x8xf32> -> vector<8x8xf32>
    %cst_164 = arith.constant 0.353553385 : f32
    %421 = vector.broadcast %cst_164 : f32 to vector<8x8xf32>
    %422 = arith.mulf %420, %421 : vector<8x8xf32>
    %423 = vector.broadcast %394 : vector<1x8xf32> to vector<8x8xf32>
    %424 = arith.addf %422, %423 : vector<8x8xf32>
    %cst_165 = arith.constant dense<0xFF800000> : vector<8xf32>
    %425 = vector.multi_reduction <maximumf>, %424, %cst_165 [1] : vector<8x8xf32> to vector<8xf32>
    %426 = vector.shape_cast %425 : vector<8xf32> to vector<8x1xf32>
    %427 = vector.broadcast %426 : vector<8x1xf32> to vector<8x8xf32>
    %428 = arith.subf %424, %427 : vector<8x8xf32>
    %429 = math.exp %428 : vector<8x8xf32>
    %cst_166 = arith.constant dense<0.000000e+00> : vector<8xf32>
    %430 = vector.multi_reduction <add>, %429, %cst_166 [1] : vector<8x8xf32> to vector<8xf32>
    %431 = vector.shape_cast %430 : vector<8xf32> to vector<8x1xf32>
    %432 = tpu.reciprocal %431 {approx = true} : vector<8x1xf32> -> vector<8x1xf32>
    %433 = vector.broadcast %432 : vector<8x1xf32> to vector<8x8xf32>
    %434 = arith.mulf %429, %433 : vector<8x8xf32>
    %cst_167 = arith.constant dense<0.000000e+00> : vector<8x8xf32>
    %435 = tpu.matmul %434, %418, %cst_167 {dimension_numbers = #tpu.dot_dimension_numbers<[1], [0], [0], [1], [0, 0, 1, 1], [], []>} : vector<8x8xf32>, vector<8x8xf32>, vector<8x8xf32> -> vector<8x8xf32>
    %c8_168 = arith.constant 8 : index
    %c8_169 = arith.constant 8 : index
    %436 = vector.load %arg20[%c8_168, %c8_169] : memref<16x32xf32, #tpu.memory_space<vmem>>, vector<8x8xf32>
    tpu.vector_store %arg20[%c8_168, %c8_169], %435 {strides = array<i32>} : memref<16x32xf32, #tpu.memory_space<vmem>>, vector<8x8xf32>,
    %437 = vector.extract_strided_slice %306 {offsets = [8, 16], sizes = [8, 8], strides = [1, 1]} : vector<16x32xf32> to vector<8x8xf32>
    %438 = vector.extract_strided_slice %307 {offsets = [8, 16], sizes = [8, 8], strides = [1, 1]} : vector<16x32xf32> to vector<8x8xf32>
    %439 = vector.extract_strided_slice %308 {offsets = [8, 16], sizes = [8, 8], strides = [1, 1]} : vector<16x32xf32> to vector<8x8xf32>
    %440 = tpu.transpose %438, [1, 0] : vector<8x8xf32> -> vector<8x8xf32>
    %cst_170 = arith.constant dense<0.000000e+00> : vector<8x8xf32>
    %441 = tpu.matmul %437, %440, %cst_170 {dimension_numbers = #tpu.dot_dimension_numbers<[1], [0], [0], [1], [0, 0, 1, 1], [], []>} : vector<8x8xf32>, vector<8x8xf32>, vector<8x8xf32> -> vector<8x8xf32>
    %cst_171 = arith.constant 0.353553385 : f32
    %442 = vector.broadcast %cst_171 : f32 to vector<8x8xf32>
    %443 = arith.mulf %441, %442 : vector<8x8xf32>
    %444 = vector.broadcast %394 : vector<1x8xf32> to vector<8x8xf32>
    %445 = arith.addf %443, %444 : vector<8x8xf32>
    %cst_172 = arith.constant dense<0xFF800000> : vector<8xf32>
    %446 = vector.multi_reduction <maximumf>, %445, %cst_172 [1] : vector<8x8xf32> to vector<8xf32>
    %447 = vector.shape_cast %446 : vector<8xf32> to vector<8x1xf32>
    %448 = vector.broadcast %447 : vector<8x1xf32> to vector<8x8xf32>
    %449 = arith.subf %445, %448 : vector<8x8xf32>
    %450 = math.exp %449 : vector<8x8xf32>
    %cst_173 = arith.constant dense<0.000000e+00> : vector<8xf32>
    %451 = vector.multi_reduction <add>, %450, %cst_173 [1] : vector<8x8xf32> to vector<8xf32>
    %452 = vector.shape_cast %451 : vector<8xf32> to vector<8x1xf32>
    %453 = tpu.reciprocal %452 {approx = true} : vector<8x1xf32> -> vector<8x1xf32>
    %454 = vector.broadcast %453 : vector<8x1xf32> to vector<8x8xf32>
    %455 = arith.mulf %450, %454 : vector<8x8xf32>
    %cst_174 = arith.constant dense<0.000000e+00> : vector<8x8xf32>
    %456 = tpu.matmul %455, %439, %cst_174 {dimension_numbers = #tpu.dot_dimension_numbers<[1], [0], [0], [1], [0, 0, 1, 1], [], []>} : vector<8x8xf32>, vector<8x8xf32>, vector<8x8xf32> -> vector<8x8xf32>
    %c8_175 = arith.constant 8 : index
    %c16_176 = arith.constant 16 : index
    %457 = vector.load %arg20[%c8_175, %c16_176] : memref<16x32xf32, #tpu.memory_space<vmem>>, vector<8x8xf32>
    tpu.vector_store %arg20[%c8_175, %c16_176], %456 {strides = array<i32>} : memref<16x32xf32, #tpu.memory_space<vmem>>, vector<8x8xf32>,
    %458 = vector.extract_strided_slice %306 {offsets = [8, 24], sizes = [8, 8], strides = [1, 1]} : vector<16x32xf32> to vector<8x8xf32>
    %459 = vector.extract_strided_slice %307 {offsets = [8, 24], sizes = [8, 8], strides = [1, 1]} : vector<16x32xf32> to vector<8x8xf32>
    %460 = vector.extract_strided_slice %308 {offsets = [8, 24], sizes = [8, 8], strides = [1, 1]} : vector<16x32xf32> to vector<8x8xf32>
    %461 = tpu.transpose %459, [1, 0] : vector<8x8xf32> -> vector<8x8xf32>
    %cst_177 = arith.constant dense<0.000000e+00> : vector<8x8xf32>
    %462 = tpu.matmul %458, %461, %cst_177 {dimension_numbers = #tpu.dot_dimension_numbers<[1], [0], [0], [1], [0, 0, 1, 1], [], []>} : vector<8x8xf32>, vector<8x8xf32>, vector<8x8xf32> -> vector<8x8xf32>
    %cst_178 = arith.constant 0.353553385 : f32
    %463 = vector.broadcast %cst_178 : f32 to vector<8x8xf32>
    %464 = arith.mulf %462, %463 : vector<8x8xf32>
    %465 = vector.broadcast %394 : vector<1x8xf32> to vector<8x8xf32>
    %466 = arith.addf %464, %465 : vector<8x8xf32>
    %cst_179 = arith.constant dense<0xFF800000> : vector<8xf32>
    %467 = vector.multi_reduction <maximumf>, %466, %cst_179 [1] : vector<8x8xf32> to vector<8xf32>
    %468 = vector.shape_cast %467 : vector<8xf32> to vector<8x1xf32>
    %469 = vector.broadcast %468 : vector<8x1xf32> to vector<8x8xf32>
    %470 = arith.subf %466, %469 : vector<8x8xf32>
    %471 = math.exp %470 : vector<8x8xf32>
    %cst_180 = arith.constant dense<0.000000e+00> : vector<8xf32>
    %472 = vector.multi_reduction <add>, %471, %cst_180 [1] : vector<8x8xf32> to vector<8xf32>
    %473 = vector.shape_cast %472 : vector<8xf32> to vector<8x1xf32>
    %474 = tpu.reciprocal %473 {approx = true} : vector<8x1xf32> -> vector<8x1xf32>
    %475 = vector.broadcast %474 : vector<8x1xf32> to vector<8x8xf32>
    %476 = arith.mulf %471, %475 : vector<8x8xf32>
    %cst_181 = arith.constant dense<0.000000e+00> : vector<8x8xf32>
    %477 = tpu.matmul %476, %460, %cst_181 {dimension_numbers = #tpu.dot_dimension_numbers<[1], [0], [0], [1], [0, 0, 1, 1], [], []>} : vector<8x8xf32>, vector<8x8xf32>, vector<8x8xf32> -> vector<8x8xf32>
    %c8_182 = arith.constant 8 : index
    %c24_183 = arith.constant 24 : index
    %478 = vector.load %arg20[%c8_182, %c24_183] : memref<16x32xf32, #tpu.memory_space<vmem>>, vector<8x8xf32>
    tpu.vector_store %arg20[%c8_182, %c24_183], %477 {strides = array<i32>} : memref<16x32xf32, #tpu.memory_space<vmem>>, vector<8x8xf32>,
    %c0_184 = arith.constant 0 : index
    %c0_185 = arith.constant 0 : index
    %479 = vector.load %arg20[%c0_184, %c0_185] : memref<16x32xf32, #tpu.memory_space<vmem>>, vector<16x32xf32>
    %c1_186 = arith.constant 1 : index
    %c0_187 = arith.constant 0 : index
    %c0_188 = arith.constant 0 : index
    %480 = vector.load %arg7[%c1_186, %c0_187, %c0_188] : memref<2x32x32xf32, #tpu.memory_space<vmem>>, vector<1x32x32xf32>
    %481 = vector.shape_cast %480 : vector<1x32x32xf32> to vector<32x32xf32>
    %cst_189 = arith.constant dense<0.000000e+00> : vector<16x32xf32>
    %482 = tpu.matmul %479, %481, %cst_189 {dimension_numbers = #tpu.dot_dimension_numbers<[1], [0], [0], [1], [0, 0, 1, 1], [], []>} : vector<16x32xf32>, vector<32x32xf32>, vector<16x32xf32> -> vector<16x32xf32>
    %c1_190 = arith.constant 1 : index
    %c0_191 = arith.constant 0 : index
    %c0_192 = arith.constant 0 : index
    %483 = vector.load %arg8[%c1_190, %c0_191, %c0_192] : memref<2x1x32xf32, #tpu.memory_space<vmem>>, vector<1x1x32xf32>
    %484 = vector.shape_cast %483 : vector<1x1x32xf32> to vector<1x32xf32>
    %485 = vector.broadcast %484 : vector<1x32xf32> to vector<16x32xf32>
    %486 = arith.addf %482, %485 : vector<16x32xf32>
    %487 = arith.addf %486, %298 : vector<16x32xf32>
    %c1_193 = arith.constant 1 : index
    %c0_194 = arith.constant 0 : index
    %c0_195 = arith.constant 0 : index
    %488 = vector.load %arg9[%c1_193, %c0_194, %c0_195] : memref<2x1x32xf32, #tpu.memory_space<vmem>>, vector<1x1x32xf32>
    %489 = vector.shape_cast %488 : vector<1x1x32xf32> to vector<1x32xf32>
    %c1_196 = arith.constant 1 : index
    %c0_197 = arith.constant 0 : index
    %c0_198 = arith.constant 0 : index
    %490 = vector.load %arg10[%c1_196, %c0_197, %c0_198] : memref<2x1x32xf32, #tpu.memory_space<vmem>>, vector<1x1x32xf32>
    %491 = vector.shape_cast %490 : vector<1x1x32xf32> to vector<1x32xf32>
    %cst_199 = arith.constant dense<0.000000e+00> : vector<16xf32>
    %492 = vector.multi_reduction <add>, %487, %cst_199 [1] : vector<16x32xf32> to vector<16xf32>
    %493 = vector.shape_cast %492 : vector<16xf32> to vector<16x1xf32>
    %cst_200 = arith.constant 3.200000e+01 : f32
    %494 = vector.broadcast %cst_200 : f32 to vector<16x1xf32>
    %495 = arith.divf %493, %494 : vector<16x1xf32>
    %496 = vector.broadcast %495 : vector<16x1xf32> to vector<16x32xf32>
    %497 = arith.subf %487, %496 : vector<16x32xf32>
    %498 = arith.mulf %497, %497 : vector<16x32xf32>
    %cst_201 = arith.constant dense<0.000000e+00> : vector<16xf32>
    %499 = vector.multi_reduction <add>, %498, %cst_201 [1] : vector<16x32xf32> to vector<16xf32>
    %500 = vector.shape_cast %499 : vector<16xf32> to vector<16x1xf32>
    %cst_202 = arith.constant 3.200000e+01 : f32
    %501 = vector.broadcast %cst_202 : f32 to vector<16x1xf32>
    %502 = arith.divf %500, %501 : vector<16x1xf32>
    %503 = vector.broadcast %495 : vector<16x1xf32> to vector<16x32xf32>
    %504 = arith.subf %487, %503 : vector<16x32xf32>
    %cst_203 = arith.constant 9.99999996E-13 : f32
    %505 = vector.broadcast %cst_203 : f32 to vector<16x1xf32>
    %506 = arith.addf %502, %505 : vector<16x1xf32>
    %507 = math.rsqrt %506 : vector<16x1xf32>
    %508 = vector.broadcast %507 : vector<16x1xf32> to vector<16x32xf32>
    %509 = arith.mulf %504, %508 : vector<16x32xf32>
    %510 = vector.broadcast %489 : vector<1x32xf32> to vector<16x32xf32>
    %511 = arith.mulf %509, %510 : vector<16x32xf32>
    %512 = vector.broadcast %491 : vector<1x32xf32> to vector<16x32xf32>
    %513 = arith.addf %511, %512 : vector<16x32xf32>
    %c1_204 = arith.constant 1 : index
    %c0_205 = arith.constant 0 : index
    %c0_206 = arith.constant 0 : index
    %514 = vector.load %arg11[%c1_204, %c0_205, %c0_206] : memref<2x32x64xf32, #tpu.memory_space<vmem>>, vector<1x32x64xf32>
    %515 = vector.shape_cast %514 : vector<1x32x64xf32> to vector<32x64xf32>
    %cst_207 = arith.constant dense<0.000000e+00> : vector<16x64xf32>
    %516 = tpu.matmul %513, %515, %cst_207 {dimension_numbers = #tpu.dot_dimension_numbers<[1], [0], [0], [1], [0, 0, 1, 1], [], []>} : vector<16x32xf32>, vector<32x64xf32>, vector<16x64xf32> -> vector<16x64xf32>
    %c1_208 = arith.constant 1 : index
    %c0_209 = arith.constant 0 : index
    %c0_210 = arith.constant 0 : index
    %517 = vector.load %arg12[%c1_208, %c0_209, %c0_210] : memref<2x1x64xf32, #tpu.memory_space<vmem>>, vector<1x1x64xf32>
    %518 = vector.shape_cast %517 : vector<1x1x64xf32> to vector<1x64xf32>
    %519 = vector.broadcast %518 : vector<1x64xf32> to vector<16x64xf32>
    %520 = arith.addf %516, %519 : vector<16x64xf32>
    %cst_211 = arith.constant 5.000000e-01 : f32
    %521 = vector.broadcast %cst_211 : f32 to vector<16x64xf32>
    %522 = arith.mulf %521, %520 : vector<16x64xf32>
    %cst_212 = arith.constant 4.471500e-02 : f32
    %523 = vector.broadcast %cst_212 : f32 to vector<16x64xf32>
    %524 = arith.mulf %523, %520 : vector<16x64xf32>
    %525 = arith.mulf %524, %520 : vector<16x64xf32>
    %526 = arith.mulf %525, %520 : vector<16x64xf32>
    %527 = arith.addf %520, %526 : vector<16x64xf32>
    %cst_213 = arith.constant 0.797884583 : f32
    %528 = vector.broadcast %cst_213 : f32 to vector<16x64xf32>
    %529 = arith.mulf %528, %527 : vector<16x64xf32>
    %530 = math.tanh %529 : vector<16x64xf32>
    %cst_214 = arith.constant 1.000000e+00 : f32
    %531 = vector.broadcast %cst_214 : f32 to vector<16x64xf32>
    %532 = arith.addf %531, %530 : vector<16x64xf32>
    %533 = arith.mulf %522, %532 : vector<16x64xf32>
    %c1_215 = arith.constant 1 : index
    %c0_216 = arith.constant 0 : index
    %c0_217 = arith.constant 0 : index
    %534 = vector.load %arg13[%c1_215, %c0_216, %c0_217] : memref<2x64x32xf32, #tpu.memory_space<vmem>>, vector<1x64x32xf32>
    %535 = vector.shape_cast %534 : vector<1x64x32xf32> to vector<64x32xf32>
    %cst_218 = arith.constant dense<0.000000e+00> : vector<16x32xf32>
    %536 = tpu.matmul %533, %535, %cst_218 {dimension_numbers = #tpu.dot_dimension_numbers<[1], [0], [0], [1], [0, 0, 1, 1], [], []>} : vector<16x64xf32>, vector<64x32xf32>, vector<16x32xf32> -> vector<16x32xf32>
    %c1_219 = arith.constant 1 : index
    %c0_220 = arith.constant 0 : index
    %c0_221 = arith.constant 0 : index
    %537 = vector.load %arg14[%c1_219, %c0_220, %c0_221] : memref<2x1x32xf32, #tpu.memory_space<vmem>>, vector<1x1x32xf32>
    %538 = vector.shape_cast %537 : vector<1x1x32xf32> to vector<1x32xf32>
    %539 = vector.broadcast %538 : vector<1x32xf32> to vector<16x32xf32>
    %540 = arith.addf %536, %539 : vector<16x32xf32>
    %541 = arith.addf %540, %513 : vector<16x32xf32>
    %c1_222 = arith.constant 1 : index
    %c0_223 = arith.constant 0 : index
    %c0_224 = arith.constant 0 : index
    %542 = vector.load %arg15[%c1_222, %c0_223, %c0_224] : memref<2x1x32xf32, #tpu.memory_space<vmem>>, vector<1x1x32xf32>
    %543 = vector.shape_cast %542 : vector<1x1x32xf32> to vector<1x32xf32>
    %c1_225 = arith.constant 1 : index
    %c0_226 = arith.constant 0 : index
    %c0_227 = arith.constant 0 : index
    %544 = vector.load %arg16[%c1_225, %c0_226, %c0_227] : memref<2x1x32xf32, #tpu.memory_space<vmem>>, vector<1x1x32xf32>
    %545 = vector.shape_cast %544 : vector<1x1x32xf32> to vector<1x32xf32>
    %cst_228 = arith.constant dense<0.000000e+00> : vector<16xf32>
    %546 = vector.multi_reduction <add>, %541, %cst_228 [1] : vector<16x32xf32> to vector<16xf32>
    %547 = vector.shape_cast %546 : vector<16xf32> to vector<16x1xf32>
    %cst_229 = arith.constant 3.200000e+01 : f32
    %548 = vector.broadcast %cst_229 : f32 to vector<16x1xf32>
    %549 = arith.divf %547, %548 : vector<16x1xf32>
    %550 = vector.broadcast %549 : vector<16x1xf32> to vector<16x32xf32>
    %551 = arith.subf %541, %550 : vector<16x32xf32>
    %552 = arith.mulf %551, %551 : vector<16x32xf32>
    %cst_230 = arith.constant dense<0.000000e+00> : vector<16xf32>
    %553 = vector.multi_reduction <add>, %552, %cst_230 [1] : vector<16x32xf32> to vector<16xf32>
    %554 = vector.shape_cast %553 : vector<16xf32> to vector<16x1xf32>
    %cst_231 = arith.constant 3.200000e+01 : f32
    %555 = vector.broadcast %cst_231 : f32 to vector<16x1xf32>
    %556 = arith.divf %554, %555 : vector<16x1xf32>
    %557 = vector.broadcast %549 : vector<16x1xf32> to vector<16x32xf32>
    %558 = arith.subf %541, %557 : vector<16x32xf32>
    %cst_232 = arith.constant 9.99999996E-13 : f32
    %559 = vector.broadcast %cst_232 : f32 to vector<16x1xf32>
    %560 = arith.addf %556, %559 : vector<16x1xf32>
    %561 = math.rsqrt %560 : vector<16x1xf32>
    %562 = vector.broadcast %561 : vector<16x1xf32> to vector<16x32xf32>
    %563 = arith.mulf %558, %562 : vector<16x32xf32>
    %564 = vector.broadcast %543 : vector<1x32xf32> to vector<16x32xf32>
    %565 = arith.mulf %563, %564 : vector<16x32xf32>
    %566 = vector.broadcast %545 : vector<1x32xf32> to vector<16x32xf32>
    %567 = arith.addf %565, %566 : vector<16x32xf32>
    %c0_233 = arith.constant 0 : index
    %c0_234 = arith.constant 0 : index
    %568 = vector.load %arg17[%c0_233, %c0_234] : memref<32x2xf32, #tpu.memory_space<vmem>>, vector<32x2xf32>
    %cst_235 = arith.constant dense<0.000000e+00> : vector<16x2xf32>
    %569 = tpu.matmul %567, %568, %cst_235 {dimension_numbers = #tpu.dot_dimension_numbers<[1], [0], [0], [1], [0, 0, 1, 1], [], []>} : vector<16x32xf32>, vector<32x2xf32>, vector<16x2xf32> -> vector<16x2xf32>
    %c0_236 = arith.constant 0 : index
    %c0_237 = arith.constant 0 : index
    %570 = vector.load %arg18[%c0_236, %c0_237] : memref<1x2xf32, #tpu.memory_space<vmem>>, vector<1x2xf32>
    %571 = vector.broadcast %570 : vector<1x2xf32> to vector<16x2xf32>
    %572 = arith.addf %569, %571 : vector<16x2xf32>
    %c0_238 = arith.constant 0 : index
    %c0_239 = arith.constant 0 : index
    %573 = vector.load %arg2[%c0_238, %c0_239] : memref<16x1xf32, #tpu.memory_space<vmem>>, vector<16x1xf32>
    %cst_240 = arith.constant 0.000000e+00 : f32
    %574 = vector.broadcast %cst_240 : f32 to vector<16x1xf32>
    %575 = arith.cmpf ogt, %573, %574 : vector<16x1xf32>
    %cst_241 = arith.constant -1.000000e+07 : f32
    %576 = vector.shape_cast %575 : vector<16x1xi1> to vector<16x1xi1>
    %577 = vector.broadcast %576 : vector<16x1xi1> to vector<16x2xi1>
    %578 = vector.broadcast %cst_241 : f32 to vector<16x2xf32>
    %579 = arith.select %577, %572, %578 : vector<16x2xi1>, vector<16x2xf32>
    %c0_242 = arith.constant 0 : index
    %c0_243 = arith.constant 0 : index
    %580 = vector.load %arg19[%c0_242, %c0_243] : memref<16x2xf32, #tpu.memory_space<vmem>>, vector<16x2xf32>
    tpu.vector_store %arg19[%c0_242, %c0_243], %579 {strides = array<i32>} : memref<16x2xf32, #tpu.memory_space<vmem>>, vector<16x2xf32>,
    return
  }
}

</mosaic_0001>

<llo_original>
// kernel: squeeze.3
$region0: #{squeeze.3}
  %s0 = inlined_call_operand.vmem [shape: f32[16], index: 0, kind: input, shape index: {}]
  %s1 = inlined_call_operand.hbm [shape: f32[2,8], index: 1, kind: output, shape index: {}]
  $region1: #{squeeze.3} parent=0
    #allocation0 [shape = 'u8[1024]{0}', space=vmem, size = 0x400, scoped, tag = 'operand span for operand 1']
    #allocation1 [shape = 's32[1]{0}', space=sflag, size = 0x4, scoped, tag = 'scoped memory for squeeze.3']
    #allocation2 [shape = 'u8[4096]{0}', space=vmem, size = 0x1000, scoped, tag = 'scoped mem for output reshape']
    #allocation3 [shape = 'u8[4096]{0}', space=vmem, size = 0x1000, scoped, tag = 'scoped mem for input reshape']
    %2 = vsyncpa [#allocation1], 0
    %s4 = sshll.u32 1, 1
    %s5 = ssub.s32 %s4, 1
    %v6 = vld [vmem:[%s0] sm:%s5]
    %7 = vst [vmem:[#allocation3] sm:%s5] %v6
    %v8 = vld [vmem:[#allocation3] sm:$0x1]
    %vm9 = vcmask 64512
    %10 = vst.msk [vmem:[#allocation2] sm:$0x1] %vm9, %v8
    %v11 = vld [vmem:[#allocation3] sm:$0x1]
    %12 = vrot.lane.b32.xlu0 %v11, 120
    %v13 = vpop.permute.xlu0 %12
    %vm14 = vcmask 64512
    %s15 = scalar_lea.vmem [#allocation2], 1
    %16 = vst.msk [vmem:[%s15] sm:$0x1] %vm14, %v13
    %s18 = sshll.u32 1, 2
    %s19 = ssub.s32 %s18, 1
    %v21 = vld [vmem:[#allocation2] sm:%s19]
    %s22 = sshll.u32 1, 2
    %s23 = ssub.s32 %s22, 1
    %24 = vst [vmem:[#allocation0] sm:%s23] %v21
    %s26 = ssub.s32 32, 32
    %27 = vsyncadd [#allocation1], %s26
    %s29 = sshll.u32 [#allocation0], 4
    %s30 = int_to_ptr.vmem [resolvable:$true] %s29
    %32 = dma.vmem_to_hbm [thread:$0]  %s30, 32, %s1, [#allocation1]
    %33 = dma.done [#allocation1], 32
    %34 = vsyncpa [#allocation1], 1

// kernel: bert_qa_forward.1
$region0: #{bert_qa_forward.1}
  #allocation0 [shape = 'u32[]', space=smem, size = 0x4, offset = 0x4, fixed_abs, tag = 'smem constant byte address 0x4 - core index']
  #allocation1 [shape = 'u32[144,128]{1,0:T(1,128)}', space=vmem, size = 0x12000, scoped, tag = 'internal scratch']
  #allocation2 [shape = 'f32[16,32]{1,0:T(8,128)}', space=vmem, size = 0x2000, scoped, tag = 'scratch operand']
  %s0 = inlined_call_operand.vmem [shape: f32[16,32], index: 0, kind: input, shape index: {}]
  %s1 = inlined_call_operand.vmem [shape: f32[2,8], index: 1, kind: input, shape index: {}]
  %s2 = inlined_call_operand.vmem [shape: f32[16,1], index: 2, kind: input, shape index: {}]
  %s3 = inlined_call_operand.vmem [shape: f32[1,32], index: 3, kind: input, shape index: {}]
  %s4 = inlined_call_operand.vmem [shape: f32[1,32], index: 4, kind: input, shape index: {}]
  %s5 = inlined_call_operand.vmem [shape: f32[2,32,96], index: 5, kind: input, shape index: {}]
  %s6 = inlined_call_operand.vmem [shape: f32[2,1,96], index: 6, kind: input, shape index: {}]
  %s7 = inlined_call_operand.vmem [shape: f32[2,32,32], index: 7, kind: input, shape index: {}]
  %s8 = inlined_call_operand.vmem [shape: f32[2,1,32], index: 8, kind: input, shape index: {}]
  %s9 = inlined_call_operand.vmem [shape: f32[2,1,32], index: 9, kind: input, shape index: {}]
  %s10 = inlined_call_operand.vmem [shape: f32[2,1,32], index: 10, kind: input, shape index: {}]
  %s11 = inlined_call_operand.vmem [shape: f32[2,32,64], index: 11, kind: input, shape index: {}]
  %s12 = inlined_call_operand.vmem [shape: f32[2,1,64], index: 12, kind: input, shape index: {}]
  %s13 = inlined_call_operand.vmem [shape: f32[2,64,32], index: 13, kind: input, shape index: {}]
  %s14 = inlined_call_operand.vmem [shape: f32[2,1,32], index: 14, kind: input, shape index: {}]
  %s15 = inlined_call_operand.vmem [shape: f32[2,1,32], index: 15, kind: input, shape index: {}]
  %s16 = inlined_call_operand.vmem [shape: f32[2,1,32], index: 16, kind: input, shape index: {}]
  %s17 = inlined_call_operand.vmem [shape: f32[32,2], index: 17, kind: input, shape index: {}]
  %s18 = inlined_call_operand.vmem [shape: f32[1,2], index: 18, kind: input, shape index: {}]
  %s19 = inlined_call_operand.vmem [shape: f32[16,2], index: 19, kind: output, shape index: {}]
  %s20 = sld [smem:[#allocation0]]
  $region86: #{bert_qa_forward.1} parent=0
    _
  %s22 = ssub.s32 1, %s20
  %s23 = scalar_select 0, %s22, %s20
  // Predicated region
  $region2: #{bert_qa_forward.1} parent=0 // pred_check
    _
  $region3: #{bert_qa_forward.1} parent=0 // pred_check_branch
    %25 = sbr.rel (0) target = $region5
  $region4: #{bert_qa_forward.1} parent=0 // pred_region
    _
  $region5: #{bert_qa_forward.1} parent=0 // pred_fallthru
    _
  // Predicated region
  $region6: #{bert_qa_forward.1} parent=0 // pred_check
    _
  $region7: #{bert_qa_forward.1} parent=0 // pred_check_branch
    %27 = sbr.rel (0) target = $region9
  $region8: #{bert_qa_forward.1} parent=0 // pred_region
    _
  $region9: #{bert_qa_forward.1} parent=0 // pred_fallthru
    _
  // Predicated region
  $region10: #{bert_qa_forward.1} parent=0 // pred_check
    _
  $region11: #{bert_qa_forward.1} parent=0 // pred_check_branch
    %29 = sbr.rel (0) target = $region13
  $region12: #{bert_qa_forward.1} parent=0 // pred_region
    _
  $region13: #{bert_qa_forward.1} parent=0 // pred_fallthru
    _
  // Predicated region
  $region14: #{bert_qa_forward.1} parent=0 // pred_check
    _
  $region15: #{bert_qa_forward.1} parent=0 // pred_check_branch
    %31 = sbr.rel (0) target = $region17
  $region16: #{bert_qa_forward.1} parent=0 // pred_region
    _
  $region17: #{bert_qa_forward.1} parent=0 // pred_fallthru
    _
  // Predicated region
  $region18: #{bert_qa_forward.1} parent=0 // pred_check
    _
  $region19: #{bert_qa_forward.1} parent=0 // pred_check_branch
    %33 = sbr.rel (0) target = $region21
  $region20: #{bert_qa_forward.1} parent=0 // pred_region
    _
  $region21: #{bert_qa_forward.1} parent=0 // pred_fallthru
    _
  // Predicated region
  $region22: #{bert_qa_forward.1} parent=0 // pred_check
    _
  $region23: #{bert_qa_forward.1} parent=0 // pred_check_branch
    %35 = sbr.rel (0) target = $region25
  $region24: #{bert_qa_forward.1} parent=0 // pred_region
    _
  $region25: #{bert_qa_forward.1} parent=0 // pred_fallthru
    _
  // Predicated region
  $region26: #{bert_qa_forward.1} parent=0 // pred_check
    _
  $region27: #{bert_qa_forward.1} parent=0 // pred_check_branch
    %37 = sbr.rel (0) target = $region29
  $region28: #{bert_qa_forward.1} parent=0 // pred_region
    _
  $region29: #{bert_qa_forward.1} parent=0 // pred_fallthru
    _
  // Predicated region
  $region30: #{bert_qa_forward.1} parent=0 // pred_check
    _
  $region31: #{bert_qa_forward.1} parent=0 // pred_check_branch
    %39 = sbr.rel (0) target = $region33
  $region32: #{bert_qa_forward.1} parent=0 // pred_region
    _
  $region33: #{bert_qa_forward.1} parent=0 // pred_fallthru
    _
  // Predicated region
  $region34: #{bert_qa_forward.1} parent=0 // pred_check
    _
  $region35: #{bert_qa_forward.1} parent=0 // pred_check_branch
    %41 = sbr.rel (0) target = $region37
  $region36: #{bert_qa_forward.1} parent=0 // pred_region
    _
  $region37: #{bert_qa_forward.1} parent=0 // pred_fallthru
    _
  // Predicated region
  $region38: #{bert_qa_forward.1} parent=0 // pred_check
    _
  $region39: #{bert_qa_forward.1} parent=0 // pred_check_branch
    %43 = sbr.rel (0) target = $region41
  $region40: #{bert_qa_forward.1} parent=0 // pred_region
    _
  $region41: #{bert_qa_forward.1} parent=0 // pred_fallthru
    _
  // Predicated region
  $region42: #{bert_qa_forward.1} parent=0 // pred_check
    _
  $region43: #{bert_qa_forward.1} parent=0 // pred_check_branch
    %45 = sbr.rel (0) target = $region45
  $region44: #{bert_qa_forward.1} parent=0 // pred_region
    _
  $region45: #{bert_qa_forward.1} parent=0 // pred_fallthru
    _
  // Predicated region
  $region46: #{bert_qa_forward.1} parent=0 // pred_check
    _
  $region47: #{bert_qa_forward.1} parent=0 // pred_check_branch
    %47 = sbr.rel (0) target = $region49
  $region48: #{bert_qa_forward.1} parent=0 // pred_region
    _
  $region49: #{bert_qa_forward.1} parent=0 // pred_fallthru
    _
  // Predicated region
  $region50: #{bert_qa_forward.1} parent=0 // pred_check
    _
  $region51: #{bert_qa_forward.1} parent=0 // pred_check_branch
    %49 = sbr.rel (0) target = $region53
  $region52: #{bert_qa_forward.1} parent=0 // pred_region
    _
  $region53: #{bert_qa_forward.1} parent=0 // pred_fallthru
    _
  // Predicated region
  $region54: #{bert_qa_forward.1} parent=0 // pred_check
    _
  $region55: #{bert_qa_forward.1} parent=0 // pred_check_branch
    %51 = sbr.rel (0) target = $region57
  $region56: #{bert_qa_forward.1} parent=0 // pred_region
    _
  $region57: #{bert_qa_forward.1} parent=0 // pred_fallthru
    _
  // Predicated region
  $region58: #{bert_qa_forward.1} parent=0 // pred_check
    _
  $region59: #{bert_qa_forward.1} parent=0 // pred_check_branch
    %53 = sbr.rel (0) target = $region61
  $region60: #{bert_qa_forward.1} parent=0 // pred_region
    _
  $region61: #{bert_qa_forward.1} parent=0 // pred_fallthru
    _
  // Predicated region
  $region62: #{bert_qa_forward.1} parent=0 // pred_check
    _
  $region63: #{bert_qa_forward.1} parent=0 // pred_check_branch
    %55 = sbr.rel (0) target = $region65
  $region64: #{bert_qa_forward.1} parent=0 // pred_region
    _
  $region65: #{bert_qa_forward.1} parent=0 // pred_fallthru
    _
  // Predicated region
  $region66: #{bert_qa_forward.1} parent=0 // pred_check
    _
  $region67: #{bert_qa_forward.1} parent=0 // pred_check_branch
    %57 = sbr.rel (0) target = $region69
  $region68: #{bert_qa_forward.1} parent=0 // pred_region
    _
  $region69: #{bert_qa_forward.1} parent=0 // pred_fallthru
    _
  // Predicated region
  $region70: #{bert_qa_forward.1} parent=0 // pred_check
    _
  $region71: #{bert_qa_forward.1} parent=0 // pred_check_branch
    %59 = sbr.rel (0) target = $region73
  $region72: #{bert_qa_forward.1} parent=0 // pred_region
    _
  $region73: #{bert_qa_forward.1} parent=0 // pred_fallthru
    _
  // Predicated region
  $region74: #{bert_qa_forward.1} parent=0 // pred_check
    _
  $region75: #{bert_qa_forward.1} parent=0 // pred_check_branch
    %61 = sbr.rel (0) target = $region77
  $region76: #{bert_qa_forward.1} parent=0 // pred_region
    _
  $region77: #{bert_qa_forward.1} parent=0 // pred_fallthru
    _
  %v62 = vld [vmem:[%s1] sm:$0x3]
  %v63 = vsub.f32 1.0, %v62
  %v64 = vmul.f32 %v63, -10000.0
  %v65 = vld [vmem:[%s0] sm:$0xff]
  %v66 = vld [vmem:[%s0 + $0x8] sm:$0xff]
  %v67 = vld [vmem:[%s3] sm:$0x1]
  %v68 = vld [vmem:[%s4] sm:$0x1]
  %vm69 = vcmask 261120
  %v70 = vsel %vm69, %v65, 0.0
  %71 = vadd.xlane.f32.xlu0 %v70
  %v72 = vpop.xlane.xlu0 %71
  %v73 = vsel %vm69, %v66, 0.0
  %74 = vadd.xlane.f32.xlu0 %v73
  %v75 = vpop.xlane.xlu0 %74
  %v76 = vrcp.pop 32.0
  %v77 = vmul.f32 %v72, %v76
  %v78 = vmul.f32 %v75, %v76
  %v79 = vsub.f32 %v65, %v77
  %v80 = vsub.f32 %v66, %v78
  %v81 = vmul.f32 %v79, %v79
  %v82 = vmul.f32 %v80, %v80
  %v83 = vsel %vm69, %v81, 0.0
  %84 = vadd.xlane.f32.xlu0 %v83
  %v85 = vpop.xlane.xlu0 %84
  %v86 = vsel %vm69, %v82, 0.0
  %87 = vadd.xlane.f32.xlu0 %v86
  %v88 = vpop.xlane.xlu0 %87
  %v89 = vmul.f32 %v85, %v76
  %v90 = vmul.f32 %v88, %v76
  %v91 = vadd.f32 %v89, 1e-12
  %v92 = vadd.f32 %v90, 1e-12
  %v93 = vrsqrt.pop %v91
  %v94 = vrsqrt.pop %v92
  %v95 = vmul.f32 %v79, %v93
  %v96 = vmul.f32 %v80, %v94
  %v98 = vlaneseq
  %v99 = vshrl.u32 %v98, 7
  %v100 = vsub.s32 0, %v99
  %v101 = vrot.slane %v67, %v100
  %v103 = vmul.f32 %v95, %v101
  %v104 = vmul.f32 %v96, %v101
  %v106 = vlaneseq
  %v107 = vshrl.u32 %v106, 7
  %v108 = vsub.s32 0, %v107
  %v109 = vrot.slane %v68, %v108
  %v111 = vadd.f32 %v103, %v109
  %v112 = vadd.f32 %v104, %v109
  %v113 = vld [vmem:[%s5] sm:$0xff]
  %v114 = vld [vmem:[%s5 + $0x8] sm:$0xff]
  %v115 = vld [vmem:[%s5 + $0x10] sm:$0xff]
  %v116 = vld [vmem:[%s5 + $0x18] sm:$0xff]
  %v117 = vld [vmem:[%s6] sm:$0x1]
  %v119 = vlaneseq
  %v120 = vshrl.u32 %v119, 7
  %v121 = vsub.s32 0, %v120
  %v122 = vrot.slane %v117, %v121
  %v125 = vsel %vm69, %v111, 0
  %v128 = vsel %vm69, %v112, 0
  %130 = vmatprep.subr.mxu0 0.0
  %131 = vmatpush1.msra.mxu0 0.0
  %132 = vmatprep.subr.mxu0 0.0
  %133 = vmatpush1.msra.mxu0 0.0
  %134 = vmatprep.subr.mxu0 0.0
  %135 = vmatpush1.msra.mxu0 0.0
  %136 = vmatprep.subr.mxu0 0.0
  %137 = vmatpush1.msra.mxu0 0.0
  %138 = vmatprep.subr.mxu0 0.0
  %139 = vmatpush1.msra.mxu0 0.0
  %140 = vmatprep.subr.mxu0 0.0
  %141 = vmatpush1.msra.mxu0 0.0
  %142 = vmatprep.subr.mxu0 0.0
  %143 = vmatpush1.msra.mxu0 0.0
  %144 = vmatprep.subr.mxu0 0.0
  %145 = vmatpush1.msra.mxu0 0.0
  %146 = vmatprep.subr.mxu0 0.0
  %147 = vmatpush1.msra.mxu0 0.0
  %148 = vmatprep.subr.mxu0 0.0
  %149 = vmatpush1.msra.mxu0 0.0
  %150 = vmatprep.subr.mxu0 0.0
  %151 = vmatpush1.msra.mxu0 0.0
  %152 = vmatprep.subr.mxu0 0.0
  %153 = vmatpush1.msra.mxu0 0.0
  %154 = vmatprep.subr.mxu0 0.0
  %155 = vmatpush1.msra.mxu0 %v116
  %156 = vmatprep.subr.mxu0 0.0
  %157 = vmatpush1.msra.mxu0 %v115
  %158 = vmatprep.subr.mxu0 0.0
  %159 = vmatpush1.msra.mxu0 %v114
  %160 = vmatprep.subr.mxu0 0.0
  %161 = vmatpush1.msra.mxu0 %v113
  %162 = vmatprep.subr.mxu0 0.0
  %163 = vmatpush2.msra.mxu0 0.0
  %164 = vmatprep.subr.mxu0 0.0
  %165 = vmatpush2.msra.mxu0 0.0
  %166 = vmatprep.subr.mxu0 0.0
  %167 = vmatpush2.msra.mxu0 0.0
  %168 = vmatprep.subr.mxu0 0.0
  %169 = vmatpush2.msra.mxu0 0.0
  %170 = vmatprep.subr.mxu0 0.0
  %171 = vmatpush2.msra.mxu0 0.0
  %172 = vmatprep.subr.mxu0 0.0
  %173 = vmatpush2.msra.mxu0 0.0
  %174 = vmatprep.subr.mxu0 0.0
  %175 = vmatpush2.msra.mxu0 0.0
  %176 = vmatprep.subr.mxu0 0.0
  %177 = vmatpush2.msra.mxu0 0.0
  %178 = vmatprep.subr.mxu0 0.0
  %179 = vmatpush2.msra.mxu0 0.0
  %180 = vmatprep.subr.mxu0 0.0
  %181 = vmatpush2.msra.mxu0 0.0
  %182 = vmatprep.subr.mxu0 0.0
  %183 = vmatpush2.msra.mxu0 0.0
  %184 = vmatprep.subr.mxu0 0.0
  %185 = vmatpush2.msra.mxu0 0.0
  %186 = vmatprep.subr.mxu0 0.0
  %187 = vmatpush2.msra.mxu0 0.0
  %188 = vmatprep.subr.mxu0 0.0
  %189 = vmatpush2.msra.mxu0 0.0
  %190 = vmatprep.subr.mxu0 0.0
  %191 = vmatpush2.msra.mxu0 0.0
  %192 = vmatprep.subr.mxu0 0.0
  %193 = vmatpush2.msra.mxu0 0.0
  %194 = vmatprep.mubr.f32.mxu0 0.0
  %195 = vmatmul.mubr.f32.gmra.mxu0 %v125
  %v196 = vpop.f32.mrf.mxu0
  %v197 = vadd.f32 %v122, %v196
  %v198 = vpop.f32.mrf.mxu0
  %199 = vmatprep.mubr.f32.mxu0 0.0
  %200 = vmatmul.mubr.f32.gmra.mxu0 %v128
  %v201 = vpop.f32.mrf.mxu0
  %v202 = vadd.f32 %v122, %v201
  %v203 = vpop.f32.mrf.mxu0
  %204 = vdwg.mxu0
  %206 = vrot.lane.b32.xlu0 %v197, 96
  %v207 = vpop.permute.xlu0 %206
  %vm208 = vcmask 64512
  %v209 = vsel %vm208, %v197, 0
  %v211 = vsel %vm208, %v207, 0
  %213 = vmatprep.subr.mxu0 0.0
  %214 = vmatpush1.xpose.msra.mxu0 0.0
  %215 = vmatprep.subr.mxu0 0.0
  %216 = vmatpush1.xpose.msra.mxu0 0.0
  %217 = vmatprep.subr.mxu0 0.0
  %218 = vmatpush1.xpose.msra.mxu0 0.0
  %219 = vmatprep.subr.mxu0 0.0
  %220 = vmatpush1.xpose.msra.mxu0 0.0
  %221 = vmatprep.subr.mxu0 0.0
  %222 = vmatpush1.xpose.msra.mxu0 0.0
  %223 = vmatprep.subr.mxu0 0.0
  %224 = vmatpush1.xpose.msra.mxu0 0.0
  %225 = vmatprep.subr.mxu0 0.0
  %226 = vmatpush1.xpose.msra.mxu0 0.0
  %227 = vmatprep.subr.mxu0 0.0
  %228 = vmatpush1.xpose.msra.mxu0 0.0
  %229 = vmatprep.subr.mxu0 0.0
  %230 = vmatpush1.xpose.msra.mxu0 0.0
  %231 = vmatprep.subr.mxu0 0.0
  %232 = vmatpush1.xpose.msra.mxu0 0.0
  %233 = vmatprep.subr.mxu0 0.0
  %234 = vmatpush1.xpose.msra.mxu0 0.0
  %235 = vmatprep.subr.mxu0 0.0
  %236 = vmatpush1.xpose.msra.mxu0 0.0
  %237 = vmatprep.subr.mxu0 0.0
  %238 = vmatpush1.xpose.msra.mxu0 0.0
  %239 = vmatprep.subr.mxu0 0.0
  %240 = vmatpush1.xpose.msra.mxu0 0.0
  %241 = vmatprep.subr.mxu0 0.0
  %242 = vmatpush1.xpose.msra.mxu0 0.0
  %243 = vmatprep.subr.mxu0 0.0
  %244 = vmatpush1.xpose.msra.mxu0 %v211
  %245 = vmatprep.subr.mxu0 0.0
  %246 = vmatpush2.xpose.msra.mxu0 0.0
  %247 = vmatprep.subr.mxu0 0.0
  %248 = vmatpush2.xpose.msra.mxu0 0.0
  %249 = vmatprep.subr.mxu0 0.0
  %250 = vmatpush2.xpose.msra.mxu0 0.0
  %251 = vmatprep.subr.mxu0 0.0
  %252 = vmatpush2.xpose.msra.mxu0 0.0
  %253 = vmatprep.subr.mxu0 0.0
  %254 = vmatpush2.xpose.msra.mxu0 0.0
  %255 = vmatprep.subr.mxu0 0.0
  %256 = vmatpush2.xpose.msra.mxu0 0.0
  %257 = vmatprep.subr.mxu0 0.0
  %258 = vmatpush2.xpose.msra.mxu0 0.0
  %259 = vmatprep.subr.mxu0 0.0
  %260 = vmatpush2.xpose.msra.mxu0 0.0
  %261 = vmatprep.subr.mxu0 0.0
  %262 = vmatpush2.xpose.msra.mxu0 0.0
  %263 = vmatprep.subr.mxu0 0.0
  %264 = vmatpush2.xpose.msra.mxu0 0.0
  %265 = vmatprep.subr.mxu0 0.0
  %266 = vmatpush2.xpose.msra.mxu0 0.0
  %267 = vmatprep.subr.mxu0 0.0
  %268 = vmatpush2.xpose.msra.mxu0 0.0
  %269 = vmatprep.subr.mxu0 0.0
  %270 = vmatpush2.xpose.msra.mxu0 0.0
  %271 = vmatprep.subr.mxu0 0.0
  %272 = vmatpush2.xpose.msra.mxu0 0.0
  %273 = vmatprep.subr.mxu0 0.0
  %274 = vmatpush2.xpose.msra.mxu0 0.0
  %275 = vmatprep.subr.mxu0 0.0
  %276 = vmatpush2.xpose.msra.mxu0 0.0
  %277 = vmatprep.mubr.f32.mxu0 0.0
  %278 = vmatmul.mubr.f32.gmra.mxu0 %v209
  %v279 = vpop.f32.mrf.mxu0
  %v280 = vadd.f32 0.0, %v279
  %v281 = vpop.f32.mrf.mxu0
  %282 = vdwg.mxu0
  %v283 = vmul.f32 %v280, 0.35355338
  %v284 = vlaneseq
  %v285 = vshrl.u32 %v284, 7
  %v286 = vsub.s32 0, %v285
  %v287 = vrot.slane %v64, %v286
  %v288 = vadd.f32 %v283, %v287
  %v289 = vsel %vm208, %v288, -inf
  %290 = vmax.xlane.f32.xlu0 %v289
  %v291 = vpop.xlane.xlu0 %290
  %v292 = vsub.f32 %v288, %v291
  %v293 = vmul.f32 %v292, 1.442695
  %v294 = vpow.pop %v293
  %v295 = vsel %vm208, %v294, 0.0
  %296 = vadd.xlane.f32.xlu0 %v295
  %v297 = vpop.xlane.xlu0 %296
  %v298 = vrcp.pop %v297
  %v299 = vmul.f32 %v294, %v298
  %300 = vrot.lane.b32.xlu0 %v197, 64
  %v301 = vpop.permute.xlu0 %300
  %v304 = vsel %vm208, %v299, 0
  %306 = vmatprep.subr.mxu0 0.0
  %307 = vmatpush1.msra.mxu0 0.0
  %308 = vmatprep.subr.mxu0 0.0
  %309 = vmatpush1.msra.mxu0 0.0
  %310 = vmatprep.subr.mxu0 0.0
  %311 = vmatpush1.msra.mxu0 0.0
  %312 = vmatprep.subr.mxu0 0.0
  %313 = vmatpush1.msra.mxu0 0.0
  %314 = vmatprep.subr.mxu0 0.0
  %315 = vmatpush1.msra.mxu0 0.0
  %316 = vmatprep.subr.mxu0 0.0
  %317 = vmatpush1.msra.mxu0 0.0
  %318 = vmatprep.subr.mxu0 0.0
  %319 = vmatpush1.msra.mxu0 0.0
  %320 = vmatprep.subr.mxu0 0.0
  %321 = vmatpush1.msra.mxu0 0.0
  %322 = vmatprep.subr.mxu0 0.0
  %323 = vmatpush1.msra.mxu0 0.0
  %324 = vmatprep.subr.mxu0 0.0
  %325 = vmatpush1.msra.mxu0 0.0
  %326 = vmatprep.subr.mxu0 0.0
  %327 = vmatpush1.msra.mxu0 0.0
  %328 = vmatprep.subr.mxu0 0.0
  %329 = vmatpush1.msra.mxu0 0.0
  %330 = vmatprep.subr.mxu0 0.0
  %331 = vmatpush1.msra.mxu0 0.0
  %332 = vmatprep.subr.mxu0 0.0
  %333 = vmatpush1.msra.mxu0 0.0
  %334 = vmatprep.subr.mxu0 0.0
  %335 = vmatpush1.msra.mxu0 0.0
  %336 = vmatprep.subr.mxu0 0.0
  %337 = vmatpush1.msra.mxu0 %v301
  %338 = vmatprep.subr.mxu0 0.0
  %339 = vmatpush2.msra.mxu0 0.0
  %340 = vmatprep.subr.mxu0 0.0
  %341 = vmatpush2.msra.mxu0 0.0
  %342 = vmatprep.subr.mxu0 0.0
  %343 = vmatpush2.msra.mxu0 0.0
  %344 = vmatprep.subr.mxu0 0.0
  %345 = vmatpush2.msra.mxu0 0.0
  %346 = vmatprep.subr.mxu0 0.0
  %347 = vmatpush2.msra.mxu0 0.0
  %348 = vmatprep.subr.mxu0 0.0
  %349 = vmatpush2.msra.mxu0 0.0
  %350 = vmatprep.subr.mxu0 0.0
  %351 = vmatpush2.msra.mxu0 0.0
  %352 = vmatprep.subr.mxu0 0.0
  %353 = vmatpush2.msra.mxu0 0.0
  %354 = vmatprep.subr.mxu0 0.0
  %355 = vmatpush2.msra.mxu0 0.0
  %356 = vmatprep.subr.mxu0 0.0
  %357 = vmatpush2.msra.mxu0 0.0
  %358 = vmatprep.subr.mxu0 0.0
  %359 = vmatpush2.msra.mxu0 0.0
  %360 = vmatprep.subr.mxu0 0.0
  %361 = vmatpush2.msra.mxu0 0.0
  %362 = vmatprep.subr.mxu0 0.0
  %363 = vmatpush2.msra.mxu0 0.0
  %364 = vmatprep.subr.mxu0 0.0
  %365 = vmatpush2.msra.mxu0 0.0
  %366 = vmatprep.subr.mxu0 0.0
  %367 = vmatpush2.msra.mxu0 0.0
  %368 = vmatprep.subr.mxu0 0.0
  %369 = vmatpush2.msra.mxu0 0.0
  %370 = vmatprep.mubr.f32.mxu0 0.0
  %371 = vmatmul.mubr.f32.gmra.mxu0 %v304
  %v372 = vpop.f32.mrf.mxu0
  %v373 = vadd.f32 0.0, %v372
  %v374 = vpop.f32.mrf.mxu0
  %375 = vdwg.mxu0
  %376 = vst.msk [vmem:[#allocation2] sm:$0xff] %vm208, %v373
  %377 = vrot.lane.b32.xlu0 %v197, 120
  %v378 = vpop.permute.xlu0 %377
  %379 = vrot.lane.b32.xlu0 %v197, 88
  %v380 = vpop.permute.xlu0 %379
  %v381 = vsel %vm208, %v378, 0
  %v383 = vsel %vm208, %v380, 0
  %385 = vmatprep.subr.mxu0 0.0
  %386 = vmatpush1.xpose.msra.mxu0 0.0
  %387 = vmatprep.subr.mxu0 0.0
  %388 = vmatpush1.xpose.msra.mxu0 0.0
  %389 = vmatprep.subr.mxu0 0.0
  %390 = vmatpush1.xpose.msra.mxu0 0.0
  %391 = vmatprep.subr.mxu0 0.0
  %392 = vmatpush1.xpose.msra.mxu0 0.0
  %393 = vmatprep.subr.mxu0 0.0
  %394 = vmatpush1.xpose.msra.mxu0 0.0
  %395 = vmatprep.subr.mxu0 0.0
  %396 = vmatpush1.xpose.msra.mxu0 0.0
  %397 = vmatprep.subr.mxu0 0.0
  %398 = vmatpush1.xpose.msra.mxu0 0.0
  %399 = vmatprep.subr.mxu0 0.0
  %400 = vmatpush1.xpose.msra.mxu0 0.0
  %401 = vmatprep.subr.mxu0 0.0
  %402 = vmatpush1.xpose.msra.mxu0 0.0
  %403 = vmatprep.subr.mxu0 0.0
  %404 = vmatpush1.xpose.msra.mxu0 0.0
  %405 = vmatprep.subr.mxu0 0.0
  %406 = vmatpush1.xpose.msra.mxu0 0.0
  %407 = vmatprep.subr.mxu0 0.0
  %408 = vmatpush1.xpose.msra.mxu0 0.0
  %409 = vmatprep.subr.mxu0 0.0
  %410 = vmatpush1.xpose.msra.mxu0 0.0
  %411 = vmatprep.subr.mxu0 0.0
  %412 = vmatpush1.xpose.msra.mxu0 0.0
  %413 = vmatprep.subr.mxu0 0.0
  %414 = vmatpush1.xpose.msra.mxu0 0.0
  %415 = vmatprep.subr.mxu0 0.0
  %416 = vmatpush1.xpose.msra.mxu0 %v383
  %417 = vmatprep.subr.mxu0 0.0
  %418 = vmatpush2.xpose.msra.mxu0 0.0
  %419 = vmatprep.subr.mxu0 0.0
  %420 = vmatpush2.xpose.msra.mxu0 0.0
  %421 = vmatprep.subr.mxu0 0.0
  %422 = vmatpush2.xpose.msra.mxu0 0.0
  %423 = vmatprep.subr.mxu0 0.0
  %424 = vmatpush2.xpose.msra.mxu0 0.0
  %425 = vmatprep.subr.mxu0 0.0
  %426 = vmatpush2.xpose.msra.mxu0 0.0
  %427 = vmatprep.subr.mxu0 0.0
  %428 = vmatpush2.xpose.msra.mxu0 0.0
  %429 = vmatprep.subr.mxu0 0.0
  %430 = vmatpush2.xpose.msra.mxu0 0.0
  %431 = vmatprep.subr.mxu0 0.0
  %432 = vmatpush2.xpose.msra.mxu0 0.0
  %433 = vmatprep.subr.mxu0 0.0
  %434 = vmatpush2.xpose.msra.mxu0 0.0
  %435 = vmatprep.subr.mxu0 0.0
  %436 = vmatpush2.xpose.msra.mxu0 0.0
  %437 = vmatprep.subr.mxu0 0.0
  %438 = vmatpush2.xpose.msra.mxu0 0.0
  %439 = vmatprep.subr.mxu0 0.0
  %440 = vmatpush2.xpose.msra.mxu0 0.0
  %441 = vmatprep.subr.mxu0 0.0
  %442 = vmatpush2.xpose.msra.mxu0 0.0
  %443 = vmatprep.subr.mxu0 0.0
  %444 = vmatpush2.xpose.msra.mxu0 0.0
  %445 = vmatprep.subr.mxu0 0.0
  %446 = vmatpush2.xpose.msra.mxu0 0.0
  %447 = vmatprep.subr.mxu0 0.0
  %448 = vmatpush2.xpose.msra.mxu0 0.0
  %449 = vmatprep.mubr.f32.mxu0 0.0
  %450 = vmatmul.mubr.f32.gmra.mxu0 %v381
  %v451 = vpop.f32.mrf.mxu0
  %v452 = vadd.f32 0.0, %v451
  %v453 = vpop.f32.mrf.mxu0
  %454 = vdwg.mxu0
  %v455 = vmul.f32 %v452, 0.35355338
  %v456 = vadd.f32 %v455, %v287
  %v457 = vsel %vm208, %v456, -inf
  %458 = vmax.xlane.f32.xlu0 %v457
  %v459 = vpop.xlane.xlu0 %458
  %v460 = vsub.f32 %v456, %v459
  %v461 = vmul.f32 %v460, 1.442695
  %v462 = vpow.pop %v461
  %v463 = vsel %vm208, %v462, 0.0
  %464 = vadd.xlane.f32.xlu0 %v463
  %v465 = vpop.xlane.xlu0 %464
  %v466 = vrcp.pop %v465
  %v467 = vmul.f32 %v462, %v466
  %468 = vrot.lane.b32.xlu0 %v197, 56
  %v469 = vpop.permute.xlu0 %468
  %v472 = vsel %vm208, %v467, 0
  %474 = vmatprep.subr.mxu0 0.0
  %475 = vmatpush1.msra.mxu0 0.0
  %476 = vmatprep.subr.mxu0 0.0
  %477 = vmatpush1.msra.mxu0 0.0
  %478 = vmatprep.subr.mxu0 0.0
  %479 = vmatpush1.msra.mxu0 0.0
  %480 = vmatprep.subr.mxu0 0.0
  %481 = vmatpush1.msra.mxu0 0.0
  %482 = vmatprep.subr.mxu0 0.0
  %483 = vmatpush1.msra.mxu0 0.0
  %484 = vmatprep.subr.mxu0 0.0
  %485 = vmatpush1.msra.mxu0 0.0
  %486 = vmatprep.subr.mxu0 0.0
  %487 = vmatpush1.msra.mxu0 0.0
  %488 = vmatprep.subr.mxu0 0.0
  %489 = vmatpush1.msra.mxu0 0.0
  %490 = vmatprep.subr.mxu0 0.0
  %491 = vmatpush1.msra.mxu0 0.0
  %492 = vmatprep.subr.mxu0 0.0
  %493 = vmatpush1.msra.mxu0 0.0
  %494 = vmatprep.subr.mxu0 0.0
  %495 = vmatpush1.msra.mxu0 0.0
  %496 = vmatprep.subr.mxu0 0.0
  %497 = vmatpush1.msra.mxu0 0.0
  %498 = vmatprep.subr.mxu0 0.0
  %499 = vmatpush1.msra.mxu0 0.0
  %500 = vmatprep.subr.mxu0 0.0
  %501 = vmatpush1.msra.mxu0 0.0
  %502 = vmatprep.subr.mxu0 0.0
  %503 = vmatpush1.msra.mxu0 0.0
  %504 = vmatprep.subr.mxu0 0.0
  %505 = vmatpush1.msra.mxu0 %v469
  %506 = vmatprep.subr.mxu0 0.0
  %507 = vmatpush2.msra.mxu0 0.0
  %508 = vmatprep.subr.mxu0 0.0
  %509 = vmatpush2.msra.mxu0 0.0
  %510 = vmatprep.subr.mxu0 0.0
  %511 = vmatpush2.msra.mxu0 0.0
  %512 = vmatprep.subr.mxu0 0.0
  %513 = vmatpush2.msra.mxu0 0.0
  %514 = vmatprep.subr.mxu0 0.0
  %515 = vmatpush2.msra.mxu0 0.0
  %516 = vmatprep.subr.mxu0 0.0
  %517 = vmatpush2.msra.mxu0 0.0
  %518 = vmatprep.subr.mxu0 0.0
  %519 = vmatpush2.msra.mxu0 0.0
  %520 = vmatprep.subr.mxu0 0.0
  %521 = vmatpush2.msra.mxu0 0.0
  %522 = vmatprep.subr.mxu0 0.0
  %523 = vmatpush2.msra.mxu0 0.0
  %524 = vmatprep.subr.mxu0 0.0
  %525 = vmatpush2.msra.mxu0 0.0
  %526 = vmatprep.subr.mxu0 0.0
  %527 = vmatpush2.msra.mxu0 0.0
  %528 = vmatprep.subr.mxu0 0.0
  %529 = vmatpush2.msra.mxu0 0.0
  %530 = vmatprep.subr.mxu0 0.0
  %531 = vmatpush2.msra.mxu0 0.0
  %532 = vmatprep.subr.mxu0 0.0
  %533 = vmatpush2.msra.mxu0 0.0
  %534 = vmatprep.subr.mxu0 0.0
  %535 = vmatpush2.msra.mxu0 0.0
  %536 = vmatprep.subr.mxu0 0.0
  %537 = vmatpush2.msra.mxu0 0.0
  %538 = vmatprep.mubr.f32.mxu0 0.0
  %539 = vmatmul.mubr.f32.gmra.mxu0 %v472
  %v540 = vpop.f32.mrf.mxu0
  %v541 = vadd.f32 0.0, %v540
  %v542 = vpop.f32.mrf.mxu0
  %543 = vdwg.mxu0
  %545 = vrot.lane.b32.xlu0 %v541, 8
  %v546 = vpop.permute.xlu0 %545
  %vm548 = vcmask 130112
  %549 = vst.msk [vmem:[#allocation2] sm:$0xff] %vm548, %v546
  %550 = vrot.lane.b32.xlu0 %v197, 112
  %v551 = vpop.permute.xlu0 %550
  %552 = vrot.lane.b32.xlu0 %v197, 80
  %v553 = vpop.permute.xlu0 %552
  %v554 = vsel %vm208, %v551, 0
  %v556 = vsel %vm208, %v553, 0
  %558 = vmatprep.subr.mxu0 0.0
  %559 = vmatpush1.xpose.msra.mxu0 0.0
  %560 = vmatprep.subr.mxu0 0.0
  %561 = vmatpush1.xpose.msra.mxu0 0.0
  %562 = vmatprep.subr.mxu0 0.0
  %563 = vmatpush1.xpose.msra.mxu0 0.0
  %564 = vmatprep.subr.mxu0 0.0
  %565 = vmatpush1.xpose.msra.mxu0 0.0
  %566 = vmatprep.subr.mxu0 0.0
  %567 = vmatpush1.xpose.msra.mxu0 0.0
  %568 = vmatprep.subr.mxu0 0.0
  %569 = vmatpush1.xpose.msra.mxu0 0.0
  %570 = vmatprep.subr.mxu0 0.0
  %571 = vmatpush1.xpose.msra.mxu0 0.0
  %572 = vmatprep.subr.mxu0 0.0
  %573 = vmatpush1.xpose.msra.mxu0 0.0
  %574 = vmatprep.subr.mxu0 0.0
  %575 = vmatpush1.xpose.msra.mxu0 0.0
  %576 = vmatprep.subr.mxu0 0.0
  %577 = vmatpush1.xpose.msra.mxu0 0.0
  %578 = vmatprep.subr.mxu0 0.0
  %579 = vmatpush1.xpose.msra.mxu0 0.0
  %580 = vmatprep.subr.mxu0 0.0
  %581 = vmatpush1.xpose.msra.mxu0 0.0
  %582 = vmatprep.subr.mxu0 0.0
  %583 = vmatpush1.xpose.msra.mxu0 0.0
  %584 = vmatprep.subr.mxu0 0.0
  %585 = vmatpush1.xpose.msra.mxu0 0.0
  %586 = vmatprep.subr.mxu0 0.0
  %587 = vmatpush1.xpose.msra.mxu0 0.0
  %588 = vmatprep.subr.mxu0 0.0
  %589 = vmatpush1.xpose.msra.mxu0 %v556
  %590 = vmatprep.subr.mxu0 0.0
  %591 = vmatpush2.xpose.msra.mxu0 0.0
  %592 = vmatprep.subr.mxu0 0.0
  %593 = vmatpush2.xpose.msra.mxu0 0.0
  %594 = vmatprep.subr.mxu0 0.0
  %595 = vmatpush2.xpose.msra.mxu0 0.0
  %596 = vmatprep.subr.mxu0 0.0
  %597 = vmatpush2.xpose.msra.mxu0 0.0
  %598 = vmatprep.subr.mxu0 0.0
  %599 = vmatpush2.xpose.msra.mxu0 0.0
  %600 = vmatprep.subr.mxu0 0.0
  %601 = vmatpush2.xpose.msra.mxu0 0.0
  %602 = vmatprep.subr.mxu0 0.0
  %603 = vmatpush2.xpose.msra.mxu0 0.0
  %604 = vmatprep.subr.mxu0 0.0
  %605 = vmatpush2.xpose.msra.mxu0 0.0
  %606 = vmatprep.subr.mxu0 0.0
  %607 = vmatpush2.xpose.msra.mxu0 0.0
  %608 = vmatprep.subr.mxu0 0.0
  %609 = vmatpush2.xpose.msra.mxu0 0.0
  %610 = vmatprep.subr.mxu0 0.0
  %611 = vmatpush2.xpose.msra.mxu0 0.0
  %612 = vmatprep.subr.mxu0 0.0
  %613 = vmatpush2.xpose.msra.mxu0 0.0
  %614 = vmatprep.subr.mxu0 0.0
  %615 = vmatpush2.xpose.msra.mxu0 0.0
  %616 = vmatprep.subr.mxu0 0.0
  %617 = vmatpush2.xpose.msra.mxu0 0.0
  %618 = vmatprep.subr.mxu0 0.0
  %619 = vmatpush2.xpose.msra.mxu0 0.0
  %620 = vmatprep.subr.mxu0 0.0
  %621 = vmatpush2.xpose.msra.mxu0 0.0
  %622 = vmatprep.mubr.f32.mxu0 0.0
  %623 = vmatmul.mubr.f32.gmra.mxu0 %v554
  %v624 = vpop.f32.mrf.mxu0
  %v625 = vadd.f32 0.0, %v624
  %v626 = vpop.f32.mrf.mxu0
  %627 = vdwg.mxu0
  %v628 = vmul.f32 %v625, 0.35355338
  %v629 = vadd.f32 %v628, %v287
  %v630 = vsel %vm208, %v629, -inf
  %631 = vmax.xlane.f32.xlu0 %v630
  %v632 = vpop.xlane.xlu0 %631
  %v633 = vsub.f32 %v629, %v632
  %v634 = vmul.f32 %v633, 1.442695
  %v635 = vpow.pop %v634
  %v636 = vsel %vm208, %v635, 0.0
  %637 = vadd.xlane.f32.xlu0 %v636
  %v638 = vpop.xlane.xlu0 %637
  %v639 = vrcp.pop %v638
  %v640 = vmul.f32 %v635, %v639
  %641 = vrot.lane.b32.xlu0 %v197, 48
  %v642 = vpop.permute.xlu0 %641
  %v645 = vsel %vm208, %v640, 0
  %647 = vmatprep.subr.mxu0 0.0
  %648 = vmatpush1.msra.mxu0 0.0
  %649 = vmatprep.subr.mxu0 0.0
  %650 = vmatpush1.msra.mxu0 0.0
  %651 = vmatprep.subr.mxu0 0.0
  %652 = vmatpush1.msra.mxu0 0.0
  %653 = vmatprep.subr.mxu0 0.0
  %654 = vmatpush1.msra.mxu0 0.0
  %655 = vmatprep.subr.mxu0 0.0
  %656 = vmatpush1.msra.mxu0 0.0
  %657 = vmatprep.subr.mxu0 0.0
  %658 = vmatpush1.msra.mxu0 0.0
  %659 = vmatprep.subr.mxu0 0.0
  %660 = vmatpush1.msra.mxu0 0.0
  %661 = vmatprep.subr.mxu0 0.0
  %662 = vmatpush1.msra.mxu0 0.0
  %663 = vmatprep.subr.mxu0 0.0
  %664 = vmatpush1.msra.mxu0 0.0
  %665 = vmatprep.subr.mxu0 0.0
  %666 = vmatpush1.msra.mxu0 0.0
  %667 = vmatprep.subr.mxu0 0.0
  %668 = vmatpush1.msra.mxu0 0.0
  %669 = vmatprep.subr.mxu0 0.0
  %670 = vmatpush1.msra.mxu0 0.0
  %671 = vmatprep.subr.mxu0 0.0
  %672 = vmatpush1.msra.mxu0 0.0
  %673 = vmatprep.subr.mxu0 0.0
  %674 = vmatpush1.msra.mxu0 0.0
  %675 = vmatprep.subr.mxu0 0.0
  %676 = vmatpush1.msra.mxu0 0.0
  %677 = vmatprep.subr.mxu0 0.0
  %678 = vmatpush1.msra.mxu0 %v642
  %679 = vmatprep.subr.mxu0 0.0
  %680 = vmatpush2.msra.mxu0 0.0
  %681 = vmatprep.subr.mxu0 0.0
  %682 = vmatpush2.msra.mxu0 0.0
  %683 = vmatprep.subr.mxu0 0.0
  %684 = vmatpush2.msra.mxu0 0.0
  %685 = vmatprep.subr.mxu0 0.0
  %686 = vmatpush2.msra.mxu0 0.0
  %687 = vmatprep.subr.mxu0 0.0
  %688 = vmatpush2.msra.mxu0 0.0
  %689 = vmatprep.subr.mxu0 0.0
  %690 = vmatpush2.msra.mxu0 0.0
  %691 = vmatprep.subr.mxu0 0.0
  %692 = vmatpush2.msra.mxu0 0.0
  %693 = vmatprep.subr.mxu0 0.0
  %694 = vmatpush2.msra.mxu0 0.0
  %695 = vmatprep.subr.mxu0 0.0
  %696 = vmatpush2.msra.mxu0 0.0
  %697 = vmatprep.subr.mxu0 0.0
  %698 = vmatpush2.msra.mxu0 0.0
  %699 = vmatprep.subr.mxu0 0.0
  %700 = vmatpush2.msra.mxu0 0.0
  %701 = vmatprep.subr.mxu0 0.0
  %702 = vmatpush2.msra.mxu0 0.0
  %703 = vmatprep.subr.mxu0 0.0
  %704 = vmatpush2.msra.mxu0 0.0
  %705 = vmatprep.subr.mxu0 0.0
  %706 = vmatpush2.msra.mxu0 0.0
  %707 = vmatprep.subr.mxu0 0.0
  %708 = vmatpush2.msra.mxu0 0.0
  %709 = vmatprep.subr.mxu0 0.0
  %710 = vmatpush2.msra.mxu0 0.0
  %711 = vmatprep.mubr.f32.mxu0 0.0
  %712 = vmatmul.mubr.f32.gmra.mxu0 %v645
  %v713 = vpop.f32.mrf.mxu0
  %v714 = vadd.f32 0.0, %v713
  %v715 = vpop.f32.mrf.mxu0
  %716 = vdwg.mxu0
  %718 = vrot.lane.b32.xlu0 %v714, 16
  %v719 = vpop.permute.xlu0 %718
  %vm721 = vcmask 195712
  %722 = vst.msk [vmem:[#allocation2] sm:$0xff] %vm721, %v719
  %723 = vrot.lane.b32.xlu0 %v197, 104
  %v724 = vpop.permute.xlu0 %723
  %725 = vrot.lane.b32.xlu0 %v197, 72
  %v726 = vpop.permute.xlu0 %725
  %v727 = vsel %vm208, %v724, 0
  %v729 = vsel %vm208, %v726, 0
  %731 = vmatprep.subr.mxu0 0.0
  %732 = vmatpush1.xpose.msra.mxu0 0.0
  %733 = vmatprep.subr.mxu0 0.0
  %734 = vmatpush1.xpose.msra.mxu0 0.0
  %735 = vmatprep.subr.mxu0 0.0
  %736 = vmatpush1.xpose.msra.mxu0 0.0
  %737 = vmatprep.subr.mxu0 0.0
  %738 = vmatpush1.xpose.msra.mxu0 0.0
  %739 = vmatprep.subr.mxu0 0.0
  %740 = vmatpush1.xpose.msra.mxu0 0.0
  %741 = vmatprep.subr.mxu0 0.0
  %742 = vmatpush1.xpose.msra.mxu0 0.0
  %743 = vmatprep.subr.mxu0 0.0
  %744 = vmatpush1.xpose.msra.mxu0 0.0
  %745 = vmatprep.subr.mxu0 0.0
  %746 = vmatpush1.xpose.msra.mxu0 0.0
  %747 = vmatprep.subr.mxu0 0.0
  %748 = vmatpush1.xpose.msra.mxu0 0.0
  %749 = vmatprep.subr.mxu0 0.0
  %750 = vmatpush1.xpose.msra.mxu0 0.0
  %751 = vmatprep.subr.mxu0 0.0
  %752 = vmatpush1.xpose.msra.mxu0 0.0
  %753 = vmatprep.subr.mxu0 0.0
  %754 = vmatpush1.xpose.msra.mxu0 0.0
  %755 = vmatprep.subr.mxu0 0.0
  %756 = vmatpush1.xpose.msra.mxu0 0.0
  %757 = vmatprep.subr.mxu0 0.0
  %758 = vmatpush1.xpose.msra.mxu0 0.0
  %759 = vmatprep.subr.mxu0 0.0
  %760 = vmatpush1.xpose.msra.mxu0 0.0
  %761 = vmatprep.subr.mxu0 0.0
  %762 = vmatpush1.xpose.msra.mxu0 %v729
  %763 = vmatprep.subr.mxu0 0.0
  %764 = vmatpush2.xpose.msra.mxu0 0.0
  %765 = vmatprep.subr.mxu0 0.0
  %766 = vmatpush2.xpose.msra.mxu0 0.0
  %767 = vmatprep.subr.mxu0 0.0
  %768 = vmatpush2.xpose.msra.mxu0 0.0
  %769 = vmatprep.subr.mxu0 0.0
  %770 = vmatpush2.xpose.msra.mxu0 0.0
  %771 = vmatprep.subr.mxu0 0.0
  %772 = vmatpush2.xpose.msra.mxu0 0.0
  %773 = vmatprep.subr.mxu0 0.0
  %774 = vmatpush2.xpose.msra.mxu0 0.0
  %775 = vmatprep.subr.mxu0 0.0
  %776 = vmatpush2.xpose.msra.mxu0 0.0
  %777 = vmatprep.subr.mxu0 0.0
  %778 = vmatpush2.xpose.msra.mxu0 0.0
  %779 = vmatprep.subr.mxu0 0.0
  %780 = vmatpush2.xpose.msra.mxu0 0.0
  %781 = vmatprep.subr.mxu0 0.0
  %782 = vmatpush2.xpose.msra.mxu0 0.0
  %783 = vmatprep.subr.mxu0 0.0
  %784 = vmatpush2.xpose.msra.mxu0 0.0
  %785 = vmatprep.subr.mxu0 0.0
  %786 = vmatpush2.xpose.msra.mxu0 0.0
  %787 = vmatprep.subr.mxu0 0.0
  %788 = vmatpush2.xpose.msra.mxu0 0.0
  %789 = vmatprep.subr.mxu0 0.0
  %790 = vmatpush2.xpose.msra.mxu0 0.0
  %791 = vmatprep.subr.mxu0 0.0
  %792 = vmatpush2.xpose.msra.mxu0 0.0
  %793 = vmatprep.subr.mxu0 0.0
  %794 = vmatpush2.xpose.msra.mxu0 0.0
  %795 = vmatprep.mubr.f32.mxu0 0.0
  %796 = vmatmul.mubr.f32.gmra.mxu0 %v727
  %v797 = vpop.f32.mrf.mxu0
  %v798 = vadd.f32 0.0, %v797
  %v799 = vpop.f32.mrf.mxu0
  %800 = vdwg.mxu0
  %v801 = vmul.f32 %v798, 0.35355338
  %v802 = vadd.f32 %v801, %v287
  %v803 = vsel %vm208, %v802, -inf
  %804 = vmax.xlane.f32.xlu0 %v803
  %v805 = vpop.xlane.xlu0 %804
  %v806 = vsub.f32 %v802, %v805
  %v807 = vmul.f32 %v806, 1.442695
  %v808 = vpow.pop %v807
  %v809 = vsel %vm208, %v808, 0.0
  %810 = vadd.xlane.f32.xlu0 %v809
  %v811 = vpop.xlane.xlu0 %810
  %v812 = vrcp.pop %v811
  %v813 = vmul.f32 %v808, %v812
  %814 = vrot.lane.b32.xlu0 %v197, 40
  %v815 = vpop.permute.xlu0 %814
  %v818 = vsel %vm208, %v813, 0
  %820 = vmatprep.subr.mxu0 0.0
  %821 = vmatpush1.msra.mxu0 0.0
  %822 = vmatprep.subr.mxu0 0.0
  %823 = vmatpush1.msra.mxu0 0.0
  %824 = vmatprep.subr.mxu0 0.0
  %825 = vmatpush1.msra.mxu0 0.0
  %826 = vmatprep.subr.mxu0 0.0
  %827 = vmatpush1.msra.mxu0 0.0
  %828 = vmatprep.subr.mxu0 0.0
  %829 = vmatpush1.msra.mxu0 0.0
  %830 = vmatprep.subr.mxu0 0.0
  %831 = vmatpush1.msra.mxu0 0.0
  %832 = vmatprep.subr.mxu0 0.0
  %833 = vmatpush1.msra.mxu0 0.0
  %834 = vmatprep.subr.mxu0 0.0
  %835 = vmatpush1.msra.mxu0 0.0
  %836 = vmatprep.subr.mxu0 0.0
  %837 = vmatpush1.msra.mxu0 0.0
  %838 = vmatprep.subr.mxu0 0.0
  %839 = vmatpush1.msra.mxu0 0.0
  %840 = vmatprep.subr.mxu0 0.0
  %841 = vmatpush1.msra.mxu0 0.0
  %842 = vmatprep.subr.mxu0 0.0
  %843 = vmatpush1.msra.mxu0 0.0
  %844 = vmatprep.subr.mxu0 0.0
  %845 = vmatpush1.msra.mxu0 0.0
  %846 = vmatprep.subr.mxu0 0.0
  %847 = vmatpush1.msra.mxu0 0.0
  %848 = vmatprep.subr.mxu0 0.0
  %849 = vmatpush1.msra.mxu0 0.0
  %850 = vmatprep.subr.mxu0 0.0
  %851 = vmatpush1.msra.mxu0 %v815
  %852 = vmatprep.subr.mxu0 0.0
  %853 = vmatpush2.msra.mxu0 0.0
  %854 = vmatprep.subr.mxu0 0.0
  %855 = vmatpush2.msra.mxu0 0.0
  %856 = vmatprep.subr.mxu0 0.0
  %857 = vmatpush2.msra.mxu0 0.0
  %858 = vmatprep.subr.mxu0 0.0
  %859 = vmatpush2.msra.mxu0 0.0
  %860 = vmatprep.subr.mxu0 0.0
  %861 = vmatpush2.msra.mxu0 0.0
  %862 = vmatprep.subr.mxu0 0.0
  %863 = vmatpush2.msra.mxu0 0.0
  %864 = vmatprep.subr.mxu0 0.0
  %865 = vmatpush2.msra.mxu0 0.0
  %866 = vmatprep.subr.mxu0 0.0
  %867 = vmatpush2.msra.mxu0 0.0
  %868 = vmatprep.subr.mxu0 0.0
  %869 = vmatpush2.msra.mxu0 0.0
  %870 = vmatprep.subr.mxu0 0.0
  %871 = vmatpush2.msra.mxu0 0.0
  %872 = vmatprep.subr.mxu0 0.0
  %873 = vmatpush2.msra.mxu0 0.0
  %874 = vmatprep.subr.mxu0 0.0
  %875 = vmatpush2.msra.mxu0 0.0
  %876 = vmatprep.subr.mxu0 0.0
  %877 = vmatpush2.msra.mxu0 0.0
  %878 = vmatprep.subr.mxu0 0.0
  %879 = vmatpush2.msra.mxu0 0.0
  %880 = vmatprep.subr.mxu0 0.0
  %881 = vmatpush2.msra.mxu0 0.0
  %882 = vmatprep.subr.mxu0 0.0
  %883 = vmatpush2.msra.mxu0 0.0
  %884 = vmatprep.mubr.f32.mxu0 0.0
  %885 = vmatmul.mubr.f32.gmra.mxu0 %v818
  %v886 = vpop.f32.mrf.mxu0
  %v887 = vadd.f32 0.0, %v886
  %v888 = vpop.f32.mrf.mxu0
  %889 = vdwg.mxu0
  %891 = vrot.lane.b32.xlu0 %v887, 24
  %v892 = vpop.permute.xlu0 %891
  %vm894 = vcmask 261312
  %895 = vst.msk [vmem:[#allocation2] sm:$0xff] %vm894, %v892
  %897 = vrot.lane.b32.xlu0 %v202, 96
  %v898 = vpop.permute.xlu0 %897
  %v899 = vsel %vm208, %v202, 0
  %v901 = vsel %vm208, %v898, 0
  %903 = vmatprep.subr.mxu0 0.0
  %904 = vmatpush1.xpose.msra.mxu0 0.0
  %905 = vmatprep.subr.mxu0 0.0
  %906 = vmatpush1.xpose.msra.mxu0 0.0
  %907 = vmatprep.subr.mxu0 0.0
  %908 = vmatpush1.xpose.msra.mxu0 0.0
  %909 = vmatprep.subr.mxu0 0.0
  %910 = vmatpush1.xpose.msra.mxu0 0.0
  %911 = vmatprep.subr.mxu0 0.0
  %912 = vmatpush1.xpose.msra.mxu0 0.0
  %913 = vmatprep.subr.mxu0 0.0
  %914 = vmatpush1.xpose.msra.mxu0 0.0
  %915 = vmatprep.subr.mxu0 0.0
  %916 = vmatpush1.xpose.msra.mxu0 0.0
  %917 = vmatprep.subr.mxu0 0.0
  %918 = vmatpush1.xpose.msra.mxu0 0.0
  %919 = vmatprep.subr.mxu0 0.0
  %920 = vmatpush1.xpose.msra.mxu0 0.0
  %921 = vmatprep.subr.mxu0 0.0
  %922 = vmatpush1.xpose.msra.mxu0 0.0
  %923 = vmatprep.subr.mxu0 0.0
  %924 = vmatpush1.xpose.msra.mxu0 0.0
  %925 = vmatprep.subr.mxu0 0.0
  %926 = vmatpush1.xpose.msra.mxu0 0.0
  %927 = vmatprep.subr.mxu0 0.0
  %928 = vmatpush1.xpose.msra.mxu0 0.0
  %929 = vmatprep.subr.mxu0 0.0
  %930 = vmatpush1.xpose.msra.mxu0 0.0
  %931 = vmatprep.subr.mxu0 0.0
  %932 = vmatpush1.xpose.msra.mxu0 0.0
  %933 = vmatprep.subr.mxu0 0.0
  %934 = vmatpush1.xpose.msra.mxu0 %v901
  %935 = vmatprep.subr.mxu0 0.0
  %936 = vmatpush2.xpose.msra.mxu0 0.0
  %937 = vmatprep.subr.mxu0 0.0
  %938 = vmatpush2.xpose.msra.mxu0 0.0
  %939 = vmatprep.subr.mxu0 0.0
  %940 = vmatpush2.xpose.msra.mxu0 0.0
  %941 = vmatprep.subr.mxu0 0.0
  %942 = vmatpush2.xpose.msra.mxu0 0.0
  %943 = vmatprep.subr.mxu0 0.0
  %944 = vmatpush2.xpose.msra.mxu0 0.0
  %945 = vmatprep.subr.mxu0 0.0
  %946 = vmatpush2.xpose.msra.mxu0 0.0
  %947 = vmatprep.subr.mxu0 0.0
  %948 = vmatpush2.xpose.msra.mxu0 0.0
  %949 = vmatprep.subr.mxu0 0.0
  %950 = vmatpush2.xpose.msra.mxu0 0.0
  %951 = vmatprep.subr.mxu0 0.0
  %952 = vmatpush2.xpose.msra.mxu0 0.0
  %953 = vmatprep.subr.mxu0 0.0
  %954 = vmatpush2.xpose.msra.mxu0 0.0
  %955 = vmatprep.subr.mxu0 0.0
  %956 = vmatpush2.xpose.msra.mxu0 0.0
  %957 = vmatprep.subr.mxu0 0.0
  %958 = vmatpush2.xpose.msra.mxu0 0.0
  %959 = vmatprep.subr.mxu0 0.0
  %960 = vmatpush2.xpose.msra.mxu0 0.0
  %961 = vmatprep.subr.mxu0 0.0
  %962 = vmatpush2.xpose.msra.mxu0 0.0
  %963 = vmatprep.subr.mxu0 0.0
  %964 = vmatpush2.xpose.msra.mxu0 0.0
  %965 = vmatprep.subr.mxu0 0.0
  %966 = vmatpush2.xpose.msra.mxu0 0.0
  %967 = vmatprep.mubr.f32.mxu0 0.0
  %968 = vmatmul.mubr.f32.gmra.mxu0 %v899
  %v969 = vpop.f32.mrf.mxu0
  %v970 = vadd.f32 0.0, %v969
  %v971 = vpop.f32.mrf.mxu0
  %972 = vdwg.mxu0
  %v973 = vmul.f32 %v970, 0.35355338
  %v974 = vlaneseq
  %v975 = vshrl.u32 %v974, 7
  %v976 = vsub.s32 1, %v975
  %v977 = vrot.slane %v64, %v976
  %v978 = vadd.f32 %v973, %v977
  %v979 = vsel %vm208, %v978, -inf
  %980 = vmax.xlane.f32.xlu0 %v979
  %v981 = vpop.xlane.xlu0 %980
  %v982 = vsub.f32 %v978, %v981
  %v983 = vmul.f32 %v982, 1.442695
  %v984 = vpow.pop %v983
  %v985 = vsel %vm208, %v984, 0.0
  %986 = vadd.xlane.f32.xlu0 %v985
  %v987 = vpop.xlane.xlu0 %986
  %v988 = vrcp.pop %v987
  %v989 = vmul.f32 %v984, %v988
  %990 = vrot.lane.b32.xlu0 %v202, 64
  %v991 = vpop.permute.xlu0 %990
  %v994 = vsel %vm208, %v989, 0
  %996 = vmatprep.subr.mxu0 0.0
  %997 = vmatpush1.msra.mxu0 0.0
  %998 = vmatprep.subr.mxu0 0.0
  %999 = vmatpush1.msra.mxu0 0.0
  %1000 = vmatprep.subr.mxu0 0.0
  %1001 = vmatpush1.msra.mxu0 0.0
  %1002 = vmatprep.subr.mxu0 0.0
  %1003 = vmatpush1.msra.mxu0 0.0
  %1004 = vmatprep.subr.mxu0 0.0
  %1005 = vmatpush1.msra.mxu0 0.0
  %1006 = vmatprep.subr.mxu0 0.0
  %1007 = vmatpush1.msra.mxu0 0.0
  %1008 = vmatprep.subr.mxu0 0.0
  %1009 = vmatpush1.msra.mxu0 0.0
  %1010 = vmatprep.subr.mxu0 0.0
  %1011 = vmatpush1.msra.mxu0 0.0
  %1012 = vmatprep.subr.mxu0 0.0
  %1013 = vmatpush1.msra.mxu0 0.0
  %1014 = vmatprep.subr.mxu0 0.0
  %1015 = vmatpush1.msra.mxu0 0.0
  %1016 = vmatprep.subr.mxu0 0.0
  %1017 = vmatpush1.msra.mxu0 0.0
  %1018 = vmatprep.subr.mxu0 0.0
  %1019 = vmatpush1.msra.mxu0 0.0
  %1020 = vmatprep.subr.mxu0 0.0
  %1021 = vmatpush1.msra.mxu0 0.0
  %1022 = vmatprep.subr.mxu0 0.0
  %1023 = vmatpush1.msra.mxu0 0.0
  %1024 = vmatprep.subr.mxu0 0.0
  %1025 = vmatpush1.msra.mxu0 0.0
  %1026 = vmatprep.subr.mxu0 0.0
  %1027 = vmatpush1.msra.mxu0 %v991
  %1028 = vmatprep.subr.mxu0 0.0
  %1029 = vmatpush2.msra.mxu0 0.0
  %1030 = vmatprep.subr.mxu0 0.0
  %1031 = vmatpush2.msra.mxu0 0.0
  %1032 = vmatprep.subr.mxu0 0.0
  %1033 = vmatpush2.msra.mxu0 0.0
  %1034 = vmatprep.subr.mxu0 0.0
  %1035 = vmatpush2.msra.mxu0 0.0
  %1036 = vmatprep.subr.mxu0 0.0
  %1037 = vmatpush2.msra.mxu0 0.0
  %1038 = vmatprep.subr.mxu0 0.0
  %1039 = vmatpush2.msra.mxu0 0.0
  %1040 = vmatprep.subr.mxu0 0.0
  %1041 = vmatpush2.msra.mxu0 0.0
  %1042 = vmatprep.subr.mxu0 0.0
  %1043 = vmatpush2.msra.mxu0 0.0
  %1044 = vmatprep.subr.mxu0 0.0
  %1045 = vmatpush2.msra.mxu0 0.0
  %1046 = vmatprep.subr.mxu0 0.0
  %1047 = vmatpush2.msra.mxu0 0.0
  %1048 = vmatprep.subr.mxu0 0.0
  %1049 = vmatpush2.msra.mxu0 0.0
  %1050 = vmatprep.subr.mxu0 0.0
  %1051 = vmatpush2.msra.mxu0 0.0
  %1052 = vmatprep.subr.mxu0 0.0
  %1053 = vmatpush2.msra.mxu0 0.0
  %1054 = vmatprep.subr.mxu0 0.0
  %1055 = vmatpush2.msra.mxu0 0.0
  %1056 = vmatprep.subr.mxu0 0.0
  %1057 = vmatpush2.msra.mxu0 0.0
  %1058 = vmatprep.subr.mxu0 0.0
  %1059 = vmatpush2.msra.mxu0 0.0
  %1060 = vmatprep.mubr.f32.mxu0 0.0
  %1061 = vmatmul.mubr.f32.gmra.mxu0 %v994
  %v1062 = vpop.f32.mrf.mxu0
  %v1063 = vadd.f32 0.0, %v1062
  %v1064 = vpop.f32.mrf.mxu0
  %1065 = vdwg.mxu0
  %1066 = vst.msk [vmem:[#allocation2 + $0x8] sm:$0xff] %vm208, %v1063
  %1067 = vrot.lane.b32.xlu0 %v202, 120
  %v1068 = vpop.permute.xlu0 %1067
  %1069 = vrot.lane.b32.xlu0 %v202, 88
  %v1070 = vpop.permute.xlu0 %1069
  %v1071 = vsel %vm208, %v1068, 0
  %v1073 = vsel %vm208, %v1070, 0
  %1075 = vmatprep.subr.mxu0 0.0
  %1076 = vmatpush1.xpose.msra.mxu0 0.0
  %1077 = vmatprep.subr.mxu0 0.0
  %1078 = vmatpush1.xpose.msra.mxu0 0.0
  %1079 = vmatprep.subr.mxu0 0.0
  %1080 = vmatpush1.xpose.msra.mxu0 0.0
  %1081 = vmatprep.subr.mxu0 0.0
  %1082 = vmatpush1.xpose.msra.mxu0 0.0
  %1083 = vmatprep.subr.mxu0 0.0
  %1084 = vmatpush1.xpose.msra.mxu0 0.0
  %1085 = vmatprep.subr.mxu0 0.0
  %1086 = vmatpush1.xpose.msra.mxu0 0.0
  %1087 = vmatprep.subr.mxu0 0.0
  %1088 = vmatpush1.xpose.msra.mxu0 0.0
  %1089 = vmatprep.subr.mxu0 0.0
  %1090 = vmatpush1.xpose.msra.mxu0 0.0
  %1091 = vmatprep.subr.mxu0 0.0
  %1092 = vmatpush1.xpose.msra.mxu0 0.0
  %1093 = vmatprep.subr.mxu0 0.0
  %1094 = vmatpush1.xpose.msra.mxu0 0.0
  %1095 = vmatprep.subr.mxu0 0.0
  %1096 = vmatpush1.xpose.msra.mxu0 0.0
  %1097 = vmatprep.subr.mxu0 0.0
  %1098 = vmatpush1.xpose.msra.mxu0 0.0
  %1099 = vmatprep.subr.mxu0 0.0
  %1100 = vmatpush1.xpose.msra.mxu0 0.0
  %1101 = vmatprep.subr.mxu0 0.0
  %1102 = vmatpush1.xpose.msra.mxu0 0.0
  %1103 = vmatprep.subr.mxu0 0.0
  %1104 = vmatpush1.xpose.msra.mxu0 0.0
  %1105 = vmatprep.subr.mxu0 0.0
  %1106 = vmatpush1.xpose.msra.mxu0 %v1073
  %1107 = vmatprep.subr.mxu0 0.0
  %1108 = vmatpush2.xpose.msra.mxu0 0.0
  %1109 = vmatprep.subr.mxu0 0.0
  %1110 = vmatpush2.xpose.msra.mxu0 0.0
  %1111 = vmatprep.subr.mxu0 0.0
  %1112 = vmatpush2.xpose.msra.mxu0 0.0
  %1113 = vmatprep.subr.mxu0 0.0
  %1114 = vmatpush2.xpose.msra.mxu0 0.0
  %1115 = vmatprep.subr.mxu0 0.0
  %1116 = vmatpush2.xpose.msra.mxu0 0.0
  %1117 = vmatprep.subr.mxu0 0.0
  %1118 = vmatpush2.xpose.msra.mxu0 0.0
  %1119 = vmatprep.subr.mxu0 0.0
  %1120 = vmatpush2.xpose.msra.mxu0 0.0
  %1121 = vmatprep.subr.mxu0 0.0
  %1122 = vmatpush2.xpose.msra.mxu0 0.0
  %1123 = vmatprep.subr.mxu0 0.0
  %1124 = vmatpush2.xpose.msra.mxu0 0.0
  %1125 = vmatprep.subr.mxu0 0.0
  %1126 = vmatpush2.xpose.msra.mxu0 0.0
  %1127 = vmatprep.subr.mxu0 0.0
  %1128 = vmatpush2.xpose.msra.mxu0 0.0
  %1129 = vmatprep.subr.mxu0 0.0
  %1130 = vmatpush2.xpose.msra.mxu0 0.0
  %1131 = vmatprep.subr.mxu0 0.0
  %1132 = vmatpush2.xpose.msra.mxu0 0.0
  %1133 = vmatprep.subr.mxu0 0.0
  %1134 = vmatpush2.xpose.msra.mxu0 0.0
  %1135 = vmatprep.subr.mxu0 0.0
  %1136 = vmatpush2.xpose.msra.mxu0 0.0
  %1137 = vmatprep.subr.mxu0 0.0
  %1138 = vmatpush2.xpose.msra.mxu0 0.0
  %1139 = vmatprep.mubr.f32.mxu0 0.0
  %1140 = vmatmul.mubr.f32.gmra.mxu0 %v1071
  %v1141 = vpop.f32.mrf.mxu0
  %v1142 = vadd.f32 0.0, %v1141
  %v1143 = vpop.f32.mrf.mxu0
  %1144 = vdwg.mxu0
  %v1145 = vmul.f32 %v1142, 0.35355338
  %v1146 = vadd.f32 %v1145, %v977
  %v1147 = vsel %vm208, %v1146, -inf
  %1148 = vmax.xlane.f32.xlu0 %v1147
  %v1149 = vpop.xlane.xlu0 %1148
  %v1150 = vsub.f32 %v1146, %v1149
  %v1151 = vmul.f32 %v1150, 1.442695
  %v1152 = vpow.pop %v1151
  %v1153 = vsel %vm208, %v1152, 0.0
  %1154 = vadd.xlane.f32.xlu0 %v1153
  %v1155 = vpop.xlane.xlu0 %1154
  %v1156 = vrcp.pop %v1155
  %v1157 = vmul.f32 %v1152, %v1156
  %1158 = vrot.lane.b32.xlu0 %v202, 56
  %v1159 = vpop.permute.xlu0 %1158
  %v1162 = vsel %vm208, %v1157, 0
  %1164 = vmatprep.subr.mxu0 0.0
  %1165 = vmatpush1.msra.mxu0 0.0
  %1166 = vmatprep.subr.mxu0 0.0
  %1167 = vmatpush1.msra.mxu0 0.0
  %1168 = vmatprep.subr.mxu0 0.0
  %1169 = vmatpush1.msra.mxu0 0.0
  %1170 = vmatprep.subr.mxu0 0.0
  %1171 = vmatpush1.msra.mxu0 0.0
  %1172 = vmatprep.subr.mxu0 0.0
  %1173 = vmatpush1.msra.mxu0 0.0
  %1174 = vmatprep.subr.mxu0 0.0
  %1175 = vmatpush1.msra.mxu0 0.0
  %1176 = vmatprep.subr.mxu0 0.0
  %1177 = vmatpush1.msra.mxu0 0.0
  %1178 = vmatprep.subr.mxu0 0.0
  %1179 = vmatpush1.msra.mxu0 0.0
  %1180 = vmatprep.subr.mxu0 0.0
  %1181 = vmatpush1.msra.mxu0 0.0
  %1182 = vmatprep.subr.mxu0 0.0
  %1183 = vmatpush1.msra.mxu0 0.0
  %1184 = vmatprep.subr.mxu0 0.0
  %1185 = vmatpush1.msra.mxu0 0.0
  %1186 = vmatprep.subr.mxu0 0.0
  %1187 = vmatpush1.msra.mxu0 0.0
  %1188 = vmatprep.subr.mxu0 0.0
  %1189 = vmatpush1.msra.mxu0 0.0
  %1190 = vmatprep.subr.mxu0 0.0
  %1191 = vmatpush1.msra.mxu0 0.0
  %1192 = vmatprep.subr.mxu0 0.0
  %1193 = vmatpush1.msra.mxu0 0.0
  %1194 = vmatprep.subr.mxu0 0.0
  %1195 = vmatpush1.msra.mxu0 %v1159
  %1196 = vmatprep.subr.mxu0 0.0
  %1197 = vmatpush2.msra.mxu0 0.0
  %1198 = vmatprep.subr.mxu0 0.0
  %1199 = vmatpush2.msra.mxu0 0.0
  %1200 = vmatprep.subr.mxu0 0.0
  %1201 = vmatpush2.msra.mxu0 0.0
  %1202 = vmatprep.subr.mxu0 0.0
  %1203 = vmatpush2.msra.mxu0 0.0
  %1204 = vmatprep.subr.mxu0 0.0
  %1205 = vmatpush2.msra.mxu0 0.0
  %1206 = vmatprep.subr.mxu0 0.0
  %1207 = vmatpush2.msra.mxu0 0.0
  %1208 = vmatprep.subr.mxu0 0.0
  %1209 = vmatpush2.msra.mxu0 0.0
  %1210 = vmatprep.subr.mxu0 0.0
  %1211 = vmatpush2.msra.mxu0 0.0
  %1212 = vmatprep.subr.mxu0 0.0
  %1213 = vmatpush2.msra.mxu0 0.0
  %1214 = vmatprep.subr.mxu0 0.0
  %1215 = vmatpush2.msra.mxu0 0.0
  %1216 = vmatprep.subr.mxu0 0.0
  %1217 = vmatpush2.msra.mxu0 0.0
  %1218 = vmatprep.subr.mxu0 0.0
  %1219 = vmatpush2.msra.mxu0 0.0
  %1220 = vmatprep.subr.mxu0 0.0
  %1221 = vmatpush2.msra.mxu0 0.0
  %1222 = vmatprep.subr.mxu0 0.0
  %1223 = vmatpush2.msra.mxu0 0.0
  %1224 = vmatprep.subr.mxu0 0.0
  %1225 = vmatpush2.msra.mxu0 0.0
  %1226 = vmatprep.subr.mxu0 0.0
  %1227 = vmatpush2.msra.mxu0 0.0
  %1228 = vmatprep.mubr.f32.mxu0 0.0
  %1229 = vmatmul.mubr.f32.gmra.mxu0 %v1162
  %v1230 = vpop.f32.mrf.mxu0
  %v1231 = vadd.f32 0.0, %v1230
  %v1232 = vpop.f32.mrf.mxu0
  %1233 = vdwg.mxu0
  %1235 = vrot.lane.b32.xlu0 %v1231, 8
  %v1236 = vpop.permute.xlu0 %1235
  %1238 = vst.msk [vmem:[#allocation2 + $0x8] sm:$0xff] %vm548, %v1236
  %1239 = vrot.lane.b32.xlu0 %v202, 112
  %v1240 = vpop.permute.xlu0 %1239
  %1241 = vrot.lane.b32.xlu0 %v202, 80
  %v1242 = vpop.permute.xlu0 %1241
  %v1243 = vsel %vm208, %v1240, 0
  %v1245 = vsel %vm208, %v1242, 0
  %1247 = vmatprep.subr.mxu0 0.0
  %1248 = vmatpush1.xpose.msra.mxu0 0.0
  %1249 = vmatprep.subr.mxu0 0.0
  %1250 = vmatpush1.xpose.msra.mxu0 0.0
  %1251 = vmatprep.subr.mxu0 0.0
  %1252 = vmatpush1.xpose.msra.mxu0 0.0
  %1253 = vmatprep.subr.mxu0 0.0
  %1254 = vmatpush1.xpose.msra.mxu0 0.0
  %1255 = vmatprep.subr.mxu0 0.0
  %1256 = vmatpush1.xpose.msra.mxu0 0.0
  %1257 = vmatprep.subr.mxu0 0.0
  %1258 = vmatpush1.xpose.msra.mxu0 0.0
  %1259 = vmatprep.subr.mxu0 0.0
  %1260 = vmatpush1.xpose.msra.mxu0 0.0
  %1261 = vmatprep.subr.mxu0 0.0
  %1262 = vmatpush1.xpose.msra.mxu0 0.0
  %1263 = vmatprep.subr.mxu0 0.0
  %1264 = vmatpush1.xpose.msra.mxu0 0.0
  %1265 = vmatprep.subr.mxu0 0.0
  %1266 = vmatpush1.xpose.msra.mxu0 0.0
  %1267 = vmatprep.subr.mxu0 0.0
  %1268 = vmatpush1.xpose.msra.mxu0 0.0
  %1269 = vmatprep.subr.mxu0 0.0
  %1270 = vmatpush1.xpose.msra.mxu0 0.0
  %1271 = vmatprep.subr.mxu0 0.0
  %1272 = vmatpush1.xpose.msra.mxu0 0.0
  %1273 = vmatprep.subr.mxu0 0.0
  %1274 = vmatpush1.xpose.msra.mxu0 0.0
  %1275 = vmatprep.subr.mxu0 0.0
  %1276 = vmatpush1.xpose.msra.mxu0 0.0
  %1277 = vmatprep.subr.mxu0 0.0
  %1278 = vmatpush1.xpose.msra.mxu0 %v1245
  %1279 = vmatprep.subr.mxu0 0.0
  %1280 = vmatpush2.xpose.msra.mxu0 0.0
  %1281 = vmatprep.subr.mxu0 0.0
  %1282 = vmatpush2.xpose.msra.mxu0 0.0
  %1283 = vmatprep.subr.mxu0 0.0
  %1284 = vmatpush2.xpose.msra.mxu0 0.0
  %1285 = vmatprep.subr.mxu0 0.0
  %1286 = vmatpush2.xpose.msra.mxu0 0.0
  %1287 = vmatprep.subr.mxu0 0.0
  %1288 = vmatpush2.xpose.msra.mxu0 0.0
  %1289 = vmatprep.subr.mxu0 0.0
  %1290 = vmatpush2.xpose.msra.mxu0 0.0
  %1291 = vmatprep.subr.mxu0 0.0
  %1292 = vmatpush2.xpose.msra.mxu0 0.0
  %1293 = vmatprep.subr.mxu0 0.0
  %1294 = vmatpush2.xpose.msra.mxu0 0.0
  %1295 = vmatprep.subr.mxu0 0.0
  %1296 = vmatpush2.xpose.msra.mxu0 0.0
  %1297 = vmatprep.subr.mxu0 0.0
  %1298 = vmatpush2.xpose.msra.mxu0 0.0
  %1299 = vmatprep.subr.mxu0 0.0
  %1300 = vmatpush2.xpose.msra.mxu0 0.0
  %1301 = vmatprep.subr.mxu0 0.0
  %1302 = vmatpush2.xpose.msra.mxu0 0.0
  %1303 = vmatprep.subr.mxu0 0.0
  %1304 = vmatpush2.xpose.msra.mxu0 0.0
  %1305 = vmatprep.subr.mxu0 0.0
  %1306 = vmatpush2.xpose.msra.mxu0 0.0
  %1307 = vmatprep.subr.mxu0 0.0
  %1308 = vmatpush2.xpose.msra.mxu0 0.0
  %1309 = vmatprep.subr.mxu0 0.0
  %1310 = vmatpush2.xpose.msra.mxu0 0.0
  %1311 = vmatprep.mubr.f32.mxu0 0.0
  %1312 = vmatmul.mubr.f32.gmra.mxu0 %v1243
  %v1313 = vpop.f32.mrf.mxu0
  %v1314 = vadd.f32 0.0, %v1313
  %v1315 = vpop.f32.mrf.mxu0
  %1316 = vdwg.mxu0
  %v1317 = vmul.f32 %v1314, 0.35355338
  %v1318 = vadd.f32 %v1317, %v977
  %v1319 = vsel %vm208, %v1318, -inf
  %1320 = vmax.xlane.f32.xlu0 %v1319
  %v1321 = vpop.xlane.xlu0 %1320
  %v1322 = vsub.f32 %v1318, %v1321
  %v1323 = vmul.f32 %v1322, 1.442695
  %v1324 = vpow.pop %v1323
  %v1325 = vsel %vm208, %v1324, 0.0
  %1326 = vadd.xlane.f32.xlu0 %v1325
  %v1327 = vpop.xlane.xlu0 %1326
  %v1328 = vrcp.pop %v1327
  %v1329 = vmul.f32 %v1324, %v1328
  %1330 = vrot.lane.b32.xlu0 %v202, 48
  %v1331 = vpop.permute.xlu0 %1330
  %v1334 = vsel %vm208, %v1329, 0
  %1336 = vmatprep.subr.mxu0 0.0
  %1337 = vmatpush1.msra.mxu0 0.0
  %1338 = vmatprep.subr.mxu0 0.0
  %1339 = vmatpush1.msra.mxu0 0.0
  %1340 = vmatprep.subr.mxu0 0.0
  %1341 = vmatpush1.msra.mxu0 0.0
  %1342 = vmatprep.subr.mxu0 0.0
  %1343 = vmatpush1.msra.mxu0 0.0
  %1344 = vmatprep.subr.mxu0 0.0
  %1345 = vmatpush1.msra.mxu0 0.0
  %1346 = vmatprep.subr.mxu0 0.0
  %1347 = vmatpush1.msra.mxu0 0.0
  %1348 = vmatprep.subr.mxu0 0.0
  %1349 = vmatpush1.msra.mxu0 0.0
  %1350 = vmatprep.subr.mxu0 0.0
  %1351 = vmatpush1.msra.mxu0 0.0
  %1352 = vmatprep.subr.mxu0 0.0
  %1353 = vmatpush1.msra.mxu0 0.0
  %1354 = vmatprep.subr.mxu0 0.0
  %1355 = vmatpush1.msra.mxu0 0.0
  %1356 = vmatprep.subr.mxu0 0.0
  %1357 = vmatpush1.msra.mxu0 0.0
  %1358 = vmatprep.subr.mxu0 0.0
  %1359 = vmatpush1.msra.mxu0 0.0
  %1360 = vmatprep.subr.mxu0 0.0
  %1361 = vmatpush1.msra.mxu0 0.0
  %1362 = vmatprep.subr.mxu0 0.0
  %1363 = vmatpush1.msra.mxu0 0.0
  %1364 = vmatprep.subr.mxu0 0.0
  %1365 = vmatpush1.msra.mxu0 0.0
  %1366 = vmatprep.subr.mxu0 0.0
  %1367 = vmatpush1.msra.mxu0 %v1331
  %1368 = vmatprep.subr.mxu0 0.0
  %1369 = vmatpush2.msra.mxu0 0.0
  %1370 = vmatprep.subr.mxu0 0.0
  %1371 = vmatpush2.msra.mxu0 0.0
  %1372 = vmatprep.subr.mxu0 0.0
  %1373 = vmatpush2.msra.mxu0 0.0
  %1374 = vmatprep.subr.mxu0 0.0
  %1375 = vmatpush2.msra.mxu0 0.0
  %1376 = vmatprep.subr.mxu0 0.0
  %1377 = vmatpush2.msra.mxu0 0.0
  %1378 = vmatprep.subr.mxu0 0.0
  %1379 = vmatpush2.msra.mxu0 0.0
  %1380 = vmatprep.subr.mxu0 0.0
  %1381 = vmatpush2.msra.mxu0 0.0
  %1382 = vmatprep.subr.mxu0 0.0
  %1383 = vmatpush2.msra.mxu0 0.0
  %1384 = vmatprep.subr.mxu0 0.0
  %1385 = vmatpush2.msra.mxu0 0.0
  %1386 = vmatprep.subr.mxu0 0.0
  %1387 = vmatpush2.msra.mxu0 0.0
  %1388 = vmatprep.subr.mxu0 0.0
  %1389 = vmatpush2.msra.mxu0 0.0
  %1390 = vmatprep.subr.mxu0 0.0
  %1391 = vmatpush2.msra.mxu0 0.0
  %1392 = vmatprep.subr.mxu0 0.0
  %1393 = vmatpush2.msra.mxu0 0.0
  %1394 = vmatprep.subr.mxu0 0.0
  %1395 = vmatpush2.msra.mxu0 0.0
  %1396 = vmatprep.subr.mxu0 0.0
  %1397 = vmatpush2.msra.mxu0 0.0
  %1398 = vmatprep.subr.mxu0 0.0
  %1399 = vmatpush2.msra.mxu0 0.0
  %1400 = vmatprep.mubr.f32.mxu0 0.0
  %1401 = vmatmul.mubr.f32.gmra.mxu0 %v1334
  %v1402 = vpop.f32.mrf.mxu0
  %v1403 = vadd.f32 0.0, %v1402
  %v1404 = vpop.f32.mrf.mxu0
  %1405 = vdwg.mxu0
  %1407 = vrot.lane.b32.xlu0 %v1403, 16
  %v1408 = vpop.permute.xlu0 %1407
  %1410 = vst.msk [vmem:[#allocation2 + $0x8] sm:$0xff] %vm721, %v1408
  %1411 = vrot.lane.b32.xlu0 %v202, 104
  %v1412 = vpop.permute.xlu0 %1411
  %1413 = vrot.lane.b32.xlu0 %v202, 72
  %v1414 = vpop.permute.xlu0 %1413
  %v1415 = vsel %vm208, %v1412, 0
  %v1417 = vsel %vm208, %v1414, 0
  %1419 = vmatprep.subr.mxu0 0.0
  %1420 = vmatpush1.xpose.msra.mxu0 0.0
  %1421 = vmatprep.subr.mxu0 0.0
  %1422 = vmatpush1.xpose.msra.mxu0 0.0
  %1423 = vmatprep.subr.mxu0 0.0
  %1424 = vmatpush1.xpose.msra.mxu0 0.0
  %1425 = vmatprep.subr.mxu0 0.0
  %1426 = vmatpush1.xpose.msra.mxu0 0.0
  %1427 = vmatprep.subr.mxu0 0.0
  %1428 = vmatpush1.xpose.msra.mxu0 0.0
  %1429 = vmatprep.subr.mxu0 0.0
  %1430 = vmatpush1.xpose.msra.mxu0 0.0
  %1431 = vmatprep.subr.mxu0 0.0
  %1432 = vmatpush1.xpose.msra.mxu0 0.0
  %1433 = vmatprep.subr.mxu0 0.0
  %1434 = vmatpush1.xpose.msra.mxu0 0.0
  %1435 = vmatprep.subr.mxu0 0.0
  %1436 = vmatpush1.xpose.msra.mxu0 0.0
  %1437 = vmatprep.subr.mxu0 0.0
  %1438 = vmatpush1.xpose.msra.mxu0 0.0
  %1439 = vmatprep.subr.mxu0 0.0
  %1440 = vmatpush1.xpose.msra.mxu0 0.0
  %1441 = vmatprep.subr.mxu0 0.0
  %1442 = vmatpush1.xpose.msra.mxu0 0.0
  %1443 = vmatprep.subr.mxu0 0.0
  %1444 = vmatpush1.xpose.msra.mxu0 0.0
  %1445 = vmatprep.subr.mxu0 0.0
  %1446 = vmatpush1.xpose.msra.mxu0 0.0
  %1447 = vmatprep.subr.mxu0 0.0
  %1448 = vmatpush1.xpose.msra.mxu0 0.0
  %1449 = vmatprep.subr.mxu0 0.0
  %1450 = vmatpush1.xpose.msra.mxu0 %v1417
  %1451 = vmatprep.subr.mxu0 0.0
  %1452 = vmatpush2.xpose.msra.mxu0 0.0
  %1453 = vmatprep.subr.mxu0 0.0
  %1454 = vmatpush2.xpose.msra.mxu0 0.0
  %1455 = vmatprep.subr.mxu0 0.0
  %1456 = vmatpush2.xpose.msra.mxu0 0.0
  %1457 = vmatprep.subr.mxu0 0.0
  %1458 = vmatpush2.xpose.msra.mxu0 0.0
  %1459 = vmatprep.subr.mxu0 0.0
  %1460 = vmatpush2.xpose.msra.mxu0 0.0
  %1461 = vmatprep.subr.mxu0 0.0
  %1462 = vmatpush2.xpose.msra.mxu0 0.0
  %1463 = vmatprep.subr.mxu0 0.0
  %1464 = vmatpush2.xpose.msra.mxu0 0.0
  %1465 = vmatprep.subr.mxu0 0.0
  %1466 = vmatpush2.xpose.msra.mxu0 0.0
  %1467 = vmatprep.subr.mxu0 0.0
  %1468 = vmatpush2.xpose.msra.mxu0 0.0
  %1469 = vmatprep.subr.mxu0 0.0
  %1470 = vmatpush2.xpose.msra.mxu0 0.0
  %1471 = vmatprep.subr.mxu0 0.0
  %1472 = vmatpush2.xpose.msra.mxu0 0.0
  %1473 = vmatprep.subr.mxu0 0.0
  %1474 = vmatpush2.xpose.msra.mxu0 0.0
  %1475 = vmatprep.subr.mxu0 0.0
  %1476 = vmatpush2.xpose.msra.mxu0 0.0
  %1477 = vmatprep.subr.mxu0 0.0
  %1478 = vmatpush2.xpose.msra.mxu0 0.0
  %1479 = vmatprep.subr.mxu0 0.0
  %1480 = vmatpush2.xpose.msra.mxu0 0.0
  %1481 = vmatprep.subr.mxu0 0.0
  %1482 = vmatpush2.xpose.msra.mxu0 0.0
  %1483 = vmatprep.mubr.f32.mxu0 0.0
  %1484 = vmatmul.mubr.f32.gmra.mxu0 %v1415
  %v1485 = vpop.f32.mrf.mxu0
  %v1486 = vadd.f32 0.0, %v1485
  %v1487 = vpop.f32.mrf.mxu0
  %1488 = vdwg.mxu0
  %v1489 = vmul.f32 %v1486, 0.35355338
  %v1490 = vadd.f32 %v1489, %v977
  %v1491 = vsel %vm208, %v1490, -inf
  %1492 = vmax.xlane.f32.xlu0 %v1491
  %v1493 = vpop.xlane.xlu0 %1492
  %v1494 = vsub.f32 %v1490, %v1493
  %v1495 = vmul.f32 %v1494, 1.442695
  %v1496 = vpow.pop %v1495
  %v1497 = vsel %vm208, %v1496, 0.0
  %1498 = vadd.xlane.f32.xlu0 %v1497
  %v1499 = vpop.xlane.xlu0 %1498
  %v1500 = vrcp.pop %v1499
  %v1501 = vmul.f32 %v1496, %v1500
  %1502 = vrot.lane.b32.xlu0 %v202, 40
  %v1503 = vpop.permute.xlu0 %1502
  %v1506 = vsel %vm208, %v1501, 0
  %1508 = vmatprep.subr.mxu0 0.0
  %1509 = vmatpush1.msra.mxu0 0.0
  %1510 = vmatprep.subr.mxu0 0.0
  %1511 = vmatpush1.msra.mxu0 0.0
  %1512 = vmatprep.subr.mxu0 0.0
  %1513 = vmatpush1.msra.mxu0 0.0
  %1514 = vmatprep.subr.mxu0 0.0
  %1515 = vmatpush1.msra.mxu0 0.0
  %1516 = vmatprep.subr.mxu0 0.0
  %1517 = vmatpush1.msra.mxu0 0.0
  %1518 = vmatprep.subr.mxu0 0.0
  %1519 = vmatpush1.msra.mxu0 0.0
  %1520 = vmatprep.subr.mxu0 0.0
  %1521 = vmatpush1.msra.mxu0 0.0
  %1522 = vmatprep.subr.mxu0 0.0
  %1523 = vmatpush1.msra.mxu0 0.0
  %1524 = vmatprep.subr.mxu0 0.0
  %1525 = vmatpush1.msra.mxu0 0.0
  %1526 = vmatprep.subr.mxu0 0.0
  %1527 = vmatpush1.msra.mxu0 0.0
  %1528 = vmatprep.subr.mxu0 0.0
  %1529 = vmatpush1.msra.mxu0 0.0
  %1530 = vmatprep.subr.mxu0 0.0
  %1531 = vmatpush1.msra.mxu0 0.0
  %1532 = vmatprep.subr.mxu0 0.0
  %1533 = vmatpush1.msra.mxu0 0.0
  %1534 = vmatprep.subr.mxu0 0.0
  %1535 = vmatpush1.msra.mxu0 0.0
  %1536 = vmatprep.subr.mxu0 0.0
  %1537 = vmatpush1.msra.mxu0 0.0
  %1538 = vmatprep.subr.mxu0 0.0
  %1539 = vmatpush1.msra.mxu0 %v1503
  %1540 = vmatprep.subr.mxu0 0.0
  %1541 = vmatpush2.msra.mxu0 0.0
  %1542 = vmatprep.subr.mxu0 0.0
  %1543 = vmatpush2.msra.mxu0 0.0
  %1544 = vmatprep.subr.mxu0 0.0
  %1545 = vmatpush2.msra.mxu0 0.0
  %1546 = vmatprep.subr.mxu0 0.0
  %1547 = vmatpush2.msra.mxu0 0.0
  %1548 = vmatprep.subr.mxu0 0.0
  %1549 = vmatpush2.msra.mxu0 0.0
  %1550 = vmatprep.subr.mxu0 0.0
  %1551 = vmatpush2.msra.mxu0 0.0
  %1552 = vmatprep.subr.mxu0 0.0
  %1553 = vmatpush2.msra.mxu0 0.0
  %1554 = vmatprep.subr.mxu0 0.0
  %1555 = vmatpush2.msra.mxu0 0.0
  %1556 = vmatprep.subr.mxu0 0.0
  %1557 = vmatpush2.msra.mxu0 0.0
  %1558 = vmatprep.subr.mxu0 0.0
  %1559 = vmatpush2.msra.mxu0 0.0
  %1560 = vmatprep.subr.mxu0 0.0
  %1561 = vmatpush2.msra.mxu0 0.0
  %1562 = vmatprep.subr.mxu0 0.0
  %1563 = vmatpush2.msra.mxu0 0.0
  %1564 = vmatprep.subr.mxu0 0.0
  %1565 = vmatpush2.msra.mxu0 0.0
  %1566 = vmatprep.subr.mxu0 0.0
  %1567 = vmatpush2.msra.mxu0 0.0
  %1568 = vmatprep.subr.mxu0 0.0
  %1569 = vmatpush2.msra.mxu0 0.0
  %1570 = vmatprep.subr.mxu0 0.0
  %1571 = vmatpush2.msra.mxu0 0.0
  %1572 = vmatprep.mubr.f32.mxu0 0.0
  %1573 = vmatmul.mubr.f32.gmra.mxu0 %v1506
  %v1574 = vpop.f32.mrf.mxu0
  %v1575 = vadd.f32 0.0, %v1574
  %v1576 = vpop.f32.mrf.mxu0
  %1577 = vdwg.mxu0
  %1579 = vrot.lane.b32.xlu0 %v1575, 24
  %v1580 = vpop.permute.xlu0 %1579
  %1582 = vst.msk [vmem:[#allocation2 + $0x8] sm:$0xff] %vm894, %v1580
  %v1583 = vld [vmem:[#allocation2] sm:$0xff]
  %v1584 = vld [vmem:[#allocation2 + $0x8] sm:$0xff]
  %v1585 = vld [vmem:[%s7] sm:$0xff]
  %v1586 = vld [vmem:[%s7 + $0x8] sm:$0xff]
  %v1587 = vld [vmem:[%s7 + $0x10] sm:$0xff]
  %v1588 = vld [vmem:[%s7 + $0x18] sm:$0xff]
  %v1589 = vld [vmem:[%s8] sm:$0x1]
  %v1591 = vlaneseq
  %v1592 = vshrl.u32 %v1591, 7
  %v1593 = vsub.s32 0, %v1592
  %v1594 = vrot.slane %v1589, %v1593
  %v1597 = vsel %vm69, %v1583, 0
  %v1600 = vsel %vm69, %v1584, 0
  %1602 = vmatprep.subr.mxu0 0.0
  %1603 = vmatpush1.msra.mxu0 0.0
  %1604 = vmatprep.subr.mxu0 0.0
  %1605 = vmatpush1.msra.mxu0 0.0
  %1606 = vmatprep.subr.mxu0 0.0
  %1607 = vmatpush1.msra.mxu0 0.0
  %1608 = vmatprep.subr.mxu0 0.0
  %1609 = vmatpush1.msra.mxu0 0.0
  %1610 = vmatprep.subr.mxu0 0.0
  %1611 = vmatpush1.msra.mxu0 0.0
  %1612 = vmatprep.subr.mxu0 0.0
  %1613 = vmatpush1.msra.mxu0 0.0
  %1614 = vmatprep.subr.mxu0 0.0
  %1615 = vmatpush1.msra.mxu0 0.0
  %1616 = vmatprep.subr.mxu0 0.0
  %1617 = vmatpush1.msra.mxu0 0.0
  %1618 = vmatprep.subr.mxu0 0.0
  %1619 = vmatpush1.msra.mxu0 0.0
  %1620 = vmatprep.subr.mxu0 0.0
  %1621 = vmatpush1.msra.mxu0 0.0
  %1622 = vmatprep.subr.mxu0 0.0
  %1623 = vmatpush1.msra.mxu0 0.0
  %1624 = vmatprep.subr.mxu0 0.0
  %1625 = vmatpush1.msra.mxu0 0.0
  %1626 = vmatprep.subr.mxu0 0.0
  %1627 = vmatpush1.msra.mxu0 %v1588
  %1628 = vmatprep.subr.mxu0 0.0
  %1629 = vmatpush1.msra.mxu0 %v1587
  %1630 = vmatprep.subr.mxu0 0.0
  %1631 = vmatpush1.msra.mxu0 %v1586
  %1632 = vmatprep.subr.mxu0 0.0
  %1633 = vmatpush1.msra.mxu0 %v1585
  %1634 = vmatprep.subr.mxu0 0.0
  %1635 = vmatpush2.msra.mxu0 0.0
  %1636 = vmatprep.subr.mxu0 0.0
  %1637 = vmatpush2.msra.mxu0 0.0
  %1638 = vmatprep.subr.mxu0 0.0
  %1639 = vmatpush2.msra.mxu0 0.0
  %1640 = vmatprep.subr.mxu0 0.0
  %1641 = vmatpush2.msra.mxu0 0.0
  %1642 = vmatprep.subr.mxu0 0.0
  %1643 = vmatpush2.msra.mxu0 0.0
  %1644 = vmatprep.subr.mxu0 0.0
  %1645 = vmatpush2.msra.mxu0 0.0
  %1646 = vmatprep.subr.mxu0 0.0
  %1647 = vmatpush2.msra.mxu0 0.0
  %1648 = vmatprep.subr.mxu0 0.0
  %1649 = vmatpush2.msra.mxu0 0.0
  %1650 = vmatprep.subr.mxu0 0.0
  %1651 = vmatpush2.msra.mxu0 0.0
  %1652 = vmatprep.subr.mxu0 0.0
  %1653 = vmatpush2.msra.mxu0 0.0
  %1654 = vmatprep.subr.mxu0 0.0
  %1655 = vmatpush2.msra.mxu0 0.0
  %1656 = vmatprep.subr.mxu0 0.0
  %1657 = vmatpush2.msra.mxu0 0.0
  %1658 = vmatprep.subr.mxu0 0.0
  %1659 = vmatpush2.msra.mxu0 0.0
  %1660 = vmatprep.subr.mxu0 0.0
  %1661 = vmatpush2.msra.mxu0 0.0
  %1662 = vmatprep.subr.mxu0 0.0
  %1663 = vmatpush2.msra.mxu0 0.0
  %1664 = vmatprep.subr.mxu0 0.0
  %1665 = vmatpush2.msra.mxu0 0.0
  %1666 = vmatprep.mubr.f32.mxu0 0.0
  %1667 = vmatmul.mubr.f32.gmra.mxu0 %v1597
  %v1668 = vpop.f32.mrf.mxu0
  %v1669 = vadd.f32 %v1594, %v1668
  %v1670 = vpop.f32.mrf.mxu0
  %1671 = vmatprep.mubr.f32.mxu0 0.0
  %1672 = vmatmul.mubr.f32.gmra.mxu0 %v1600
  %v1673 = vpop.f32.mrf.mxu0
  %v1674 = vadd.f32 %v1594, %v1673
  %v1675 = vpop.f32.mrf.mxu0
  %1676 = vdwg.mxu0
  %v1677 = vadd.f32 %v1669, %v111
  %v1678 = vadd.f32 %v1674, %v112
  %v1679 = vld [vmem:[%s9] sm:$0x1]
  %v1680 = vld [vmem:[%s10] sm:$0x1]
  %v1681 = vsel %vm69, %v1677, 0.0
  %1682 = vadd.xlane.f32.xlu0 %v1681
  %v1683 = vpop.xlane.xlu0 %1682
  %v1684 = vsel %vm69, %v1678, 0.0
  %1685 = vadd.xlane.f32.xlu0 %v1684
  %v1686 = vpop.xlane.xlu0 %1685
  %v1687 = vmul.f32 %v1683, %v76
  %v1688 = vmul.f32 %v1686, %v76
  %v1689 = vsub.f32 %v1677, %v1687
  %v1690 = vsub.f32 %v1678, %v1688
  %v1691 = vmul.f32 %v1689, %v1689
  %v1692 = vmul.f32 %v1690, %v1690
  %v1693 = vsel %vm69, %v1691, 0.0
  %1694 = vadd.xlane.f32.xlu0 %v1693
  %v1695 = vpop.xlane.xlu0 %1694
  %v1696 = vsel %vm69, %v1692, 0.0
  %1697 = vadd.xlane.f32.xlu0 %v1696
  %v1698 = vpop.xlane.xlu0 %1697
  %v1699 = vmul.f32 %v1695, %v76
  %v1700 = vmul.f32 %v1698, %v76
  %v1701 = vadd.f32 %v1699, 1e-12
  %v1702 = vadd.f32 %v1700, 1e-12
  %v1703 = vrsqrt.pop %v1701
  %v1704 = vrsqrt.pop %v1702
  %v1705 = vmul.f32 %v1689, %v1703
  %v1706 = vmul.f32 %v1690, %v1704
  %v1708 = vlaneseq
  %v1709 = vshrl.u32 %v1708, 7
  %v1710 = vsub.s32 0, %v1709
  %v1711 = vrot.slane %v1679, %v1710
  %v1713 = vmul.f32 %v1705, %v1711
  %v1714 = vmul.f32 %v1706, %v1711
  %v1716 = vlaneseq
  %v1717 = vshrl.u32 %v1716, 7
  %v1718 = vsub.s32 0, %v1717
  %v1719 = vrot.slane %v1680, %v1718
  %v1721 = vadd.f32 %v1713, %v1719
  %v1722 = vadd.f32 %v1714, %v1719
  %v1723 = vld [vmem:[%s11] sm:$0xff]
  %v1724 = vld [vmem:[%s11 + $0x8] sm:$0xff]
  %v1725 = vld [vmem:[%s11 + $0x10] sm:$0xff]
  %v1726 = vld [vmem:[%s11 + $0x18] sm:$0xff]
  %v1727 = vld [vmem:[%s12] sm:$0x1]
  %v1729 = vlaneseq
  %v1730 = vshrl.u32 %v1729, 7
  %v1731 = vsub.s32 0, %v1730
  %v1732 = vrot.slane %v1727, %v1731
  %v1735 = vsel %vm69, %v1721, 0
  %v1738 = vsel %vm69, %v1722, 0
  %1740 = vmatprep.subr.mxu0 0.0
  %1741 = vmatpush1.msra.mxu0 0.0
  %1742 = vmatprep.subr.mxu0 0.0
  %1743 = vmatpush1.msra.mxu0 0.0
  %1744 = vmatprep.subr.mxu0 0.0
  %1745 = vmatpush1.msra.mxu0 0.0
  %1746 = vmatprep.subr.mxu0 0.0
  %1747 = vmatpush1.msra.mxu0 0.0
  %1748 = vmatprep.subr.mxu0 0.0
  %1749 = vmatpush1.msra.mxu0 0.0
  %1750 = vmatprep.subr.mxu0 0.0
  %1751 = vmatpush1.msra.mxu0 0.0
  %1752 = vmatprep.subr.mxu0 0.0
  %1753 = vmatpush1.msra.mxu0 0.0
  %1754 = vmatprep.subr.mxu0 0.0
  %1755 = vmatpush1.msra.mxu0 0.0
  %1756 = vmatprep.subr.mxu0 0.0
  %1757 = vmatpush1.msra.mxu0 0.0
  %1758 = vmatprep.subr.mxu0 0.0
  %1759 = vmatpush1.msra.mxu0 0.0
  %1760 = vmatprep.subr.mxu0 0.0
  %1761 = vmatpush1.msra.mxu0 0.0
  %1762 = vmatprep.subr.mxu0 0.0
  %1763 = vmatpush1.msra.mxu0 0.0
  %1764 = vmatprep.subr.mxu0 0.0
  %1765 = vmatpush1.msra.mxu0 %v1726
  %1766 = vmatprep.subr.mxu0 0.0
  %1767 = vmatpush1.msra.mxu0 %v1725
  %1768 = vmatprep.subr.mxu0 0.0
  %1769 = vmatpush1.msra.mxu0 %v1724
  %1770 = vmatprep.subr.mxu0 0.0
  %1771 = vmatpush1.msra.mxu0 %v1723
  %1772 = vmatprep.subr.mxu0 0.0
  %1773 = vmatpush2.msra.mxu0 0.0
  %1774 = vmatprep.subr.mxu0 0.0
  %1775 = vmatpush2.msra.mxu0 0.0
  %1776 = vmatprep.subr.mxu0 0.0
  %1777 = vmatpush2.msra.mxu0 0.0
  %1778 = vmatprep.subr.mxu0 0.0
  %1779 = vmatpush2.msra.mxu0 0.0
  %1780 = vmatprep.subr.mxu0 0.0
  %1781 = vmatpush2.msra.mxu0 0.0
  %1782 = vmatprep.subr.mxu0 0.0
  %1783 = vmatpush2.msra.mxu0 0.0
  %1784 = vmatprep.subr.mxu0 0.0
  %1785 = vmatpush2.msra.mxu0 0.0
  %1786 = vmatprep.subr.mxu0 0.0
  %1787 = vmatpush2.msra.mxu0 0.0
  %1788 = vmatprep.subr.mxu0 0.0
  %1789 = vmatpush2.msra.mxu0 0.0
  %1790 = vmatprep.subr.mxu0 0.0
  %1791 = vmatpush2.msra.mxu0 0.0
  %1792 = vmatprep.subr.mxu0 0.0
  %1793 = vmatpush2.msra.mxu0 0.0
  %1794 = vmatprep.subr.mxu0 0.0
  %1795 = vmatpush2.msra.mxu0 0.0
  %1796 = vmatprep.subr.mxu0 0.0
  %1797 = vmatpush2.msra.mxu0 0.0
  %1798 = vmatprep.subr.mxu0 0.0
  %1799 = vmatpush2.msra.mxu0 0.0
  %1800 = vmatprep.subr.mxu0 0.0
  %1801 = vmatpush2.msra.mxu0 0.0
  %1802 = vmatprep.subr.mxu0 0.0
  %1803 = vmatpush2.msra.mxu0 0.0
  %1804 = vmatprep.mubr.f32.mxu0 0.0
  %1805 = vmatmul.mubr.f32.gmra.mxu0 %v1735
  %v1806 = vpop.f32.mrf.mxu0
  %v1807 = vadd.f32 %v1732, %v1806
  %v1808 = vpop.f32.mrf.mxu0
  %1809 = vmatprep.mubr.f32.mxu0 0.0
  %1810 = vmatmul.mubr.f32.gmra.mxu0 %v1738
  %v1811 = vpop.f32.mrf.mxu0
  %v1812 = vadd.f32 %v1732, %v1811
  %v1813 = vpop.f32.mrf.mxu0
  %1814 = vdwg.mxu0
  %v1815 = vmul.f32 %v1807, 0.5
  %v1816 = vmul.f32 %v1812, 0.5
  %v1817 = vmul.f32 %v1807, 0.044715
  %v1818 = vmul.f32 %v1812, 0.044715
  %v1819 = vmul.f32 %v1817, %v1807
  %v1820 = vmul.f32 %v1818, %v1812
  %v1821 = vmul.f32 %v1819, %v1807
  %v1822 = vmul.f32 %v1820, %v1812
  %v1823 = vadd.f32 %v1807, %v1821
  %v1824 = vadd.f32 %v1812, %v1822
  %v1825 = vmul.f32 %v1823, 0.7978846
  %v1826 = vmul.f32 %v1824, 0.7978846
  %v1827 = vtanh.pop %v1825
  %v1828 = vtanh.pop %v1826
  %v1829 = vadd.f32 %v1827, 1.0
  %v1830 = vadd.f32 %v1828, 1.0
  %v1831 = vmul.f32 %v1815, %v1829
  %v1832 = vmul.f32 %v1816, %v1830
  %v1833 = vld [vmem:[%s13] sm:$0xff]
  %v1834 = vld [vmem:[%s13 + $0x8] sm:$0xff]
  %v1835 = vld [vmem:[%s13 + $0x10] sm:$0xff]
  %v1836 = vld [vmem:[%s13 + $0x18] sm:$0xff]
  %v1837 = vld [vmem:[%s13 + $0x20] sm:$0xff]
  %v1838 = vld [vmem:[%s13 + $0x28] sm:$0xff]
  %v1839 = vld [vmem:[%s13 + $0x30] sm:$0xff]
  %v1840 = vld [vmem:[%s13 + $0x38] sm:$0xff]
  %v1841 = vld [vmem:[%s14] sm:$0x1]
  %v1843 = vlaneseq
  %v1844 = vshrl.u32 %v1843, 7
  %v1845 = vsub.s32 0, %v1844
  %v1846 = vrot.slane %v1841, %v1845
  %vm1848 = vcmask 523264
  %v1850 = vsel %vm1848, %v1831, 0
  %v1853 = vsel %vm1848, %v1832, 0
  %1855 = vmatprep.subr.mxu0 0.0
  %1856 = vmatpush1.msra.mxu0 0.0
  %1857 = vmatprep.subr.mxu0 0.0
  %1858 = vmatpush1.msra.mxu0 0.0
  %1859 = vmatprep.subr.mxu0 0.0
  %1860 = vmatpush1.msra.mxu0 0.0
  %1861 = vmatprep.subr.mxu0 0.0
  %1862 = vmatpush1.msra.mxu0 0.0
  %1863 = vmatprep.subr.mxu0 0.0
  %1864 = vmatpush1.msra.mxu0 0.0
  %1865 = vmatprep.subr.mxu0 0.0
  %1866 = vmatpush1.msra.mxu0 0.0
  %1867 = vmatprep.subr.mxu0 0.0
  %1868 = vmatpush1.msra.mxu0 0.0
  %1869 = vmatprep.subr.mxu0 0.0
  %1870 = vmatpush1.msra.mxu0 0.0
  %1871 = vmatprep.subr.mxu0 0.0
  %1872 = vmatpush1.msra.mxu0 %v1840
  %1873 = vmatprep.subr.mxu0 0.0
  %1874 = vmatpush1.msra.mxu0 %v1839
  %1875 = vmatprep.subr.mxu0 0.0
  %1876 = vmatpush1.msra.mxu0 %v1838
  %1877 = vmatprep.subr.mxu0 0.0
  %1878 = vmatpush1.msra.mxu0 %v1837
  %1879 = vmatprep.subr.mxu0 0.0
  %1880 = vmatpush1.msra.mxu0 %v1836
  %1881 = vmatprep.subr.mxu0 0.0
  %1882 = vmatpush1.msra.mxu0 %v1835
  %1883 = vmatprep.subr.mxu0 0.0
  %1884 = vmatpush1.msra.mxu0 %v1834
  %1885 = vmatprep.subr.mxu0 0.0
  %1886 = vmatpush1.msra.mxu0 %v1833
  %1887 = vmatprep.subr.mxu0 0.0
  %1888 = vmatpush2.msra.mxu0 0.0
  %1889 = vmatprep.subr.mxu0 0.0
  %1890 = vmatpush2.msra.mxu0 0.0
  %1891 = vmatprep.subr.mxu0 0.0
  %1892 = vmatpush2.msra.mxu0 0.0
  %1893 = vmatprep.subr.mxu0 0.0
  %1894 = vmatpush2.msra.mxu0 0.0
  %1895 = vmatprep.subr.mxu0 0.0
  %1896 = vmatpush2.msra.mxu0 0.0
  %1897 = vmatprep.subr.mxu0 0.0
  %1898 = vmatpush2.msra.mxu0 0.0
  %1899 = vmatprep.subr.mxu0 0.0
  %1900 = vmatpush2.msra.mxu0 0.0
  %1901 = vmatprep.subr.mxu0 0.0
  %1902 = vmatpush2.msra.mxu0 0.0
  %1903 = vmatprep.subr.mxu0 0.0
  %1904 = vmatpush2.msra.mxu0 0.0
  %1905 = vmatprep.subr.mxu0 0.0
  %1906 = vmatpush2.msra.mxu0 0.0
  %1907 = vmatprep.subr.mxu0 0.0
  %1908 = vmatpush2.msra.mxu0 0.0
  %1909 = vmatprep.subr.mxu0 0.0
  %1910 = vmatpush2.msra.mxu0 0.0
  %1911 = vmatprep.subr.mxu0 0.0
  %1912 = vmatpush2.msra.mxu0 0.0
  %1913 = vmatprep.subr.mxu0 0.0
  %1914 = vmatpush2.msra.mxu0 0.0
  %1915 = vmatprep.subr.mxu0 0.0
  %1916 = vmatpush2.msra.mxu0 0.0
  %1917 = vmatprep.subr.mxu0 0.0
  %1918 = vmatpush2.msra.mxu0 0.0
  %1919 = vmatprep.mubr.f32.mxu0 0.0
  %1920 = vmatmul.mubr.f32.gmra.mxu0 %v1850
  %v1921 = vpop.f32.mrf.mxu0
  %v1922 = vadd.f32 %v1846, %v1921
  %v1923 = vpop.f32.mrf.mxu0
  %1924 = vmatprep.mubr.f32.mxu0 0.0
  %1925 = vmatmul.mubr.f32.gmra.mxu0 %v1853
  %v1926 = vpop.f32.mrf.mxu0
  %v1927 = vadd.f32 %v1846, %v1926
  %v1928 = vpop.f32.mrf.mxu0
  %1929 = vdwg.mxu0
  %v1930 = vadd.f32 %v1922, %v1721
  %v1931 = vadd.f32 %v1927, %v1722
  %v1932 = vld [vmem:[%s15] sm:$0x1]
  %v1933 = vld [vmem:[%s16] sm:$0x1]
  %v1934 = vsel %vm69, %v1930, 0.0
  %1935 = vadd.xlane.f32.xlu0 %v1934
  %v1936 = vpop.xlane.xlu0 %1935
  %v1937 = vsel %vm69, %v1931, 0.0
  %1938 = vadd.xlane.f32.xlu0 %v1937
  %v1939 = vpop.xlane.xlu0 %1938
  %v1940 = vmul.f32 %v1936, %v76
  %v1941 = vmul.f32 %v1939, %v76
  %v1942 = vsub.f32 %v1930, %v1940
  %v1943 = vsub.f32 %v1931, %v1941
  %v1944 = vmul.f32 %v1942, %v1942
  %v1945 = vmul.f32 %v1943, %v1943
  %v1946 = vsel %vm69, %v1944, 0.0
  %1947 = vadd.xlane.f32.xlu0 %v1946
  %v1948 = vpop.xlane.xlu0 %1947
  %v1949 = vsel %vm69, %v1945, 0.0
  %1950 = vadd.xlane.f32.xlu0 %v1949
  %v1951 = vpop.xlane.xlu0 %1950
  %v1952 = vmul.f32 %v1948, %v76
  %v1953 = vmul.f32 %v1951, %v76
  %v1954 = vadd.f32 %v1952, 1e-12
  %v1955 = vadd.f32 %v1953, 1e-12
  %v1956 = vrsqrt.pop %v1954
  %v1957 = vrsqrt.pop %v1955
  %v1958 = vmul.f32 %v1942, %v1956
  %v1959 = vmul.f32 %v1943, %v1957
  %v1961 = vlaneseq
  %v1962 = vshrl.u32 %v1961, 7
  %v1963 = vsub.s32 0, %v1962
  %v1964 = vrot.slane %v1932, %v1963
  %v1966 = vmul.f32 %v1958, %v1964
  %v1967 = vmul.f32 %v1959, %v1964
  %v1969 = vlaneseq
  %v1970 = vshrl.u32 %v1969, 7
  %v1971 = vsub.s32 0, %v1970
  %v1972 = vrot.slane %v1933, %v1971
  %v1974 = vadd.f32 %v1966, %v1972
  %v1975 = vadd.f32 %v1967, %v1972
  %s1976 = scalar_lea.vmem %s5, 32
  %v1977 = vld [vmem:[%s1976] sm:$0xff]
  %v1978 = vld [vmem:[%s1976 + $0x8] sm:$0xff]
  %v1979 = vld [vmem:[%s1976 + $0x10] sm:$0xff]
  %v1980 = vld [vmem:[%s1976 + $0x18] sm:$0xff]
  %s1981 = scalar_lea.vmem %s6, 1
  %v1982 = vld [vmem:[%s1981] sm:$0x1]
  %v1984 = vlaneseq
  %v1985 = vshrl.u32 %v1984, 7
  %v1986 = vsub.s32 0, %v1985
  %v1987 = vrot.slane %v1982, %v1986
  %v1990 = vsel %vm69, %v1974, 0
  %v1993 = vsel %vm69, %v1975, 0
  %1995 = vmatprep.subr.mxu0 0.0
  %1996 = vmatpush1.msra.mxu0 0.0
  %1997 = vmatprep.subr.mxu0 0.0
  %1998 = vmatpush1.msra.mxu0 0.0
  %1999 = vmatprep.subr.mxu0 0.0
  %2000 = vmatpush1.msra.mxu0 0.0
  %2001 = vmatprep.subr.mxu0 0.0
  %2002 = vmatpush1.msra.mxu0 0.0
  %2003 = vmatprep.subr.mxu0 0.0
  %2004 = vmatpush1.msra.mxu0 0.0
  %2005 = vmatprep.subr.mxu0 0.0
  %2006 = vmatpush1.msra.mxu0 0.0
  %2007 = vmatprep.subr.mxu0 0.0
  %2008 = vmatpush1.msra.mxu0 0.0
  %2009 = vmatprep.subr.mxu0 0.0
  %2010 = vmatpush1.msra.mxu0 0.0
  %2011 = vmatprep.subr.mxu0 0.0
  %2012 = vmatpush1.msra.mxu0 0.0
  %2013 = vmatprep.subr.mxu0 0.0
  %2014 = vmatpush1.msra.mxu0 0.0
  %2015 = vmatprep.subr.mxu0 0.0
  %2016 = vmatpush1.msra.mxu0 0.0
  %2017 = vmatprep.subr.mxu0 0.0
  %2018 = vmatpush1.msra.mxu0 0.0
  %2019 = vmatprep.subr.mxu0 0.0
  %2020 = vmatpush1.msra.mxu0 %v1980
  %2021 = vmatprep.subr.mxu0 0.0
  %2022 = vmatpush1.msra.mxu0 %v1979
  %2023 = vmatprep.subr.mxu0 0.0
  %2024 = vmatpush1.msra.mxu0 %v1978
  %2025 = vmatprep.subr.mxu0 0.0
  %2026 = vmatpush1.msra.mxu0 %v1977
  %2027 = vmatprep.subr.mxu0 0.0
  %2028 = vmatpush2.msra.mxu0 0.0
  %2029 = vmatprep.subr.mxu0 0.0
  %2030 = vmatpush2.msra.mxu0 0.0
  %2031 = vmatprep.subr.mxu0 0.0
  %2032 = vmatpush2.msra.mxu0 0.0
  %2033 = vmatprep.subr.mxu0 0.0
  %2034 = vmatpush2.msra.mxu0 0.0
  %2035 = vmatprep.subr.mxu0 0.0
  %2036 = vmatpush2.msra.mxu0 0.0
  %2037 = vmatprep.subr.mxu0 0.0
  %2038 = vmatpush2.msra.mxu0 0.0
  %2039 = vmatprep.subr.mxu0 0.0
  %2040 = vmatpush2.msra.mxu0 0.0
  %2041 = vmatprep.subr.mxu0 0.0
  %2042 = vmatpush2.msra.mxu0 0.0
  %2043 = vmatprep.subr.mxu0 0.0
  %2044 = vmatpush2.msra.mxu0 0.0
  %2045 = vmatprep.subr.mxu0 0.0
  %2046 = vmatpush2.msra.mxu0 0.0
  %2047 = vmatprep.subr.mxu0 0.0
  %2048 = vmatpush2.msra.mxu0 0.0
  %2049 = vmatprep.subr.mxu0 0.0
  %2050 = vmatpush2.msra.mxu0 0.0
  %2051 = vmatprep.subr.mxu0 0.0
  %2052 = vmatpush2.msra.mxu0 0.0
  %2053 = vmatprep.subr.mxu0 0.0
  %2054 = vmatpush2.msra.mxu0 0.0
  %2055 = vmatprep.subr.mxu0 0.0
  %2056 = vmatpush2.msra.mxu0 0.0
  %2057 = vmatprep.subr.mxu0 0.0
  %2058 = vmatpush2.msra.mxu0 0.0
  %2059 = vmatprep.mubr.f32.mxu0 0.0
  %2060 = vmatmul.mubr.f32.gmra.mxu0 %v1990
  %v2061 = vpop.f32.mrf.mxu0
  %v2062 = vadd.f32 %v1987, %v2061
  %v2063 = vpop.f32.mrf.mxu0
  %2064 = vmatprep.mubr.f32.mxu0 0.0
  %2065 = vmatmul.mubr.f32.gmra.mxu0 %v1993
  %v2066 = vpop.f32.mrf.mxu0
  %v2067 = vadd.f32 %v1987, %v2066
  %v2068 = vpop.f32.mrf.mxu0
  %2069 = vdwg.mxu0
  %2071 = vrot.lane.b32.xlu0 %v2062, 96
  %v2072 = vpop.permute.xlu0 %2071
  %v2073 = vsel %vm208, %v2062, 0
  %v2075 = vsel %vm208, %v2072, 0
  %2077 = vmatprep.subr.mxu0 0.0
  %2078 = vmatpush1.xpose.msra.mxu0 0.0
  %2079 = vmatprep.subr.mxu0 0.0
  %2080 = vmatpush1.xpose.msra.mxu0 0.0
  %2081 = vmatprep.subr.mxu0 0.0
  %2082 = vmatpush1.xpose.msra.mxu0 0.0
  %2083 = vmatprep.subr.mxu0 0.0
  %2084 = vmatpush1.xpose.msra.mxu0 0.0
  %2085 = vmatprep.subr.mxu0 0.0
  %2086 = vmatpush1.xpose.msra.mxu0 0.0
  %2087 = vmatprep.subr.mxu0 0.0
  %2088 = vmatpush1.xpose.msra.mxu0 0.0
  %2089 = vmatprep.subr.mxu0 0.0
  %2090 = vmatpush1.xpose.msra.mxu0 0.0
  %2091 = vmatprep.subr.mxu0 0.0
  %2092 = vmatpush1.xpose.msra.mxu0 0.0
  %2093 = vmatprep.subr.mxu0 0.0
  %2094 = vmatpush1.xpose.msra.mxu0 0.0
  %2095 = vmatprep.subr.mxu0 0.0
  %2096 = vmatpush1.xpose.msra.mxu0 0.0
  %2097 = vmatprep.subr.mxu0 0.0
  %2098 = vmatpush1.xpose.msra.mxu0 0.0
  %2099 = vmatprep.subr.mxu0 0.0
  %2100 = vmatpush1.xpose.msra.mxu0 0.0
  %2101 = vmatprep.subr.mxu0 0.0
  %2102 = vmatpush1.xpose.msra.mxu0 0.0
  %2103 = vmatprep.subr.mxu0 0.0
  %2104 = vmatpush1.xpose.msra.mxu0 0.0
  %2105 = vmatprep.subr.mxu0 0.0
  %2106 = vmatpush1.xpose.msra.mxu0 0.0
  %2107 = vmatprep.subr.mxu0 0.0
  %2108 = vmatpush1.xpose.msra.mxu0 %v2075
  %2109 = vmatprep.subr.mxu0 0.0
  %2110 = vmatpush2.xpose.msra.mxu0 0.0
  %2111 = vmatprep.subr.mxu0 0.0
  %2112 = vmatpush2.xpose.msra.mxu0 0.0
  %2113 = vmatprep.subr.mxu0 0.0
  %2114 = vmatpush2.xpose.msra.mxu0 0.0
  %2115 = vmatprep.subr.mxu0 0.0
  %2116 = vmatpush2.xpose.msra.mxu0 0.0
  %2117 = vmatprep.subr.mxu0 0.0
  %2118 = vmatpush2.xpose.msra.mxu0 0.0
  %2119 = vmatprep.subr.mxu0 0.0
  %2120 = vmatpush2.xpose.msra.mxu0 0.0
  %2121 = vmatprep.subr.mxu0 0.0
  %2122 = vmatpush2.xpose.msra.mxu0 0.0
  %2123 = vmatprep.subr.mxu0 0.0
  %2124 = vmatpush2.xpose.msra.mxu0 0.0
  %2125 = vmatprep.subr.mxu0 0.0
  %2126 = vmatpush2.xpose.msra.mxu0 0.0
  %2127 = vmatprep.subr.mxu0 0.0
  %2128 = vmatpush2.xpose.msra.mxu0 0.0
  %2129 = vmatprep.subr.mxu0 0.0
  %2130 = vmatpush2.xpose.msra.mxu0 0.0
  %2131 = vmatprep.subr.mxu0 0.0
  %2132 = vmatpush2.xpose.msra.mxu0 0.0
  %2133 = vmatprep.subr.mxu0 0.0
  %2134 = vmatpush2.xpose.msra.mxu0 0.0
  %2135 = vmatprep.subr.mxu0 0.0
  %2136 = vmatpush2.xpose.msra.mxu0 0.0
  %2137 = vmatprep.subr.mxu0 0.0
  %2138 = vmatpush2.xpose.msra.mxu0 0.0
  %2139 = vmatprep.subr.mxu0 0.0
  %2140 = vmatpush2.xpose.msra.mxu0 0.0
  %2141 = vmatprep.mubr.f32.mxu0 0.0
  %2142 = vmatmul.mubr.f32.gmra.mxu0 %v2073
  %v2143 = vpop.f32.mrf.mxu0
  %v2144 = vadd.f32 0.0, %v2143
  %v2145 = vpop.f32.mrf.mxu0
  %2146 = vdwg.mxu0
  %v2147 = vmul.f32 %v2144, 0.35355338
  %v2148 = vadd.f32 %v2147, %v287
  %v2149 = vsel %vm208, %v2148, -inf
  %2150 = vmax.xlane.f32.xlu0 %v2149
  %v2151 = vpop.xlane.xlu0 %2150
  %v2152 = vsub.f32 %v2148, %v2151
  %v2153 = vmul.f32 %v2152, 1.442695
  %v2154 = vpow.pop %v2153
  %v2155 = vsel %vm208, %v2154, 0.0
  %2156 = vadd.xlane.f32.xlu0 %v2155
  %v2157 = vpop.xlane.xlu0 %2156
  %v2158 = vrcp.pop %v2157
  %v2159 = vmul.f32 %v2154, %v2158
  %2160 = vrot.lane.b32.xlu0 %v2062, 64
  %v2161 = vpop.permute.xlu0 %2160
  %v2164 = vsel %vm208, %v2159, 0
  %2166 = vmatprep.subr.mxu0 0.0
  %2167 = vmatpush1.msra.mxu0 0.0
  %2168 = vmatprep.subr.mxu0 0.0
  %2169 = vmatpush1.msra.mxu0 0.0
  %2170 = vmatprep.subr.mxu0 0.0
  %2171 = vmatpush1.msra.mxu0 0.0
  %2172 = vmatprep.subr.mxu0 0.0
  %2173 = vmatpush1.msra.mxu0 0.0
  %2174 = vmatprep.subr.mxu0 0.0
  %2175 = vmatpush1.msra.mxu0 0.0
  %2176 = vmatprep.subr.mxu0 0.0
  %2177 = vmatpush1.msra.mxu0 0.0
  %2178 = vmatprep.subr.mxu0 0.0
  %2179 = vmatpush1.msra.mxu0 0.0
  %2180 = vmatprep.subr.mxu0 0.0
  %2181 = vmatpush1.msra.mxu0 0.0
  %2182 = vmatprep.subr.mxu0 0.0
  %2183 = vmatpush1.msra.mxu0 0.0
  %2184 = vmatprep.subr.mxu0 0.0
  %2185 = vmatpush1.msra.mxu0 0.0
  %2186 = vmatprep.subr.mxu0 0.0
  %2187 = vmatpush1.msra.mxu0 0.0
  %2188 = vmatprep.subr.mxu0 0.0
  %2189 = vmatpush1.msra.mxu0 0.0
  %2190 = vmatprep.subr.mxu0 0.0
  %2191 = vmatpush1.msra.mxu0 0.0
  %2192 = vmatprep.subr.mxu0 0.0
  %2193 = vmatpush1.msra.mxu0 0.0
  %2194 = vmatprep.subr.mxu0 0.0
  %2195 = vmatpush1.msra.mxu0 0.0
  %2196 = vmatprep.subr.mxu0 0.0
  %2197 = vmatpush1.msra.mxu0 %v2161
  %2198 = vmatprep.subr.mxu0 0.0
  %2199 = vmatpush2.msra.mxu0 0.0
  %2200 = vmatprep.subr.mxu0 0.0
  %2201 = vmatpush2.msra.mxu0 0.0
  %2202 = vmatprep.subr.mxu0 0.0
  %2203 = vmatpush2.msra.mxu0 0.0
  %2204 = vmatprep.subr.mxu0 0.0
  %2205 = vmatpush2.msra.mxu0 0.0
  %2206 = vmatprep.subr.mxu0 0.0
  %2207 = vmatpush2.msra.mxu0 0.0
  %2208 = vmatprep.subr.mxu0 0.0
  %2209 = vmatpush2.msra.mxu0 0.0
  %2210 = vmatprep.subr.mxu0 0.0
  %2211 = vmatpush2.msra.mxu0 0.0
  %2212 = vmatprep.subr.mxu0 0.0
  %2213 = vmatpush2.msra.mxu0 0.0
  %2214 = vmatprep.subr.mxu0 0.0
  %2215 = vmatpush2.msra.mxu0 0.0
  %2216 = vmatprep.subr.mxu0 0.0
  %2217 = vmatpush2.msra.mxu0 0.0
  %2218 = vmatprep.subr.mxu0 0.0
  %2219 = vmatpush2.msra.mxu0 0.0
  %2220 = vmatprep.subr.mxu0 0.0
  %2221 = vmatpush2.msra.mxu0 0.0
  %2222 = vmatprep.subr.mxu0 0.0
  %2223 = vmatpush2.msra.mxu0 0.0
  %2224 = vmatprep.subr.mxu0 0.0
  %2225 = vmatpush2.msra.mxu0 0.0
  %2226 = vmatprep.subr.mxu0 0.0
  %2227 = vmatpush2.msra.mxu0 0.0
  %2228 = vmatprep.subr.mxu0 0.0
  %2229 = vmatpush2.msra.mxu0 0.0
  %2230 = vmatprep.mubr.f32.mxu0 0.0
  %2231 = vmatmul.mubr.f32.gmra.mxu0 %v2164
  %v2232 = vpop.f32.mrf.mxu0
  %v2233 = vadd.f32 0.0, %v2232
  %v2234 = vpop.f32.mrf.mxu0
  %2235 = vdwg.mxu0
  %2236 = vst.msk [vmem:[#allocation2] sm:$0xff] %vm208, %v2233
  %2237 = vrot.lane.b32.xlu0 %v2062, 120
  %v2238 = vpop.permute.xlu0 %2237
  %2239 = vrot.lane.b32.xlu0 %v2062, 88
  %v2240 = vpop.permute.xlu0 %2239
  %v2241 = vsel %vm208, %v2238, 0
  %v2243 = vsel %vm208, %v2240, 0
  %2245 = vmatprep.subr.mxu0 0.0
  %2246 = vmatpush1.xpose.msra.mxu0 0.0
  %2247 = vmatprep.subr.mxu0 0.0
  %2248 = vmatpush1.xpose.msra.mxu0 0.0
  %2249 = vmatprep.subr.mxu0 0.0
  %2250 = vmatpush1.xpose.msra.mxu0 0.0
  %2251 = vmatprep.subr.mxu0 0.0
  %2252 = vmatpush1.xpose.msra.mxu0 0.0
  %2253 = vmatprep.subr.mxu0 0.0
  %2254 = vmatpush1.xpose.msra.mxu0 0.0
  %2255 = vmatprep.subr.mxu0 0.0
  %2256 = vmatpush1.xpose.msra.mxu0 0.0
  %2257 = vmatprep.subr.mxu0 0.0
  %2258 = vmatpush1.xpose.msra.mxu0 0.0
  %2259 = vmatprep.subr.mxu0 0.0
  %2260 = vmatpush1.xpose.msra.mxu0 0.0
  %2261 = vmatprep.subr.mxu0 0.0
  %2262 = vmatpush1.xpose.msra.mxu0 0.0
  %2263 = vmatprep.subr.mxu0 0.0
  %2264 = vmatpush1.xpose.msra.mxu0 0.0
  %2265 = vmatprep.subr.mxu0 0.0
  %2266 = vmatpush1.xpose.msra.mxu0 0.0
  %2267 = vmatprep.subr.mxu0 0.0
  %2268 = vmatpush1.xpose.msra.mxu0 0.0
  %2269 = vmatprep.subr.mxu0 0.0
  %2270 = vmatpush1.xpose.msra.mxu0 0.0
  %2271 = vmatprep.subr.mxu0 0.0
  %2272 = vmatpush1.xpose.msra.mxu0 0.0
  %2273 = vmatprep.subr.mxu0 0.0
  %2274 = vmatpush1.xpose.msra.mxu0 0.0
  %2275 = vmatprep.subr.mxu0 0.0
  %2276 = vmatpush1.xpose.msra.mxu0 %v2243
  %2277 = vmatprep.subr.mxu0 0.0
  %2278 = vmatpush2.xpose.msra.mxu0 0.0
  %2279 = vmatprep.subr.mxu0 0.0
  %2280 = vmatpush2.xpose.msra.mxu0 0.0
  %2281 = vmatprep.subr.mxu0 0.0
  %2282 = vmatpush2.xpose.msra.mxu0 0.0
  %2283 = vmatprep.subr.mxu0 0.0
  %2284 = vmatpush2.xpose.msra.mxu0 0.0
  %2285 = vmatprep.subr.mxu0 0.0
  %2286 = vmatpush2.xpose.msra.mxu0 0.0
  %2287 = vmatprep.subr.mxu0 0.0
  %2288 = vmatpush2.xpose.msra.mxu0 0.0
  %2289 = vmatprep.subr.mxu0 0.0
  %2290 = vmatpush2.xpose.msra.mxu0 0.0
  %2291 = vmatprep.subr.mxu0 0.0
  %2292 = vmatpush2.xpose.msra.mxu0 0.0
  %2293 = vmatprep.subr.mxu0 0.0
  %2294 = vmatpush2.xpose.msra.mxu0 0.0
  %2295 = vmatprep.subr.mxu0 0.0
  %2296 = vmatpush2.xpose.msra.mxu0 0.0
  %2297 = vmatprep.subr.mxu0 0.0
  %2298 = vmatpush2.xpose.msra.mxu0 0.0
  %2299 = vmatprep.subr.mxu0 0.0
  %2300 = vmatpush2.xpose.msra.mxu0 0.0
  %2301 = vmatprep.subr.mxu0 0.0
  %2302 = vmatpush2.xpose.msra.mxu0 0.0
  %2303 = vmatprep.subr.mxu0 0.0
  %2304 = vmatpush2.xpose.msra.mxu0 0.0
  %2305 = vmatprep.subr.mxu0 0.0
  %2306 = vmatpush2.xpose.msra.mxu0 0.0
  %2307 = vmatprep.subr.mxu0 0.0
  %2308 = vmatpush2.xpose.msra.mxu0 0.0
  %2309 = vmatprep.mubr.f32.mxu0 0.0
  %2310 = vmatmul.mubr.f32.gmra.mxu0 %v2241
  %v2311 = vpop.f32.mrf.mxu0
  %v2312 = vadd.f32 0.0, %v2311
  %v2313 = vpop.f32.mrf.mxu0
  %2314 = vdwg.mxu0
  %v2315 = vmul.f32 %v2312, 0.35355338
  %v2316 = vadd.f32 %v2315, %v287
  %v2317 = vsel %vm208, %v2316, -inf
  %2318 = vmax.xlane.f32.xlu0 %v2317
  %v2319 = vpop.xlane.xlu0 %2318
  %v2320 = vsub.f32 %v2316, %v2319
  %v2321 = vmul.f32 %v2320, 1.442695
  %v2322 = vpow.pop %v2321
  %v2323 = vsel %vm208, %v2322, 0.0
  %2324 = vadd.xlane.f32.xlu0 %v2323
  %v2325 = vpop.xlane.xlu0 %2324
  %v2326 = vrcp.pop %v2325
  %v2327 = vmul.f32 %v2322, %v2326
  %2328 = vrot.lane.b32.xlu0 %v2062, 56
  %v2329 = vpop.permute.xlu0 %2328
  %v2332 = vsel %vm208, %v2327, 0
  %2334 = vmatprep.subr.mxu0 0.0
  %2335 = vmatpush1.msra.mxu0 0.0
  %2336 = vmatprep.subr.mxu0 0.0
  %2337 = vmatpush1.msra.mxu0 0.0
  %2338 = vmatprep.subr.mxu0 0.0
  %2339 = vmatpush1.msra.mxu0 0.0
  %2340 = vmatprep.subr.mxu0 0.0
  %2341 = vmatpush1.msra.mxu0 0.0
  %2342 = vmatprep.subr.mxu0 0.0
  %2343 = vmatpush1.msra.mxu0 0.0
  %2344 = vmatprep.subr.mxu0 0.0
  %2345 = vmatpush1.msra.mxu0 0.0
  %2346 = vmatprep.subr.mxu0 0.0
  %2347 = vmatpush1.msra.mxu0 0.0
  %2348 = vmatprep.subr.mxu0 0.0
  %2349 = vmatpush1.msra.mxu0 0.0
  %2350 = vmatprep.subr.mxu0 0.0
  %2351 = vmatpush1.msra.mxu0 0.0
  %2352 = vmatprep.subr.mxu0 0.0
  %2353 = vmatpush1.msra.mxu0 0.0
  %2354 = vmatprep.subr.mxu0 0.0
  %2355 = vmatpush1.msra.mxu0 0.0
  %2356 = vmatprep.subr.mxu0 0.0
  %2357 = vmatpush1.msra.mxu0 0.0
  %2358 = vmatprep.subr.mxu0 0.0
  %2359 = vmatpush1.msra.mxu0 0.0
  %2360 = vmatprep.subr.mxu0 0.0
  %2361 = vmatpush1.msra.mxu0 0.0
  %2362 = vmatprep.subr.mxu0 0.0
  %2363 = vmatpush1.msra.mxu0 0.0
  %2364 = vmatprep.subr.mxu0 0.0
  %2365 = vmatpush1.msra.mxu0 %v2329
  %2366 = vmatprep.subr.mxu0 0.0
  %2367 = vmatpush2.msra.mxu0 0.0
  %2368 = vmatprep.subr.mxu0 0.0
  %2369 = vmatpush2.msra.mxu0 0.0
  %2370 = vmatprep.subr.mxu0 0.0
  %2371 = vmatpush2.msra.mxu0 0.0
  %2372 = vmatprep.subr.mxu0 0.0
  %2373 = vmatpush2.msra.mxu0 0.0
  %2374 = vmatprep.subr.mxu0 0.0
  %2375 = vmatpush2.msra.mxu0 0.0
  %2376 = vmatprep.subr.mxu0 0.0
  %2377 = vmatpush2.msra.mxu0 0.0
  %2378 = vmatprep.subr.mxu0 0.0
  %2379 = vmatpush2.msra.mxu0 0.0
  %2380 = vmatprep.subr.mxu0 0.0
  %2381 = vmatpush2.msra.mxu0 0.0
  %2382 = vmatprep.subr.mxu0 0.0
  %2383 = vmatpush2.msra.mxu0 0.0
  %2384 = vmatprep.subr.mxu0 0.0
  %2385 = vmatpush2.msra.mxu0 0.0
  %2386 = vmatprep.subr.mxu0 0.0
  %2387 = vmatpush2.msra.mxu0 0.0
  %2388 = vmatprep.subr.mxu0 0.0
  %2389 = vmatpush2.msra.mxu0 0.0
  %2390 = vmatprep.subr.mxu0 0.0
  %2391 = vmatpush2.msra.mxu0 0.0
  %2392 = vmatprep.subr.mxu0 0.0
  %2393 = vmatpush2.msra.mxu0 0.0
  %2394 = vmatprep.subr.mxu0 0.0
  %2395 = vmatpush2.msra.mxu0 0.0
  %2396 = vmatprep.subr.mxu0 0.0
  %2397 = vmatpush2.msra.mxu0 0.0
  %2398 = vmatprep.mubr.f32.mxu0 0.0
  %2399 = vmatmul.mubr.f32.gmra.mxu0 %v2332
  %v2400 = vpop.f32.mrf.mxu0
  %v2401 = vadd.f32 0.0, %v2400
  %v2402 = vpop.f32.mrf.mxu0
  %2403 = vdwg.mxu0
  %2405 = vrot.lane.b32.xlu0 %v2401, 8
  %v2406 = vpop.permute.xlu0 %2405
  %2408 = vst.msk [vmem:[#allocation2] sm:$0xff] %vm548, %v2406
  %2409 = vrot.lane.b32.xlu0 %v2062, 112
  %v2410 = vpop.permute.xlu0 %2409
  %2411 = vrot.lane.b32.xlu0 %v2062, 80
  %v2412 = vpop.permute.xlu0 %2411
  %v2413 = vsel %vm208, %v2410, 0
  %v2415 = vsel %vm208, %v2412, 0
  %2417 = vmatprep.subr.mxu0 0.0
  %2418 = vmatpush1.xpose.msra.mxu0 0.0
  %2419 = vmatprep.subr.mxu0 0.0
  %2420 = vmatpush1.xpose.msra.mxu0 0.0
  %2421 = vmatprep.subr.mxu0 0.0
  %2422 = vmatpush1.xpose.msra.mxu0 0.0
  %2423 = vmatprep.subr.mxu0 0.0
  %2424 = vmatpush1.xpose.msra.mxu0 0.0
  %2425 = vmatprep.subr.mxu0 0.0
  %2426 = vmatpush1.xpose.msra.mxu0 0.0
  %2427 = vmatprep.subr.mxu0 0.0
  %2428 = vmatpush1.xpose.msra.mxu0 0.0
  %2429 = vmatprep.subr.mxu0 0.0
  %2430 = vmatpush1.xpose.msra.mxu0 0.0
  %2431 = vmatprep.subr.mxu0 0.0
  %2432 = vmatpush1.xpose.msra.mxu0 0.0
  %2433 = vmatprep.subr.mxu0 0.0
  %2434 = vmatpush1.xpose.msra.mxu0 0.0
  %2435 = vmatprep.subr.mxu0 0.0
  %2436 = vmatpush1.xpose.msra.mxu0 0.0
  %2437 = vmatprep.subr.mxu0 0.0
  %2438 = vmatpush1.xpose.msra.mxu0 0.0
  %2439 = vmatprep.subr.mxu0 0.0
  %2440 = vmatpush1.xpose.msra.mxu0 0.0
  %2441 = vmatprep.subr.mxu0 0.0
  %2442 = vmatpush1.xpose.msra.mxu0 0.0
  %2443 = vmatprep.subr.mxu0 0.0
  %2444 = vmatpush1.xpose.msra.mxu0 0.0
  %2445 = vmatprep.subr.mxu0 0.0
  %2446 = vmatpush1.xpose.msra.mxu0 0.0
  %2447 = vmatprep.subr.mxu0 0.0
  %2448 = vmatpush1.xpose.msra.mxu0 %v2415
  %2449 = vmatprep.subr.mxu0 0.0
  %2450 = vmatpush2.xpose.msra.mxu0 0.0
  %2451 = vmatprep.subr.mxu0 0.0
  %2452 = vmatpush2.xpose.msra.mxu0 0.0
  %2453 = vmatprep.subr.mxu0 0.0
  %2454 = vmatpush2.xpose.msra.mxu0 0.0
  %2455 = vmatprep.subr.mxu0 0.0
  %2456 = vmatpush2.xpose.msra.mxu0 0.0
  %2457 = vmatprep.subr.mxu0 0.0
  %2458 = vmatpush2.xpose.msra.mxu0 0.0
  %2459 = vmatprep.subr.mxu0 0.0
  %2460 = vmatpush2.xpose.msra.mxu0 0.0
  %2461 = vmatprep.subr.mxu0 0.0
  %2462 = vmatpush2.xpose.msra.mxu0 0.0
  %2463 = vmatprep.subr.mxu0 0.0
  %2464 = vmatpush2.xpose.msra.mxu0 0.0
  %2465 = vmatprep.subr.mxu0 0.0
  %2466 = vmatpush2.xpose.msra.mxu0 0.0
  %2467 = vmatprep.subr.mxu0 0.0
  %2468 = vmatpush2.xpose.msra.mxu0 0.0
  %2469 = vmatprep.subr.mxu0 0.0
  %2470 = vmatpush2.xpose.msra.mxu0 0.0
  %2471 = vmatprep.subr.mxu0 0.0
  %2472 = vmatpush2.xpose.msra.mxu0 0.0
  %2473 = vmatprep.subr.mxu0 0.0
  %2474 = vmatpush2.xpose.msra.mxu0 0.0
  %2475 = vmatprep.subr.mxu0 0.0
  %2476 = vmatpush2.xpose.msra.mxu0 0.0
  %2477 = vmatprep.subr.mxu0 0.0
  %2478 = vmatpush2.xpose.msra.mxu0 0.0
  %2479 = vmatprep.subr.mxu0 0.0
  %2480 = vmatpush2.xpose.msra.mxu0 0.0
  %2481 = vmatprep.mubr.f32.mxu0 0.0
  %2482 = vmatmul.mubr.f32.gmra.mxu0 %v2413
  %v2483 = vpop.f32.mrf.mxu0
  %v2484 = vadd.f32 0.0, %v2483
  %v2485 = vpop.f32.mrf.mxu0
  %2486 = vdwg.mxu0
  %v2487 = vmul.f32 %v2484, 0.35355338
  %v2488 = vadd.f32 %v2487, %v287
  %v2489 = vsel %vm208, %v2488, -inf
  %2490 = vmax.xlane.f32.xlu0 %v2489
  %v2491 = vpop.xlane.xlu0 %2490
  %v2492 = vsub.f32 %v2488, %v2491
  %v2493 = vmul.f32 %v2492, 1.442695
  %v2494 = vpow.pop %v2493
  %v2495 = vsel %vm208, %v2494, 0.0
  %2496 = vadd.xlane.f32.xlu0 %v2495
  %v2497 = vpop.xlane.xlu0 %2496
  %v2498 = vrcp.pop %v2497
  %v2499 = vmul.f32 %v2494, %v2498
  %2500 = vrot.lane.b32.xlu0 %v2062, 48
  %v2501 = vpop.permute.xlu0 %2500
  %v2504 = vsel %vm208, %v2499, 0
  %2506 = vmatprep.subr.mxu0 0.0
  %2507 = vmatpush1.msra.mxu0 0.0
  %2508 = vmatprep.subr.mxu0 0.0
  %2509 = vmatpush1.msra.mxu0 0.0
  %2510 = vmatprep.subr.mxu0 0.0
  %2511 = vmatpush1.msra.mxu0 0.0
  %2512 = vmatprep.subr.mxu0 0.0
  %2513 = vmatpush1.msra.mxu0 0.0
  %2514 = vmatprep.subr.mxu0 0.0
  %2515 = vmatpush1.msra.mxu0 0.0
  %2516 = vmatprep.subr.mxu0 0.0
  %2517 = vmatpush1.msra.mxu0 0.0
  %2518 = vmatprep.subr.mxu0 0.0
  %2519 = vmatpush1.msra.mxu0 0.0
  %2520 = vmatprep.subr.mxu0 0.0
  %2521 = vmatpush1.msra.mxu0 0.0
  %2522 = vmatprep.subr.mxu0 0.0
  %2523 = vmatpush1.msra.mxu0 0.0
  %2524 = vmatprep.subr.mxu0 0.0
  %2525 = vmatpush1.msra.mxu0 0.0
  %2526 = vmatprep.subr.mxu0 0.0
  %2527 = vmatpush1.msra.mxu0 0.0
  %2528 = vmatprep.subr.mxu0 0.0
  %2529 = vmatpush1.msra.mxu0 0.0
  %2530 = vmatprep.subr.mxu0 0.0
  %2531 = vmatpush1.msra.mxu0 0.0
  %2532 = vmatprep.subr.mxu0 0.0
  %2533 = vmatpush1.msra.mxu0 0.0
  %2534 = vmatprep.subr.mxu0 0.0
  %2535 = vmatpush1.msra.mxu0 0.0
  %2536 = vmatprep.subr.mxu0 0.0
  %2537 = vmatpush1.msra.mxu0 %v2501
  %2538 = vmatprep.subr.mxu0 0.0
  %2539 = vmatpush2.msra.mxu0 0.0
  %2540 = vmatprep.subr.mxu0 0.0
  %2541 = vmatpush2.msra.mxu0 0.0
  %2542 = vmatprep.subr.mxu0 0.0
  %2543 = vmatpush2.msra.mxu0 0.0
  %2544 = vmatprep.subr.mxu0 0.0
  %2545 = vmatpush2.msra.mxu0 0.0
  %2546 = vmatprep.subr.mxu0 0.0
  %2547 = vmatpush2.msra.mxu0 0.0
  %2548 = vmatprep.subr.mxu0 0.0
  %2549 = vmatpush2.msra.mxu0 0.0
  %2550 = vmatprep.subr.mxu0 0.0
  %2551 = vmatpush2.msra.mxu0 0.0
  %2552 = vmatprep.subr.mxu0 0.0
  %2553 = vmatpush2.msra.mxu0 0.0
  %2554 = vmatprep.subr.mxu0 0.0
  %2555 = vmatpush2.msra.mxu0 0.0
  %2556 = vmatprep.subr.mxu0 0.0
  %2557 = vmatpush2.msra.mxu0 0.0
  %2558 = vmatprep.subr.mxu0 0.0
  %2559 = vmatpush2.msra.mxu0 0.0
  %2560 = vmatprep.subr.mxu0 0.0
  %2561 = vmatpush2.msra.mxu0 0.0
  %2562 = vmatprep.subr.mxu0 0.0
  %2563 = vmatpush2.msra.mxu0 0.0
  %2564 = vmatprep.subr.mxu0 0.0
  %2565 = vmatpush2.msra.mxu0 0.0
  %2566 = vmatprep.subr.mxu0 0.0
  %2567 = vmatpush2.msra.mxu0 0.0
  %2568 = vmatprep.subr.mxu0 0.0
  %2569 = vmatpush2.msra.mxu0 0.0
  %2570 = vmatprep.mubr.f32.mxu0 0.0
  %2571 = vmatmul.mubr.f32.gmra.mxu0 %v2504
  %v2572 = vpop.f32.mrf.mxu0
  %v2573 = vadd.f32 0.0, %v2572
  %v2574 = vpop.f32.mrf.mxu0
  %2575 = vdwg.mxu0
  %2577 = vrot.lane.b32.xlu0 %v2573, 16
  %v2578 = vpop.permute.xlu0 %2577
  %2580 = vst.msk [vmem:[#allocation2] sm:$0xff] %vm721, %v2578
  %2581 = vrot.lane.b32.xlu0 %v2062, 104
  %v2582 = vpop.permute.xlu0 %2581
  %2583 = vrot.lane.b32.xlu0 %v2062, 72
  %v2584 = vpop.permute.xlu0 %2583
  %v2585 = vsel %vm208, %v2582, 0
  %v2587 = vsel %vm208, %v2584, 0
  %2589 = vmatprep.subr.mxu0 0.0
  %2590 = vmatpush1.xpose.msra.mxu0 0.0
  %2591 = vmatprep.subr.mxu0 0.0
  %2592 = vmatpush1.xpose.msra.mxu0 0.0
  %2593 = vmatprep.subr.mxu0 0.0
  %2594 = vmatpush1.xpose.msra.mxu0 0.0
  %2595 = vmatprep.subr.mxu0 0.0
  %2596 = vmatpush1.xpose.msra.mxu0 0.0
  %2597 = vmatprep.subr.mxu0 0.0
  %2598 = vmatpush1.xpose.msra.mxu0 0.0
  %2599 = vmatprep.subr.mxu0 0.0
  %2600 = vmatpush1.xpose.msra.mxu0 0.0
  %2601 = vmatprep.subr.mxu0 0.0
  %2602 = vmatpush1.xpose.msra.mxu0 0.0
  %2603 = vmatprep.subr.mxu0 0.0
  %2604 = vmatpush1.xpose.msra.mxu0 0.0
  %2605 = vmatprep.subr.mxu0 0.0
  %2606 = vmatpush1.xpose.msra.mxu0 0.0
  %2607 = vmatprep.subr.mxu0 0.0
  %2608 = vmatpush1.xpose.msra.mxu0 0.0
  %2609 = vmatprep.subr.mxu0 0.0
  %2610 = vmatpush1.xpose.msra.mxu0 0.0
  %2611 = vmatprep.subr.mxu0 0.0
  %2612 = vmatpush1.xpose.msra.mxu0 0.0
  %2613 = vmatprep.subr.mxu0 0.0
  %2614 = vmatpush1.xpose.msra.mxu0 0.0
  %2615 = vmatprep.subr.mxu0 0.0
  %2616 = vmatpush1.xpose.msra.mxu0 0.0
  %2617 = vmatprep.subr.mxu0 0.0
  %2618 = vmatpush1.xpose.msra.mxu0 0.0
  %2619 = vmatprep.subr.mxu0 0.0
  %2620 = vmatpush1.xpose.msra.mxu0 %v2587
  %2621 = vmatprep.subr.mxu0 0.0
  %2622 = vmatpush2.xpose.msra.mxu0 0.0
  %2623 = vmatprep.subr.mxu0 0.0
  %2624 = vmatpush2.xpose.msra.mxu0 0.0
  %2625 = vmatprep.subr.mxu0 0.0
  %2626 = vmatpush2.xpose.msra.mxu0 0.0
  %2627 = vmatprep.subr.mxu0 0.0
  %2628 = vmatpush2.xpose.msra.mxu0 0.0
  %2629 = vmatprep.subr.mxu0 0.0
  %2630 = vmatpush2.xpose.msra.mxu0 0.0
  %2631 = vmatprep.subr.mxu0 0.0
  %2632 = vmatpush2.xpose.msra.mxu0 0.0
  %2633 = vmatprep.subr.mxu0 0.0
  %2634 = vmatpush2.xpose.msra.mxu0 0.0
  %2635 = vmatprep.subr.mxu0 0.0
  %2636 = vmatpush2.xpose.msra.mxu0 0.0
  %2637 = vmatprep.subr.mxu0 0.0
  %2638 = vmatpush2.xpose.msra.mxu0 0.0
  %2639 = vmatprep.subr.mxu0 0.0
  %2640 = vmatpush2.xpose.msra.mxu0 0.0
  %2641 = vmatprep.subr.mxu0 0.0
  %2642 = vmatpush2.xpose.msra.mxu0 0.0
  %2643 = vmatprep.subr.mxu0 0.0
  %2644 = vmatpush2.xpose.msra.mxu0 0.0
  %2645 = vmatprep.subr.mxu0 0.0
  %2646 = vmatpush2.xpose.msra.mxu0 0.0
  %2647 = vmatprep.subr.mxu0 0.0
  %2648 = vmatpush2.xpose.msra.mxu0 0.0
  %2649 = vmatprep.subr.mxu0 0.0
  %2650 = vmatpush2.xpose.msra.mxu0 0.0
  %2651 = vmatprep.subr.mxu0 0.0
  %2652 = vmatpush2.xpose.msra.mxu0 0.0
  %2653 = vmatprep.mubr.f32.mxu0 0.0
  %2654 = vmatmul.mubr.f32.gmra.mxu0 %v2585
  %v2655 = vpop.f32.mrf.mxu0
  %v2656 = vadd.f32 0.0, %v2655
  %v2657 = vpop.f32.mrf.mxu0
  %2658 = vdwg.mxu0
  %v2659 = vmul.f32 %v2656, 0.35355338
  %v2660 = vadd.f32 %v2659, %v287
  %v2661 = vsel %vm208, %v2660, -inf
  %2662 = vmax.xlane.f32.xlu0 %v2661
  %v2663 = vpop.xlane.xlu0 %2662
  %v2664 = vsub.f32 %v2660, %v2663
  %v2665 = vmul.f32 %v2664, 1.442695
  %v2666 = vpow.pop %v2665
  %v2667 = vsel %vm208, %v2666, 0.0
  %2668 = vadd.xlane.f32.xlu0 %v2667
  %v2669 = vpop.xlane.xlu0 %2668
  %v2670 = vrcp.pop %v2669
  %v2671 = vmul.f32 %v2666, %v2670
  %2672 = vrot.lane.b32.xlu0 %v2062, 40
  %v2673 = vpop.permute.xlu0 %2672
  %v2676 = vsel %vm208, %v2671, 0
  %2678 = vmatprep.subr.mxu0 0.0
  %2679 = vmatpush1.msra.mxu0 0.0
  %2680 = vmatprep.subr.mxu0 0.0
  %2681 = vmatpush1.msra.mxu0 0.0
  %2682 = vmatprep.subr.mxu0 0.0
  %2683 = vmatpush1.msra.mxu0 0.0
  %2684 = vmatprep.subr.mxu0 0.0
  %2685 = vmatpush1.msra.mxu0 0.0
  %2686 = vmatprep.subr.mxu0 0.0
  %2687 = vmatpush1.msra.mxu0 0.0
  %2688 = vmatprep.subr.mxu0 0.0
  %2689 = vmatpush1.msra.mxu0 0.0
  %2690 = vmatprep.subr.mxu0 0.0
  %2691 = vmatpush1.msra.mxu0 0.0
  %2692 = vmatprep.subr.mxu0 0.0
  %2693 = vmatpush1.msra.mxu0 0.0
  %2694 = vmatprep.subr.mxu0 0.0
  %2695 = vmatpush1.msra.mxu0 0.0
  %2696 = vmatprep.subr.mxu0 0.0
  %2697 = vmatpush1.msra.mxu0 0.0
  %2698 = vmatprep.subr.mxu0 0.0
  %2699 = vmatpush1.msra.mxu0 0.0
  %2700 = vmatprep.subr.mxu0 0.0
  %2701 = vmatpush1.msra.mxu0 0.0
  %2702 = vmatprep.subr.mxu0 0.0
  %2703 = vmatpush1.msra.mxu0 0.0
  %2704 = vmatprep.subr.mxu0 0.0
  %2705 = vmatpush1.msra.mxu0 0.0
  %2706 = vmatprep.subr.mxu0 0.0
  %2707 = vmatpush1.msra.mxu0 0.0
  %2708 = vmatprep.subr.mxu0 0.0
  %2709 = vmatpush1.msra.mxu0 %v2673
  %2710 = vmatprep.subr.mxu0 0.0
  %2711 = vmatpush2.msra.mxu0 0.0
  %2712 = vmatprep.subr.mxu0 0.0
  %2713 = vmatpush2.msra.mxu0 0.0
  %2714 = vmatprep.subr.mxu0 0.0
  %2715 = vmatpush2.msra.mxu0 0.0
  %2716 = vmatprep.subr.mxu0 0.0
  %2717 = vmatpush2.msra.mxu0 0.0
  %2718 = vmatprep.subr.mxu0 0.0
  %2719 = vmatpush2.msra.mxu0 0.0
  %2720 = vmatprep.subr.mxu0 0.0
  %2721 = vmatpush2.msra.mxu0 0.0
  %2722 = vmatprep.subr.mxu0 0.0
  %2723 = vmatpush2.msra.mxu0 0.0
  %2724 = vmatprep.subr.mxu0 0.0
  %2725 = vmatpush2.msra.mxu0 0.0
  %2726 = vmatprep.subr.mxu0 0.0
  %2727 = vmatpush2.msra.mxu0 0.0
  %2728 = vmatprep.subr.mxu0 0.0
  %2729 = vmatpush2.msra.mxu0 0.0
  %2730 = vmatprep.subr.mxu0 0.0
  %2731 = vmatpush2.msra.mxu0 0.0
  %2732 = vmatprep.subr.mxu0 0.0
  %2733 = vmatpush2.msra.mxu0 0.0
  %2734 = vmatprep.subr.mxu0 0.0
  %2735 = vmatpush2.msra.mxu0 0.0
  %2736 = vmatprep.subr.mxu0 0.0
  %2737 = vmatpush2.msra.mxu0 0.0
  %2738 = vmatprep.subr.mxu0 0.0
  %2739 = vmatpush2.msra.mxu0 0.0
  %2740 = vmatprep.subr.mxu0 0.0
  %2741 = vmatpush2.msra.mxu0 0.0
  %2742 = vmatprep.mubr.f32.mxu0 0.0
  %2743 = vmatmul.mubr.f32.gmra.mxu0 %v2676
  %v2744 = vpop.f32.mrf.mxu0
  %v2745 = vadd.f32 0.0, %v2744
  %v2746 = vpop.f32.mrf.mxu0
  %2747 = vdwg.mxu0
  %2749 = vrot.lane.b32.xlu0 %v2745, 24
  %v2750 = vpop.permute.xlu0 %2749
  %2752 = vst.msk [vmem:[#allocation2] sm:$0xff] %vm894, %v2750
  %2754 = vrot.lane.b32.xlu0 %v2067, 96
  %v2755 = vpop.permute.xlu0 %2754
  %v2756 = vsel %vm208, %v2067, 0
  %v2758 = vsel %vm208, %v2755, 0
  %2760 = vmatprep.subr.mxu0 0.0
  %2761 = vmatpush1.xpose.msra.mxu0 0.0
  %2762 = vmatprep.subr.mxu0 0.0
  %2763 = vmatpush1.xpose.msra.mxu0 0.0
  %2764 = vmatprep.subr.mxu0 0.0
  %2765 = vmatpush1.xpose.msra.mxu0 0.0
  %2766 = vmatprep.subr.mxu0 0.0
  %2767 = vmatpush1.xpose.msra.mxu0 0.0
  %2768 = vmatprep.subr.mxu0 0.0
  %2769 = vmatpush1.xpose.msra.mxu0 0.0
  %2770 = vmatprep.subr.mxu0 0.0
  %2771 = vmatpush1.xpose.msra.mxu0 0.0
  %2772 = vmatprep.subr.mxu0 0.0
  %2773 = vmatpush1.xpose.msra.mxu0 0.0
  %2774 = vmatprep.subr.mxu0 0.0
  %2775 = vmatpush1.xpose.msra.mxu0 0.0
  %2776 = vmatprep.subr.mxu0 0.0
  %2777 = vmatpush1.xpose.msra.mxu0 0.0
  %2778 = vmatprep.subr.mxu0 0.0
  %2779 = vmatpush1.xpose.msra.mxu0 0.0
  %2780 = vmatprep.subr.mxu0 0.0
  %2781 = vmatpush1.xpose.msra.mxu0 0.0
  %2782 = vmatprep.subr.mxu0 0.0
  %2783 = vmatpush1.xpose.msra.mxu0 0.0
  %2784 = vmatprep.subr.mxu0 0.0
  %2785 = vmatpush1.xpose.msra.mxu0 0.0
  %2786 = vmatprep.subr.mxu0 0.0
  %2787 = vmatpush1.xpose.msra.mxu0 0.0
  %2788 = vmatprep.subr.mxu0 0.0
  %2789 = vmatpush1.xpose.msra.mxu0 0.0
  %2790 = vmatprep.subr.mxu0 0.0
  %2791 = vmatpush1.xpose.msra.mxu0 %v2758
  %2792 = vmatprep.subr.mxu0 0.0
  %2793 = vmatpush2.xpose.msra.mxu0 0.0
  %2794 = vmatprep.subr.mxu0 0.0
  %2795 = vmatpush2.xpose.msra.mxu0 0.0
  %2796 = vmatprep.subr.mxu0 0.0
  %2797 = vmatpush2.xpose.msra.mxu0 0.0
  %2798 = vmatprep.subr.mxu0 0.0
  %2799 = vmatpush2.xpose.msra.mxu0 0.0
  %2800 = vmatprep.subr.mxu0 0.0
  %2801 = vmatpush2.xpose.msra.mxu0 0.0
  %2802 = vmatprep.subr.mxu0 0.0
  %2803 = vmatpush2.xpose.msra.mxu0 0.0
  %2804 = vmatprep.subr.mxu0 0.0
  %2805 = vmatpush2.xpose.msra.mxu0 0.0
  %2806 = vmatprep.subr.mxu0 0.0
  %2807 = vmatpush2.xpose.msra.mxu0 0.0
  %2808 = vmatprep.subr.mxu0 0.0
  %2809 = vmatpush2.xpose.msra.mxu0 0.0
  %2810 = vmatprep.subr.mxu0 0.0
  %2811 = vmatpush2.xpose.msra.mxu0 0.0
  %2812 = vmatprep.subr.mxu0 0.0
  %2813 = vmatpush2.xpose.msra.mxu0 0.0
  %2814 = vmatprep.subr.mxu0 0.0
  %2815 = vmatpush2.xpose.msra.mxu0 0.0
  %2816 = vmatprep.subr.mxu0 0.0
  %2817 = vmatpush2.xpose.msra.mxu0 0.0
  %2818 = vmatprep.subr.mxu0 0.0
  %2819 = vmatpush2.xpose.msra.mxu0 0.0
  %2820 = vmatprep.subr.mxu0 0.0
  %2821 = vmatpush2.xpose.msra.mxu0 0.0
  %2822 = vmatprep.subr.mxu0 0.0
  %2823 = vmatpush2.xpose.msra.mxu0 0.0
  %2824 = vmatprep.mubr.f32.mxu0 0.0
  %2825 = vmatmul.mubr.f32.gmra.mxu0 %v2756
  %v2826 = vpop.f32.mrf.mxu0
  %v2827 = vadd.f32 0.0, %v2826
  %v2828 = vpop.f32.mrf.mxu0
  %2829 = vdwg.mxu0
  %v2830 = vmul.f32 %v2827, 0.35355338
  %v2831 = vadd.f32 %v2830, %v977
  %v2832 = vsel %vm208, %v2831, -inf
  %2833 = vmax.xlane.f32.xlu0 %v2832
  %v2834 = vpop.xlane.xlu0 %2833
  %v2835 = vsub.f32 %v2831, %v2834
  %v2836 = vmul.f32 %v2835, 1.442695
  %v2837 = vpow.pop %v2836
  %v2838 = vsel %vm208, %v2837, 0.0
  %2839 = vadd.xlane.f32.xlu0 %v2838
  %v2840 = vpop.xlane.xlu0 %2839
  %v2841 = vrcp.pop %v2840
  %v2842 = vmul.f32 %v2837, %v2841
  %2843 = vrot.lane.b32.xlu0 %v2067, 64
  %v2844 = vpop.permute.xlu0 %2843
  %v2847 = vsel %vm208, %v2842, 0
  %2849 = vmatprep.subr.mxu0 0.0
  %2850 = vmatpush1.msra.mxu0 0.0
  %2851 = vmatprep.subr.mxu0 0.0
  %2852 = vmatpush1.msra.mxu0 0.0
  %2853 = vmatprep.subr.mxu0 0.0
  %2854 = vmatpush1.msra.mxu0 0.0
  %2855 = vmatprep.subr.mxu0 0.0
  %2856 = vmatpush1.msra.mxu0 0.0
  %2857 = vmatprep.subr.mxu0 0.0
  %2858 = vmatpush1.msra.mxu0 0.0
  %2859 = vmatprep.subr.mxu0 0.0
  %2860 = vmatpush1.msra.mxu0 0.0
  %2861 = vmatprep.subr.mxu0 0.0
  %2862 = vmatpush1.msra.mxu0 0.0
  %2863 = vmatprep.subr.mxu0 0.0
  %2864 = vmatpush1.msra.mxu0 0.0
  %2865 = vmatprep.subr.mxu0 0.0
  %2866 = vmatpush1.msra.mxu0 0.0
  %2867 = vmatprep.subr.mxu0 0.0
  %2868 = vmatpush1.msra.mxu0 0.0
  %2869 = vmatprep.subr.mxu0 0.0
  %2870 = vmatpush1.msra.mxu0 0.0
  %2871 = vmatprep.subr.mxu0 0.0
  %2872 = vmatpush1.msra.mxu0 0.0
  %2873 = vmatprep.subr.mxu0 0.0
  %2874 = vmatpush1.msra.mxu0 0.0
  %2875 = vmatprep.subr.mxu0 0.0
  %2876 = vmatpush1.msra.mxu0 0.0
  %2877 = vmatprep.subr.mxu0 0.0
  %2878 = vmatpush1.msra.mxu0 0.0
  %2879 = vmatprep.subr.mxu0 0.0
  %2880 = vmatpush1.msra.mxu0 %v2844
  %2881 = vmatprep.subr.mxu0 0.0
  %2882 = vmatpush2.msra.mxu0 0.0
  %2883 = vmatprep.subr.mxu0 0.0
  %2884 = vmatpush2.msra.mxu0 0.0
  %2885 = vmatprep.subr.mxu0 0.0
  %2886 = vmatpush2.msra.mxu0 0.0
  %2887 = vmatprep.subr.mxu0 0.0
  %2888 = vmatpush2.msra.mxu0 0.0
  %2889 = vmatprep.subr.mxu0 0.0
  %2890 = vmatpush2.msra.mxu0 0.0
  %2891 = vmatprep.subr.mxu0 0.0
  %2892 = vmatpush2.msra.mxu0 0.0
  %2893 = vmatprep.subr.mxu0 0.0
  %2894 = vmatpush2.msra.mxu0 0.0
  %2895 = vmatprep.subr.mxu0 0.0
  %2896 = vmatpush2.msra.mxu0 0.0
  %2897 = vmatprep.subr.mxu0 0.0
  %2898 = vmatpush2.msra.mxu0 0.0
  %2899 = vmatprep.subr.mxu0 0.0
  %2900 = vmatpush2.msra.mxu0 0.0
  %2901 = vmatprep.subr.mxu0 0.0
  %2902 = vmatpush2.msra.mxu0 0.0
  %2903 = vmatprep.subr.mxu0 0.0
  %2904 = vmatpush2.msra.mxu0 0.0
  %2905 = vmatprep.subr.mxu0 0.0
  %2906 = vmatpush2.msra.mxu0 0.0
  %2907 = vmatprep.subr.mxu0 0.0
  %2908 = vmatpush2.msra.mxu0 0.0
  %2909 = vmatprep.subr.mxu0 0.0
  %2910 = vmatpush2.msra.mxu0 0.0
  %2911 = vmatprep.subr.mxu0 0.0
  %2912 = vmatpush2.msra.mxu0 0.0
  %2913 = vmatprep.mubr.f32.mxu0 0.0
  %2914 = vmatmul.mubr.f32.gmra.mxu0 %v2847
  %v2915 = vpop.f32.mrf.mxu0
  %v2916 = vadd.f32 0.0, %v2915
  %v2917 = vpop.f32.mrf.mxu0
  %2918 = vdwg.mxu0
  %2919 = vst.msk [vmem:[#allocation2 + $0x8] sm:$0xff] %vm208, %v2916
  %2920 = vrot.lane.b32.xlu0 %v2067, 120
  %v2921 = vpop.permute.xlu0 %2920
  %2922 = vrot.lane.b32.xlu0 %v2067, 88
  %v2923 = vpop.permute.xlu0 %2922
  %v2924 = vsel %vm208, %v2921, 0
  %v2926 = vsel %vm208, %v2923, 0
  %2928 = vmatprep.subr.mxu0 0.0
  %2929 = vmatpush1.xpose.msra.mxu0 0.0
  %2930 = vmatprep.subr.mxu0 0.0
  %2931 = vmatpush1.xpose.msra.mxu0 0.0
  %2932 = vmatprep.subr.mxu0 0.0
  %2933 = vmatpush1.xpose.msra.mxu0 0.0
  %2934 = vmatprep.subr.mxu0 0.0
  %2935 = vmatpush1.xpose.msra.mxu0 0.0
  %2936 = vmatprep.subr.mxu0 0.0
  %2937 = vmatpush1.xpose.msra.mxu0 0.0
  %2938 = vmatprep.subr.mxu0 0.0
  %2939 = vmatpush1.xpose.msra.mxu0 0.0
  %2940 = vmatprep.subr.mxu0 0.0
  %2941 = vmatpush1.xpose.msra.mxu0 0.0
  %2942 = vmatprep.subr.mxu0 0.0
  %2943 = vmatpush1.xpose.msra.mxu0 0.0
  %2944 = vmatprep.subr.mxu0 0.0
  %2945 = vmatpush1.xpose.msra.mxu0 0.0
  %2946 = vmatprep.subr.mxu0 0.0
  %2947 = vmatpush1.xpose.msra.mxu0 0.0
  %2948 = vmatprep.subr.mxu0 0.0
  %2949 = vmatpush1.xpose.msra.mxu0 0.0
  %2950 = vmatprep.subr.mxu0 0.0
  %2951 = vmatpush1.xpose.msra.mxu0 0.0
  %2952 = vmatprep.subr.mxu0 0.0
  %2953 = vmatpush1.xpose.msra.mxu0 0.0
  %2954 = vmatprep.subr.mxu0 0.0
  %2955 = vmatpush1.xpose.msra.mxu0 0.0
  %2956 = vmatprep.subr.mxu0 0.0
  %2957 = vmatpush1.xpose.msra.mxu0 0.0
  %2958 = vmatprep.subr.mxu0 0.0
  %2959 = vmatpush1.xpose.msra.mxu0 %v2926
  %2960 = vmatprep.subr.mxu0 0.0
  %2961 = vmatpush2.xpose.msra.mxu0 0.0
  %2962 = vmatprep.subr.mxu0 0.0
  %2963 = vmatpush2.xpose.msra.mxu0 0.0
  %2964 = vmatprep.subr.mxu0 0.0
  %2965 = vmatpush2.xpose.msra.mxu0 0.0
  %2966 = vmatprep.subr.mxu0 0.0
  %2967 = vmatpush2.xpose.msra.mxu0 0.0
  %2968 = vmatprep.subr.mxu0 0.0
  %2969 = vmatpush2.xpose.msra.mxu0 0.0
  %2970 = vmatprep.subr.mxu0 0.0
  %2971 = vmatpush2.xpose.msra.mxu0 0.0
  %2972 = vmatprep.subr.mxu0 0.0
  %2973 = vmatpush2.xpose.msra.mxu0 0.0
  %2974 = vmatprep.subr.mxu0 0.0
  %2975 = vmatpush2.xpose.msra.mxu0 0.0
  %2976 = vmatprep.subr.mxu0 0.0
  %2977 = vmatpush2.xpose.msra.mxu0 0.0
  %2978 = vmatprep.subr.mxu0 0.0
  %2979 = vmatpush2.xpose.msra.mxu0 0.0
  %2980 = vmatprep.subr.mxu0 0.0
  %2981 = vmatpush2.xpose.msra.mxu0 0.0
  %2982 = vmatprep.subr.mxu0 0.0
  %2983 = vmatpush2.xpose.msra.mxu0 0.0
  %2984 = vmatprep.subr.mxu0 0.0
  %2985 = vmatpush2.xpose.msra.mxu0 0.0
  %2986 = vmatprep.subr.mxu0 0.0
  %2987 = vmatpush2.xpose.msra.mxu0 0.0
  %2988 = vmatprep.subr.mxu0 0.0
  %2989 = vmatpush2.xpose.msra.mxu0 0.0
  %2990 = vmatprep.subr.mxu0 0.0
  %2991 = vmatpush2.xpose.msra.mxu0 0.0
  %2992 = vmatprep.mubr.f32.mxu0 0.0
  %2993 = vmatmul.mubr.f32.gmra.mxu0 %v2924
  %v2994 = vpop.f32.mrf.mxu0
  %v2995 = vadd.f32 0.0, %v2994
  %v2996 = vpop.f32.mrf.mxu0
  %2997 = vdwg.mxu0
  %v2998 = vmul.f32 %v2995, 0.35355338
  %v2999 = vadd.f32 %v2998, %v977
  %v3000 = vsel %vm208, %v2999, -inf
  %3001 = vmax.xlane.f32.xlu0 %v3000
  %v3002 = vpop.xlane.xlu0 %3001
  %v3003 = vsub.f32 %v2999, %v3002
  %v3004 = vmul.f32 %v3003, 1.442695
  %v3005 = vpow.pop %v3004
  %v3006 = vsel %vm208, %v3005, 0.0
  %3007 = vadd.xlane.f32.xlu0 %v3006
  %v3008 = vpop.xlane.xlu0 %3007
  %v3009 = vrcp.pop %v3008
  %v3010 = vmul.f32 %v3005, %v3009
  %3011 = vrot.lane.b32.xlu0 %v2067, 56
  %v3012 = vpop.permute.xlu0 %3011
  %v3015 = vsel %vm208, %v3010, 0
  %3017 = vmatprep.subr.mxu0 0.0
  %3018 = vmatpush1.msra.mxu0 0.0
  %3019 = vmatprep.subr.mxu0 0.0
  %3020 = vmatpush1.msra.mxu0 0.0
  %3021 = vmatprep.subr.mxu0 0.0
  %3022 = vmatpush1.msra.mxu0 0.0
  %3023 = vmatprep.subr.mxu0 0.0
  %3024 = vmatpush1.msra.mxu0 0.0
  %3025 = vmatprep.subr.mxu0 0.0
  %3026 = vmatpush1.msra.mxu0 0.0
  %3027 = vmatprep.subr.mxu0 0.0
  %3028 = vmatpush1.msra.mxu0 0.0
  %3029 = vmatprep.subr.mxu0 0.0
  %3030 = vmatpush1.msra.mxu0 0.0
  %3031 = vmatprep.subr.mxu0 0.0
  %3032 = vmatpush1.msra.mxu0 0.0
  %3033 = vmatprep.subr.mxu0 0.0
  %3034 = vmatpush1.msra.mxu0 0.0
  %3035 = vmatprep.subr.mxu0 0.0
  %3036 = vmatpush1.msra.mxu0 0.0
  %3037 = vmatprep.subr.mxu0 0.0
  %3038 = vmatpush1.msra.mxu0 0.0
  %3039 = vmatprep.subr.mxu0 0.0
  %3040 = vmatpush1.msra.mxu0 0.0
  %3041 = vmatprep.subr.mxu0 0.0
  %3042 = vmatpush1.msra.mxu0 0.0
  %3043 = vmatprep.subr.mxu0 0.0
  %3044 = vmatpush1.msra.mxu0 0.0
  %3045 = vmatprep.subr.mxu0 0.0
  %3046 = vmatpush1.msra.mxu0 0.0
  %3047 = vmatprep.subr.mxu0 0.0
  %3048 = vmatpush1.msra.mxu0 %v3012
  %3049 = vmatprep.subr.mxu0 0.0
  %3050 = vmatpush2.msra.mxu0 0.0
  %3051 = vmatprep.subr.mxu0 0.0
  %3052 = vmatpush2.msra.mxu0 0.0
  %3053 = vmatprep.subr.mxu0 0.0
  %3054 = vmatpush2.msra.mxu0 0.0
  %3055 = vmatprep.subr.mxu0 0.0
  %3056 = vmatpush2.msra.mxu0 0.0
  %3057 = vmatprep.subr.mxu0 0.0
  %3058 = vmatpush2.msra.mxu0 0.0
  %3059 = vmatprep.subr.mxu0 0.0
  %3060 = vmatpush2.msra.mxu0 0.0
  %3061 = vmatprep.subr.mxu0 0.0
  %3062 = vmatpush2.msra.mxu0 0.0
  %3063 = vmatprep.subr.mxu0 0.0
  %3064 = vmatpush2.msra.mxu0 0.0
  %3065 = vmatprep.subr.mxu0 0.0
  %3066 = vmatpush2.msra.mxu0 0.0
  %3067 = vmatprep.subr.mxu0 0.0
  %3068 = vmatpush2.msra.mxu0 0.0
  %3069 = vmatprep.subr.mxu0 0.0
  %3070 = vmatpush2.msra.mxu0 0.0
  %3071 = vmatprep.subr.mxu0 0.0
  %3072 = vmatpush2.msra.mxu0 0.0
  %3073 = vmatprep.subr.mxu0 0.0
  %3074 = vmatpush2.msra.mxu0 0.0
  %3075 = vmatprep.subr.mxu0 0.0
  %3076 = vmatpush2.msra.mxu0 0.0
  %3077 = vmatprep.subr.mxu0 0.0
  %3078 = vmatpush2.msra.mxu0 0.0
  %3079 = vmatprep.subr.mxu0 0.0
  %3080 = vmatpush2.msra.mxu0 0.0
  %3081 = vmatprep.mubr.f32.mxu0 0.0
  %3082 = vmatmul.mubr.f32.gmra.mxu0 %v3015
  %v3083 = vpop.f32.mrf.mxu0
  %v3084 = vadd.f32 0.0, %v3083
  %v3085 = vpop.f32.mrf.mxu0
  %3086 = vdwg.mxu0
  %3088 = vrot.lane.b32.xlu0 %v3084, 8
  %v3089 = vpop.permute.xlu0 %3088
  %3091 = vst.msk [vmem:[#allocation2 + $0x8] sm:$0xff] %vm548, %v3089
  %3092 = vrot.lane.b32.xlu0 %v2067, 112
  %v3093 = vpop.permute.xlu0 %3092
  %3094 = vrot.lane.b32.xlu0 %v2067, 80
  %v3095 = vpop.permute.xlu0 %3094
  %v3096 = vsel %vm208, %v3093, 0
  %v3098 = vsel %vm208, %v3095, 0
  %3100 = vmatprep.subr.mxu0 0.0
  %3101 = vmatpush1.xpose.msra.mxu0 0.0
  %3102 = vmatprep.subr.mxu0 0.0
  %3103 = vmatpush1.xpose.msra.mxu0 0.0
  %3104 = vmatprep.subr.mxu0 0.0
  %3105 = vmatpush1.xpose.msra.mxu0 0.0
  %3106 = vmatprep.subr.mxu0 0.0
  %3107 = vmatpush1.xpose.msra.mxu0 0.0
  %3108 = vmatprep.subr.mxu0 0.0
  %3109 = vmatpush1.xpose.msra.mxu0 0.0
  %3110 = vmatprep.subr.mxu0 0.0
  %3111 = vmatpush1.xpose.msra.mxu0 0.0
  %3112 = vmatprep.subr.mxu0 0.0
  %3113 = vmatpush1.xpose.msra.mxu0 0.0
  %3114 = vmatprep.subr.mxu0 0.0
  %3115 = vmatpush1.xpose.msra.mxu0 0.0
  %3116 = vmatprep.subr.mxu0 0.0
  %3117 = vmatpush1.xpose.msra.mxu0 0.0
  %3118 = vmatprep.subr.mxu0 0.0
  %3119 = vmatpush1.xpose.msra.mxu0 0.0
  %3120 = vmatprep.subr.mxu0 0.0
  %3121 = vmatpush1.xpose.msra.mxu0 0.0
  %3122 = vmatprep.subr.mxu0 0.0
  %3123 = vmatpush1.xpose.msra.mxu0 0.0
  %3124 = vmatprep.subr.mxu0 0.0
  %3125 = vmatpush1.xpose.msra.mxu0 0.0
  %3126 = vmatprep.subr.mxu0 0.0
  %3127 = vmatpush1.xpose.msra.mxu0 0.0
  %3128 = vmatprep.subr.mxu0 0.0
  %3129 = vmatpush1.xpose.msra.mxu0 0.0
  %3130 = vmatprep.subr.mxu0 0.0
  %3131 = vmatpush1.xpose.msra.mxu0 %v3098
  %3132 = vmatprep.subr.mxu0 0.0
  %3133 = vmatpush2.xpose.msra.mxu0 0.0
  %3134 = vmatprep.subr.mxu0 0.0
  %3135 = vmatpush2.xpose.msra.mxu0 0.0
  %3136 = vmatprep.subr.mxu0 0.0
  %3137 = vmatpush2.xpose.msra.mxu0 0.0
  %3138 = vmatprep.subr.mxu0 0.0
  %3139 = vmatpush2.xpose.msra.mxu0 0.0
  %3140 = vmatprep.subr.mxu0 0.0
  %3141 = vmatpush2.xpose.msra.mxu0 0.0
  %3142 = vmatprep.subr.mxu0 0.0
  %3143 = vmatpush2.xpose.msra.mxu0 0.0
  %3144 = vmatprep.subr.mxu0 0.0
  %3145 = vmatpush2.xpose.msra.mxu0 0.0
  %3146 = vmatprep.subr.mxu0 0.0
  %3147 = vmatpush2.xpose.msra.mxu0 0.0
  %3148 = vmatprep.subr.mxu0 0.0
  %3149 = vmatpush2.xpose.msra.mxu0 0.0
  %3150 = vmatprep.subr.mxu0 0.0
  %3151 = vmatpush2.xpose.msra.mxu0 0.0
  %3152 = vmatprep.subr.mxu0 0.0
  %3153 = vmatpush2.xpose.msra.mxu0 0.0
  %3154 = vmatprep.subr.mxu0 0.0
  %3155 = vmatpush2.xpose.msra.mxu0 0.0
  %3156 = vmatprep.subr.mxu0 0.0
  %3157 = vmatpush2.xpose.msra.mxu0 0.0
  %3158 = vmatprep.subr.mxu0 0.0
  %3159 = vmatpush2.xpose.msra.mxu0 0.0
  %3160 = vmatprep.subr.mxu0 0.0
  %3161 = vmatpush2.xpose.msra.mxu0 0.0
  %3162 = vmatprep.subr.mxu0 0.0
  %3163 = vmatpush2.xpose.msra.mxu0 0.0
  %3164 = vmatprep.mubr.f32.mxu0 0.0
  %3165 = vmatmul.mubr.f32.gmra.mxu0 %v3096
  %v3166 = vpop.f32.mrf.mxu0
  %v3167 = vadd.f32 0.0, %v3166
  %v3168 = vpop.f32.mrf.mxu0
  %3169 = vdwg.mxu0
  %v3170 = vmul.f32 %v3167, 0.35355338
  %v3171 = vadd.f32 %v3170, %v977
  %v3172 = vsel %vm208, %v3171, -inf
  %3173 = vmax.xlane.f32.xlu0 %v3172
  %v3174 = vpop.xlane.xlu0 %3173
  %v3175 = vsub.f32 %v3171, %v3174
  %v3176 = vmul.f32 %v3175, 1.442695
  %v3177 = vpow.pop %v3176
  %v3178 = vsel %vm208, %v3177, 0.0
  %3179 = vadd.xlane.f32.xlu0 %v3178
  %v3180 = vpop.xlane.xlu0 %3179
  %v3181 = vrcp.pop %v3180
  %v3182 = vmul.f32 %v3177, %v3181
  %3183 = vrot.lane.b32.xlu0 %v2067, 48
  %v3184 = vpop.permute.xlu0 %3183
  %v3187 = vsel %vm208, %v3182, 0
  %3189 = vmatprep.subr.mxu0 0.0
  %3190 = vmatpush1.msra.mxu0 0.0
  %3191 = vmatprep.subr.mxu0 0.0
  %3192 = vmatpush1.msra.mxu0 0.0
  %3193 = vmatprep.subr.mxu0 0.0
  %3194 = vmatpush1.msra.mxu0 0.0
  %3195 = vmatprep.subr.mxu0 0.0
  %3196 = vmatpush1.msra.mxu0 0.0
  %3197 = vmatprep.subr.mxu0 0.0
  %3198 = vmatpush1.msra.mxu0 0.0
  %3199 = vmatprep.subr.mxu0 0.0
  %3200 = vmatpush1.msra.mxu0 0.0
  %3201 = vmatprep.subr.mxu0 0.0
  %3202 = vmatpush1.msra.mxu0 0.0
  %3203 = vmatprep.subr.mxu0 0.0
  %3204 = vmatpush1.msra.mxu0 0.0
  %3205 = vmatprep.subr.mxu0 0.0
  %3206 = vmatpush1.msra.mxu0 0.0
  %3207 = vmatprep.subr.mxu0 0.0
  %3208 = vmatpush1.msra.mxu0 0.0
  %3209 = vmatprep.subr.mxu0 0.0
  %3210 = vmatpush1.msra.mxu0 0.0
  %3211 = vmatprep.subr.mxu0 0.0
  %3212 = vmatpush1.msra.mxu0 0.0
  %3213 = vmatprep.subr.mxu0 0.0
  %3214 = vmatpush1.msra.mxu0 0.0
  %3215 = vmatprep.subr.mxu0 0.0
  %3216 = vmatpush1.msra.mxu0 0.0
  %3217 = vmatprep.subr.mxu0 0.0
  %3218 = vmatpush1.msra.mxu0 0.0
  %3219 = vmatprep.subr.mxu0 0.0
  %3220 = vmatpush1.msra.mxu0 %v3184
  %3221 = vmatprep.subr.mxu0 0.0
  %3222 = vmatpush2.msra.mxu0 0.0
  %3223 = vmatprep.subr.mxu0 0.0
  %3224 = vmatpush2.msra.mxu0 0.0
  %3225 = vmatprep.subr.mxu0 0.0
  %3226 = vmatpush2.msra.mxu0 0.0
  %3227 = vmatprep.subr.mxu0 0.0
  %3228 = vmatpush2.msra.mxu0 0.0
  %3229 = vmatprep.subr.mxu0 0.0
  %3230 = vmatpush2.msra.mxu0 0.0
  %3231 = vmatprep.subr.mxu0 0.0
  %3232 = vmatpush2.msra.mxu0 0.0
  %3233 = vmatprep.subr.mxu0 0.0
  %3234 = vmatpush2.msra.mxu0 0.0
  %3235 = vmatprep.subr.mxu0 0.0
  %3236 = vmatpush2.msra.mxu0 0.0
  %3237 = vmatprep.subr.mxu0 0.0
  %3238 = vmatpush2.msra.mxu0 0.0
  %3239 = vmatprep.subr.mxu0 0.0
  %3240 = vmatpush2.msra.mxu0 0.0
  %3241 = vmatprep.subr.mxu0 0.0
  %3242 = vmatpush2.msra.mxu0 0.0
  %3243 = vmatprep.subr.mxu0 0.0
  %3244 = vmatpush2.msra.mxu0 0.0
  %3245 = vmatprep.subr.mxu0 0.0
  %3246 = vmatpush2.msra.mxu0 0.0
  %3247 = vmatprep.subr.mxu0 0.0
  %3248 = vmatpush2.msra.mxu0 0.0
  %3249 = vmatprep.subr.mxu0 0.0
  %3250 = vmatpush2.msra.mxu0 0.0
  %3251 = vmatprep.subr.mxu0 0.0
  %3252 = vmatpush2.msra.mxu0 0.0
  %3253 = vmatprep.mubr.f32.mxu0 0.0
  %3254 = vmatmul.mubr.f32.gmra.mxu0 %v3187
  %v3255 = vpop.f32.mrf.mxu0
  %v3256 = vadd.f32 0.0, %v3255
  %v3257 = vpop.f32.mrf.mxu0
  %3258 = vdwg.mxu0
  %3260 = vrot.lane.b32.xlu0 %v3256, 16
  %v3261 = vpop.permute.xlu0 %3260
  %3263 = vst.msk [vmem:[#allocation2 + $0x8] sm:$0xff] %vm721, %v3261
  %3264 = vrot.lane.b32.xlu0 %v2067, 104
  %v3265 = vpop.permute.xlu0 %3264
  %3266 = vrot.lane.b32.xlu0 %v2067, 72
  %v3267 = vpop.permute.xlu0 %3266
  %v3268 = vsel %vm208, %v3265, 0
  %v3270 = vsel %vm208, %v3267, 0
  %3272 = vmatprep.subr.mxu0 0.0
  %3273 = vmatpush1.xpose.msra.mxu0 0.0
  %3274 = vmatprep.subr.mxu0 0.0
  %3275 = vmatpush1.xpose.msra.mxu0 0.0
  %3276 = vmatprep.subr.mxu0 0.0
  %3277 = vmatpush1.xpose.msra.mxu0 0.0
  %3278 = vmatprep.subr.mxu0 0.0
  %3279 = vmatpush1.xpose.msra.mxu0 0.0
  %3280 = vmatprep.subr.mxu0 0.0
  %3281 = vmatpush1.xpose.msra.mxu0 0.0
  %3282 = vmatprep.subr.mxu0 0.0
  %3283 = vmatpush1.xpose.msra.mxu0 0.0
  %3284 = vmatprep.subr.mxu0 0.0
  %3285 = vmatpush1.xpose.msra.mxu0 0.0
  %3286 = vmatprep.subr.mxu0 0.0
  %3287 = vmatpush1.xpose.msra.mxu0 0.0
  %3288 = vmatprep.subr.mxu0 0.0
  %3289 = vmatpush1.xpose.msra.mxu0 0.0
  %3290 = vmatprep.subr.mxu0 0.0
  %3291 = vmatpush1.xpose.msra.mxu0 0.0
  %3292 = vmatprep.subr.mxu0 0.0
  %3293 = vmatpush1.xpose.msra.mxu0 0.0
  %3294 = vmatprep.subr.mxu0 0.0
  %3295 = vmatpush1.xpose.msra.mxu0 0.0
  %3296 = vmatprep.subr.mxu0 0.0
  %3297 = vmatpush1.xpose.msra.mxu0 0.0
  %3298 = vmatprep.subr.mxu0 0.0
  %3299 = vmatpush1.xpose.msra.mxu0 0.0
  %3300 = vmatprep.subr.mxu0 0.0
  %3301 = vmatpush1.xpose.msra.mxu0 0.0
  %3302 = vmatprep.subr.mxu0 0.0
  %3303 = vmatpush1.xpose.msra.mxu0 %v3270
  %3304 = vmatprep.subr.mxu0 0.0
  %3305 = vmatpush2.xpose.msra.mxu0 0.0
  %3306 = vmatprep.subr.mxu0 0.0
  %3307 = vmatpush2.xpose.msra.mxu0 0.0
  %3308 = vmatprep.subr.mxu0 0.0
  %3309 = vmatpush2.xpose.msra.mxu0 0.0
  %3310 = vmatprep.subr.mxu0 0.0
  %3311 = vmatpush2.xpose.msra.mxu0 0.0
  %3312 = vmatprep.subr.mxu0 0.0
  %3313 = vmatpush2.xpose.msra.mxu0 0.0
  %3314 = vmatprep.subr.mxu0 0.0
  %3315 = vmatpush2.xpose.msra.mxu0 0.0
  %3316 = vmatprep.subr.mxu0 0.0
  %3317 = vmatpush2.xpose.msra.mxu0 0.0
  %3318 = vmatprep.subr.mxu0 0.0
  %3319 = vmatpush2.xpose.msra.mxu0 0.0
  %3320 = vmatprep.subr.mxu0 0.0
  %3321 = vmatpush2.xpose.msra.mxu0 0.0
  %3322 = vmatprep.subr.mxu0 0.0
  %3323 = vmatpush2.xpose.msra.mxu0 0.0
  %3324 = vmatprep.subr.mxu0 0.0
  %3325 = vmatpush2.xpose.msra.mxu0 0.0
  %3326 = vmatprep.subr.mxu0 0.0
  %3327 = vmatpush2.xpose.msra.mxu0 0.0
  %3328 = vmatprep.subr.mxu0 0.0
  %3329 = vmatpush2.xpose.msra.mxu0 0.0
  %3330 = vmatprep.subr.mxu0 0.0
  %3331 = vmatpush2.xpose.msra.mxu0 0.0
  %3332 = vmatprep.subr.mxu0 0.0
  %3333 = vmatpush2.xpose.msra.mxu0 0.0
  %3334 = vmatprep.subr.mxu0 0.0
  %3335 = vmatpush2.xpose.msra.mxu0 0.0
  %3336 = vmatprep.mubr.f32.mxu0 0.0
  %3337 = vmatmul.mubr.f32.gmra.mxu0 %v3268
  %v3338 = vpop.f32.mrf.mxu0
  %v3339 = vadd.f32 0.0, %v3338
  %v3340 = vpop.f32.mrf.mxu0
  %3341 = vdwg.mxu0
  %v3342 = vmul.f32 %v3339, 0.35355338
  %v3343 = vadd.f32 %v3342, %v977
  %v3344 = vsel %vm208, %v3343, -inf
  %3345 = vmax.xlane.f32.xlu0 %v3344
  %v3346 = vpop.xlane.xlu0 %3345
  %v3347 = vsub.f32 %v3343, %v3346
  %v3348 = vmul.f32 %v3347, 1.442695
  %v3349 = vpow.pop %v3348
  %v3350 = vsel %vm208, %v3349, 0.0
  %3351 = vadd.xlane.f32.xlu0 %v3350
  %v3352 = vpop.xlane.xlu0 %3351
  %v3353 = vrcp.pop %v3352
  %v3354 = vmul.f32 %v3349, %v3353
  %3355 = vrot.lane.b32.xlu0 %v2067, 40
  %v3356 = vpop.permute.xlu0 %3355
  %v3359 = vsel %vm208, %v3354, 0
  %3361 = vmatprep.subr.mxu0 0.0
  %3362 = vmatpush1.msra.mxu0 0.0
  %3363 = vmatprep.subr.mxu0 0.0
  %3364 = vmatpush1.msra.mxu0 0.0
  %3365 = vmatprep.subr.mxu0 0.0
  %3366 = vmatpush1.msra.mxu0 0.0
  %3367 = vmatprep.subr.mxu0 0.0
  %3368 = vmatpush1.msra.mxu0 0.0
  %3369 = vmatprep.subr.mxu0 0.0
  %3370 = vmatpush1.msra.mxu0 0.0
  %3371 = vmatprep.subr.mxu0 0.0
  %3372 = vmatpush1.msra.mxu0 0.0
  %3373 = vmatprep.subr.mxu0 0.0
  %3374 = vmatpush1.msra.mxu0 0.0
  %3375 = vmatprep.subr.mxu0 0.0
  %3376 = vmatpush1.msra.mxu0 0.0
  %3377 = vmatprep.subr.mxu0 0.0
  %3378 = vmatpush1.msra.mxu0 0.0
  %3379 = vmatprep.subr.mxu0 0.0
  %3380 = vmatpush1.msra.mxu0 0.0
  %3381 = vmatprep.subr.mxu0 0.0
  %3382 = vmatpush1.msra.mxu0 0.0
  %3383 = vmatprep.subr.mxu0 0.0
  %3384 = vmatpush1.msra.mxu0 0.0
  %3385 = vmatprep.subr.mxu0 0.0
  %3386 = vmatpush1.msra.mxu0 0.0
  %3387 = vmatprep.subr.mxu0 0.0
  %3388 = vmatpush1.msra.mxu0 0.0
  %3389 = vmatprep.subr.mxu0 0.0
  %3390 = vmatpush1.msra.mxu0 0.0
  %3391 = vmatprep.subr.mxu0 0.0
  %3392 = vmatpush1.msra.mxu0 %v3356
  %3393 = vmatprep.subr.mxu0 0.0
  %3394 = vmatpush2.msra.mxu0 0.0
  %3395 = vmatprep.subr.mxu0 0.0
  %3396 = vmatpush2.msra.mxu0 0.0
  %3397 = vmatprep.subr.mxu0 0.0
  %3398 = vmatpush2.msra.mxu0 0.0
  %3399 = vmatprep.subr.mxu0 0.0
  %3400 = vmatpush2.msra.mxu0 0.0
  %3401 = vmatprep.subr.mxu0 0.0
  %3402 = vmatpush2.msra.mxu0 0.0
  %3403 = vmatprep.subr.mxu0 0.0
  %3404 = vmatpush2.msra.mxu0 0.0
  %3405 = vmatprep.subr.mxu0 0.0
  %3406 = vmatpush2.msra.mxu0 0.0
  %3407 = vmatprep.subr.mxu0 0.0
  %3408 = vmatpush2.msra.mxu0 0.0
  %3409 = vmatprep.subr.mxu0 0.0
  %3410 = vmatpush2.msra.mxu0 0.0
  %3411 = vmatprep.subr.mxu0 0.0
  %3412 = vmatpush2.msra.mxu0 0.0
  %3413 = vmatprep.subr.mxu0 0.0
  %3414 = vmatpush2.msra.mxu0 0.0
  %3415 = vmatprep.subr.mxu0 0.0
  %3416 = vmatpush2.msra.mxu0 0.0
  %3417 = vmatprep.subr.mxu0 0.0
  %3418 = vmatpush2.msra.mxu0 0.0
  %3419 = vmatprep.subr.mxu0 0.0
  %3420 = vmatpush2.msra.mxu0 0.0
  %3421 = vmatprep.subr.mxu0 0.0
  %3422 = vmatpush2.msra.mxu0 0.0
  %3423 = vmatprep.subr.mxu0 0.0
  %3424 = vmatpush2.msra.mxu0 0.0
  %3425 = vmatprep.mubr.f32.mxu0 0.0
  %3426 = vmatmul.mubr.f32.gmra.mxu0 %v3359
  %v3427 = vpop.f32.mrf.mxu0
  %v3428 = vadd.f32 0.0, %v3427
  %v3429 = vpop.f32.mrf.mxu0
  %3430 = vdwg.mxu0
  %3432 = vrot.lane.b32.xlu0 %v3428, 24
  %v3433 = vpop.permute.xlu0 %3432
  %3435 = vst.msk [vmem:[#allocation2 + $0x8] sm:$0xff] %vm894, %v3433
  %v3436 = vld [vmem:[#allocation2] sm:$0xff]
  %v3437 = vld [vmem:[#allocation2 + $0x8] sm:$0xff]
  %s3438 = scalar_lea.vmem %s7, 32
  %v3439 = vld [vmem:[%s3438] sm:$0xff]
  %v3440 = vld [vmem:[%s3438 + $0x8] sm:$0xff]
  %v3441 = vld [vmem:[%s3438 + $0x10] sm:$0xff]
  %v3442 = vld [vmem:[%s3438 + $0x18] sm:$0xff]
  %s3443 = scalar_lea.vmem %s8, 1
  %v3444 = vld [vmem:[%s3443] sm:$0x1]
  %v3446 = vlaneseq
  %v3447 = vshrl.u32 %v3446, 7
  %v3448 = vsub.s32 0, %v3447
  %v3449 = vrot.slane %v3444, %v3448
  %v3452 = vsel %vm69, %v3436, 0
  %v3455 = vsel %vm69, %v3437, 0
  %3457 = vmatprep.subr.mxu0 0.0
  %3458 = vmatpush1.msra.mxu0 0.0
  %3459 = vmatprep.subr.mxu0 0.0
  %3460 = vmatpush1.msra.mxu0 0.0
  %3461 = vmatprep.subr.mxu0 0.0
  %3462 = vmatpush1.msra.mxu0 0.0
  %3463 = vmatprep.subr.mxu0 0.0
  %3464 = vmatpush1.msra.mxu0 0.0
  %3465 = vmatprep.subr.mxu0 0.0
  %3466 = vmatpush1.msra.mxu0 0.0
  %3467 = vmatprep.subr.mxu0 0.0
  %3468 = vmatpush1.msra.mxu0 0.0
  %3469 = vmatprep.subr.mxu0 0.0
  %3470 = vmatpush1.msra.mxu0 0.0
  %3471 = vmatprep.subr.mxu0 0.0
  %3472 = vmatpush1.msra.mxu0 0.0
  %3473 = vmatprep.subr.mxu0 0.0
  %3474 = vmatpush1.msra.mxu0 0.0
  %3475 = vmatprep.subr.mxu0 0.0
  %3476 = vmatpush1.msra.mxu0 0.0
  %3477 = vmatprep.subr.mxu0 0.0
  %3478 = vmatpush1.msra.mxu0 0.0
  %3479 = vmatprep.subr.mxu0 0.0
  %3480 = vmatpush1.msra.mxu0 0.0
  %3481 = vmatprep.subr.mxu0 0.0
  %3482 = vmatpush1.msra.mxu0 %v3442
  %3483 = vmatprep.subr.mxu0 0.0
  %3484 = vmatpush1.msra.mxu0 %v3441
  %3485 = vmatprep.subr.mxu0 0.0
  %3486 = vmatpush1.msra.mxu0 %v3440
  %3487 = vmatprep.subr.mxu0 0.0
  %3488 = vmatpush1.msra.mxu0 %v3439
  %3489 = vmatprep.subr.mxu0 0.0
  %3490 = vmatpush2.msra.mxu0 0.0
  %3491 = vmatprep.subr.mxu0 0.0
  %3492 = vmatpush2.msra.mxu0 0.0
  %3493 = vmatprep.subr.mxu0 0.0
  %3494 = vmatpush2.msra.mxu0 0.0
  %3495 = vmatprep.subr.mxu0 0.0
  %3496 = vmatpush2.msra.mxu0 0.0
  %3497 = vmatprep.subr.mxu0 0.0
  %3498 = vmatpush2.msra.mxu0 0.0
  %3499 = vmatprep.subr.mxu0 0.0
  %3500 = vmatpush2.msra.mxu0 0.0
  %3501 = vmatprep.subr.mxu0 0.0
  %3502 = vmatpush2.msra.mxu0 0.0
  %3503 = vmatprep.subr.mxu0 0.0
  %3504 = vmatpush2.msra.mxu0 0.0
  %3505 = vmatprep.subr.mxu0 0.0
  %3506 = vmatpush2.msra.mxu0 0.0
  %3507 = vmatprep.subr.mxu0 0.0
  %3508 = vmatpush2.msra.mxu0 0.0
  %3509 = vmatprep.subr.mxu0 0.0
  %3510 = vmatpush2.msra.mxu0 0.0
  %3511 = vmatprep.subr.mxu0 0.0
  %3512 = vmatpush2.msra.mxu0 0.0
  %3513 = vmatprep.subr.mxu0 0.0
  %3514 = vmatpush2.msra.mxu0 0.0
  %3515 = vmatprep.subr.mxu0 0.0
  %3516 = vmatpush2.msra.mxu0 0.0
  %3517 = vmatprep.subr.mxu0 0.0
  %3518 = vmatpush2.msra.mxu0 0.0
  %3519 = vmatprep.subr.mxu0 0.0
  %3520 = vmatpush2.msra.mxu0 0.0
  %3521 = vmatprep.mubr.f32.mxu0 0.0
  %3522 = vmatmul.mubr.f32.gmra.mxu0 %v3452
  %v3523 = vpop.f32.mrf.mxu0
  %v3524 = vadd.f32 %v3449, %v3523
  %v3525 = vpop.f32.mrf.mxu0
  %3526 = vmatprep.mubr.f32.mxu0 0.0
  %3527 = vmatmul.mubr.f32.gmra.mxu0 %v3455
  %v3528 = vpop.f32.mrf.mxu0
  %v3529 = vadd.f32 %v3449, %v3528
  %v3530 = vpop.f32.mrf.mxu0
  %3531 = vdwg.mxu0
  %v3532 = vadd.f32 %v3524, %v1974
  %v3533 = vadd.f32 %v3529, %v1975
  %s3534 = scalar_lea.vmem %s9, 1
  %v3535 = vld [vmem:[%s3534] sm:$0x1]
  %s3536 = scalar_lea.vmem %s10, 1
  %v3537 = vld [vmem:[%s3536] sm:$0x1]
  %v3538 = vsel %vm69, %v3532, 0.0
  %3539 = vadd.xlane.f32.xlu0 %v3538
  %v3540 = vpop.xlane.xlu0 %3539
  %v3541 = vsel %vm69, %v3533, 0.0
  %3542 = vadd.xlane.f32.xlu0 %v3541
  %v3543 = vpop.xlane.xlu0 %3542
  %v3544 = vmul.f32 %v3540, %v76
  %v3545 = vmul.f32 %v3543, %v76
  %v3546 = vsub.f32 %v3532, %v3544
  %v3547 = vsub.f32 %v3533, %v3545
  %v3548 = vmul.f32 %v3546, %v3546
  %v3549 = vmul.f32 %v3547, %v3547
  %v3550 = vsel %vm69, %v3548, 0.0
  %3551 = vadd.xlane.f32.xlu0 %v3550
  %v3552 = vpop.xlane.xlu0 %3551
  %v3553 = vsel %vm69, %v3549, 0.0
  %3554 = vadd.xlane.f32.xlu0 %v3553
  %v3555 = vpop.xlane.xlu0 %3554
  %v3556 = vmul.f32 %v3552, %v76
  %v3557 = vmul.f32 %v3555, %v76
  %v3558 = vadd.f32 %v3556, 1e-12
  %v3559 = vadd.f32 %v3557, 1e-12
  %v3560 = vrsqrt.pop %v3558
  %v3561 = vrsqrt.pop %v3559
  %v3562 = vmul.f32 %v3546, %v3560
  %v3563 = vmul.f32 %v3547, %v3561
  %v3565 = vlaneseq
  %v3566 = vshrl.u32 %v3565, 7
  %v3567 = vsub.s32 0, %v3566
  %v3568 = vrot.slane %v3535, %v3567
  %v3570 = vmul.f32 %v3562, %v3568
  %v3571 = vmul.f32 %v3563, %v3568
  %v3573 = vlaneseq
  %v3574 = vshrl.u32 %v3573, 7
  %v3575 = vsub.s32 0, %v3574
  %v3576 = vrot.slane %v3537, %v3575
  %v3578 = vadd.f32 %v3570, %v3576
  %v3579 = vadd.f32 %v3571, %v3576
  %s3580 = scalar_lea.vmem %s11, 32
  %v3581 = vld [vmem:[%s3580] sm:$0xff]
  %v3582 = vld [vmem:[%s3580 + $0x8] sm:$0xff]
  %v3583 = vld [vmem:[%s3580 + $0x10] sm:$0xff]
  %v3584 = vld [vmem:[%s3580 + $0x18] sm:$0xff]
  %s3585 = scalar_lea.vmem %s12, 1
  %v3586 = vld [vmem:[%s3585] sm:$0x1]
  %v3588 = vlaneseq
  %v3589 = vshrl.u32 %v3588, 7
  %v3590 = vsub.s32 0, %v3589
  %v3591 = vrot.slane %v3586, %v3590
  %v3594 = vsel %vm69, %v3578, 0
  %v3597 = vsel %vm69, %v3579, 0
  %3599 = vmatprep.subr.mxu0 0.0
  %3600 = vmatpush1.msra.mxu0 0.0
  %3601 = vmatprep.subr.mxu0 0.0
  %3602 = vmatpush1.msra.mxu0 0.0
  %3603 = vmatprep.subr.mxu0 0.0
  %3604 = vmatpush1.msra.mxu0 0.0
  %3605 = vmatprep.subr.mxu0 0.0
  %3606 = vmatpush1.msra.mxu0 0.0
  %3607 = vmatprep.subr.mxu0 0.0
  %3608 = vmatpush1.msra.mxu0 0.0
  %3609 = vmatprep.subr.mxu0 0.0
  %3610 = vmatpush1.msra.mxu0 0.0
  %3611 = vmatprep.subr.mxu0 0.0
  %3612 = vmatpush1.msra.mxu0 0.0
  %3613 = vmatprep.subr.mxu0 0.0
  %3614 = vmatpush1.msra.mxu0 0.0
  %3615 = vmatprep.subr.mxu0 0.0
  %3616 = vmatpush1.msra.mxu0 0.0
  %3617 = vmatprep.subr.mxu0 0.0
  %3618 = vmatpush1.msra.mxu0 0.0
  %3619 = vmatprep.subr.mxu0 0.0
  %3620 = vmatpush1.msra.mxu0 0.0
  %3621 = vmatprep.subr.mxu0 0.0
  %3622 = vmatpush1.msra.mxu0 0.0
  %3623 = vmatprep.subr.mxu0 0.0
  %3624 = vmatpush1.msra.mxu0 %v3584
  %3625 = vmatprep.subr.mxu0 0.0
  %3626 = vmatpush1.msra.mxu0 %v3583
  %3627 = vmatprep.subr.mxu0 0.0
  %3628 = vmatpush1.msra.mxu0 %v3582
  %3629 = vmatprep.subr.mxu0 0.0
  %3630 = vmatpush1.msra.mxu0 %v3581
  %3631 = vmatprep.subr.mxu0 0.0
  %3632 = vmatpush2.msra.mxu0 0.0
  %3633 = vmatprep.subr.mxu0 0.0
  %3634 = vmatpush2.msra.mxu0 0.0
  %3635 = vmatprep.subr.mxu0 0.0
  %3636 = vmatpush2.msra.mxu0 0.0
  %3637 = vmatprep.subr.mxu0 0.0
  %3638 = vmatpush2.msra.mxu0 0.0
  %3639 = vmatprep.subr.mxu0 0.0
  %3640 = vmatpush2.msra.mxu0 0.0
  %3641 = vmatprep.subr.mxu0 0.0
  %3642 = vmatpush2.msra.mxu0 0.0
  %3643 = vmatprep.subr.mxu0 0.0
  %3644 = vmatpush2.msra.mxu0 0.0
  %3645 = vmatprep.subr.mxu0 0.0
  %3646 = vmatpush2.msra.mxu0 0.0
  %3647 = vmatprep.subr.mxu0 0.0
  %3648 = vmatpush2.msra.mxu0 0.0
  %3649 = vmatprep.subr.mxu0 0.0
  %3650 = vmatpush2.msra.mxu0 0.0
  %3651 = vmatprep.subr.mxu0 0.0
  %3652 = vmatpush2.msra.mxu0 0.0
  %3653 = vmatprep.subr.mxu0 0.0
  %3654 = vmatpush2.msra.mxu0 0.0
  %3655 = vmatprep.subr.mxu0 0.0
  %3656 = vmatpush2.msra.mxu0 0.0
  %3657 = vmatprep.subr.mxu0 0.0
  %3658 = vmatpush2.msra.mxu0 0.0
  %3659 = vmatprep.subr.mxu0 0.0
  %3660 = vmatpush2.msra.mxu0 0.0
  %3661 = vmatprep.subr.mxu0 0.0
  %3662 = vmatpush2.msra.mxu0 0.0
  %3663 = vmatprep.mubr.f32.mxu0 0.0
  %3664 = vmatmul.mubr.f32.gmra.mxu0 %v3594
  %v3665 = vpop.f32.mrf.mxu0
  %v3666 = vadd.f32 %v3591, %v3665
  %v3667 = vpop.f32.mrf.mxu0
  %3668 = vmatprep.mubr.f32.mxu0 0.0
  %3669 = vmatmul.mubr.f32.gmra.mxu0 %v3597
  %v3670 = vpop.f32.mrf.mxu0
  %v3671 = vadd.f32 %v3591, %v3670
  %v3672 = vpop.f32.mrf.mxu0
  %3673 = vdwg.mxu0
  %v3674 = vmul.f32 %v3666, 0.5
  %v3675 = vmul.f32 %v3671, 0.5
  %v3676 = vmul.f32 %v3666, 0.044715
  %v3677 = vmul.f32 %v3671, 0.044715
  %v3678 = vmul.f32 %v3676, %v3666
  %v3679 = vmul.f32 %v3677, %v3671
  %v3680 = vmul.f32 %v3678, %v3666
  %v3681 = vmul.f32 %v3679, %v3671
  %v3682 = vadd.f32 %v3666, %v3680
  %v3683 = vadd.f32 %v3671, %v3681
  %v3684 = vmul.f32 %v3682, 0.7978846
  %v3685 = vmul.f32 %v3683, 0.7978846
  %v3686 = vtanh.pop %v3684
  %v3687 = vtanh.pop %v3685
  %v3688 = vadd.f32 %v3686, 1.0
  %v3689 = vadd.f32 %v3687, 1.0
  %v3690 = vmul.f32 %v3674, %v3688
  %v3691 = vmul.f32 %v3675, %v3689
  %s3692 = scalar_lea.vmem %s13, 64
  %v3693 = vld [vmem:[%s3692] sm:$0xff]
  %v3694 = vld [vmem:[%s3692 + $0x8] sm:$0xff]
  %v3695 = vld [vmem:[%s3692 + $0x10] sm:$0xff]
  %v3696 = vld [vmem:[%s3692 + $0x18] sm:$0xff]
  %v3697 = vld [vmem:[%s3692 + $0x20] sm:$0xff]
  %v3698 = vld [vmem:[%s3692 + $0x28] sm:$0xff]
  %v3699 = vld [vmem:[%s3692 + $0x30] sm:$0xff]
  %v3700 = vld [vmem:[%s3692 + $0x38] sm:$0xff]
  %s3701 = scalar_lea.vmem %s14, 1
  %v3702 = vld [vmem:[%s3701] sm:$0x1]
  %v3704 = vlaneseq
  %v3705 = vshrl.u32 %v3704, 7
  %v3706 = vsub.s32 0, %v3705
  %v3707 = vrot.slane %v3702, %v3706
  %v3710 = vsel %vm1848, %v3690, 0
  %v3713 = vsel %vm1848, %v3691, 0
  %3715 = vmatprep.subr.mxu0 0.0
  %3716 = vmatpush1.msra.mxu0 0.0
  %3717 = vmatprep.subr.mxu0 0.0
  %3718 = vmatpush1.msra.mxu0 0.0
  %3719 = vmatprep.subr.mxu0 0.0
  %3720 = vmatpush1.msra.mxu0 0.0
  %3721 = vmatprep.subr.mxu0 0.0
  %3722 = vmatpush1.msra.mxu0 0.0
  %3723 = vmatprep.subr.mxu0 0.0
  %3724 = vmatpush1.msra.mxu0 0.0
  %3725 = vmatprep.subr.mxu0 0.0
  %3726 = vmatpush1.msra.mxu0 0.0
  %3727 = vmatprep.subr.mxu0 0.0
  %3728 = vmatpush1.msra.mxu0 0.0
  %3729 = vmatprep.subr.mxu0 0.0
  %3730 = vmatpush1.msra.mxu0 0.0
  %3731 = vmatprep.subr.mxu0 0.0
  %3732 = vmatpush1.msra.mxu0 %v3700
  %3733 = vmatprep.subr.mxu0 0.0
  %3734 = vmatpush1.msra.mxu0 %v3699
  %3735 = vmatprep.subr.mxu0 0.0
  %3736 = vmatpush1.msra.mxu0 %v3698
  %3737 = vmatprep.subr.mxu0 0.0
  %3738 = vmatpush1.msra.mxu0 %v3697
  %3739 = vmatprep.subr.mxu0 0.0
  %3740 = vmatpush1.msra.mxu0 %v3696
  %3741 = vmatprep.subr.mxu0 0.0
  %3742 = vmatpush1.msra.mxu0 %v3695
  %3743 = vmatprep.subr.mxu0 0.0
  %3744 = vmatpush1.msra.mxu0 %v3694
  %3745 = vmatprep.subr.mxu0 0.0
  %3746 = vmatpush1.msra.mxu0 %v3693
  %3747 = vmatprep.subr.mxu0 0.0
  %3748 = vmatpush2.msra.mxu0 0.0
  %3749 = vmatprep.subr.mxu0 0.0
  %3750 = vmatpush2.msra.mxu0 0.0
  %3751 = vmatprep.subr.mxu0 0.0
  %3752 = vmatpush2.msra.mxu0 0.0
  %3753 = vmatprep.subr.mxu0 0.0
  %3754 = vmatpush2.msra.mxu0 0.0
  %3755 = vmatprep.subr.mxu0 0.0
  %3756 = vmatpush2.msra.mxu0 0.0
  %3757 = vmatprep.subr.mxu0 0.0
  %3758 = vmatpush2.msra.mxu0 0.0
  %3759 = vmatprep.subr.mxu0 0.0
  %3760 = vmatpush2.msra.mxu0 0.0
  %3761 = vmatprep.subr.mxu0 0.0
  %3762 = vmatpush2.msra.mxu0 0.0
  %3763 = vmatprep.subr.mxu0 0.0
  %3764 = vmatpush2.msra.mxu0 0.0
  %3765 = vmatprep.subr.mxu0 0.0
  %3766 = vmatpush2.msra.mxu0 0.0
  %3767 = vmatprep.subr.mxu0 0.0
  %3768 = vmatpush2.msra.mxu0 0.0
  %3769 = vmatprep.subr.mxu0 0.0
  %3770 = vmatpush2.msra.mxu0 0.0
  %3771 = vmatprep.subr.mxu0 0.0
  %3772 = vmatpush2.msra.mxu0 0.0
  %3773 = vmatprep.subr.mxu0 0.0
  %3774 = vmatpush2.msra.mxu0 0.0
  %3775 = vmatprep.subr.mxu0 0.0
  %3776 = vmatpush2.msra.mxu0 0.0
  %3777 = vmatprep.subr.mxu0 0.0
  %3778 = vmatpush2.msra.mxu0 0.0
  %3779 = vmatprep.mubr.f32.mxu0 0.0
  %3780 = vmatmul.mubr.f32.gmra.mxu0 %v3710
  %v3781 = vpop.f32.mrf.mxu0
  %v3782 = vadd.f32 %v3707, %v3781
  %v3783 = vpop.f32.mrf.mxu0
  %3784 = vmatprep.mubr.f32.mxu0 0.0
  %3785 = vmatmul.mubr.f32.gmra.mxu0 %v3713
  %v3786 = vpop.f32.mrf.mxu0
  %v3787 = vadd.f32 %v3707, %v3786
  %v3788 = vpop.f32.mrf.mxu0
  %3789 = vdwg.mxu0
  %v3790 = vadd.f32 %v3782, %v3578
  %v3791 = vadd.f32 %v3787, %v3579
  %s3792 = scalar_lea.vmem %s15, 1
  %v3793 = vld [vmem:[%s3792] sm:$0x1]
  %s3794 = scalar_lea.vmem %s16, 1
  %v3795 = vld [vmem:[%s3794] sm:$0x1]
  %v3796 = vsel %vm69, %v3790, 0.0
  %3797 = vadd.xlane.f32.xlu0 %v3796
  %v3798 = vpop.xlane.xlu0 %3797
  %v3799 = vsel %vm69, %v3791, 0.0
  %3800 = vadd.xlane.f32.xlu0 %v3799
  %v3801 = vpop.xlane.xlu0 %3800
  %v3802 = vmul.f32 %v3798, %v76
  %v3803 = vmul.f32 %v3801, %v76
  %v3804 = vsub.f32 %v3790, %v3802
  %v3805 = vsub.f32 %v3791, %v3803
  %v3806 = vmul.f32 %v3804, %v3804
  %v3807 = vmul.f32 %v3805, %v3805
  %v3808 = vsel %vm69, %v3806, 0.0
  %3809 = vadd.xlane.f32.xlu0 %v3808
  %v3810 = vpop.xlane.xlu0 %3809
  %v3811 = vsel %vm69, %v3807, 0.0
  %3812 = vadd.xlane.f32.xlu0 %v3811
  %v3813 = vpop.xlane.xlu0 %3812
  %v3814 = vmul.f32 %v3810, %v76
  %v3815 = vmul.f32 %v3813, %v76
  %v3816 = vadd.f32 %v3814, 1e-12
  %v3817 = vadd.f32 %v3815, 1e-12
  %v3818 = vrsqrt.pop %v3816
  %v3819 = vrsqrt.pop %v3817
  %v3820 = vmul.f32 %v3804, %v3818
  %v3821 = vmul.f32 %v3805, %v3819
  %v3823 = vlaneseq
  %v3824 = vshrl.u32 %v3823, 7
  %v3825 = vsub.s32 0, %v3824
  %v3826 = vrot.slane %v3793, %v3825
  %v3828 = vmul.f32 %v3820, %v3826
  %v3829 = vmul.f32 %v3821, %v3826
  %v3831 = vlaneseq
  %v3832 = vshrl.u32 %v3831, 7
  %v3833 = vsub.s32 0, %v3832
  %v3834 = vrot.slane %v3795, %v3833
  %v3836 = vadd.f32 %v3828, %v3834
  %v3837 = vadd.f32 %v3829, %v3834
  %v3838 = vld [vmem:[%s17] sm:$0xff]
  %v3839 = vld [vmem:[%s17 + $0x8] sm:$0xff]
  %v3840 = vld [vmem:[%s17 + $0x10] sm:$0xff]
  %v3841 = vld [vmem:[%s17 + $0x18] sm:$0xff]
  %v3842 = vld [vmem:[%s18] sm:$0x1]
  %v3844 = vlaneseq
  %v3845 = vshrl.u32 %v3844, 7
  %v3846 = vsub.s32 0, %v3845
  %v3847 = vrot.slane %v3842, %v3846
  %v3850 = vsel %vm69, %v3836, 0
  %v3853 = vsel %vm69, %v3837, 0
  %3855 = vmatprep.subr.mxu0 0.0
  %3856 = vmatpush1.msra.mxu0 0.0
  %3857 = vmatprep.subr.mxu0 0.0
  %3858 = vmatpush1.msra.mxu0 0.0
  %3859 = vmatprep.subr.mxu0 0.0
  %3860 = vmatpush1.msra.mxu0 0.0
  %3861 = vmatprep.subr.mxu0 0.0
  %3862 = vmatpush1.msra.mxu0 0.0
  %3863 = vmatprep.subr.mxu0 0.0
  %3864 = vmatpush1.msra.mxu0 0.0
  %3865 = vmatprep.subr.mxu0 0.0
  %3866 = vmatpush1.msra.mxu0 0.0
  %3867 = vmatprep.subr.mxu0 0.0
  %3868 = vmatpush1.msra.mxu0 0.0
  %3869 = vmatprep.subr.mxu0 0.0
  %3870 = vmatpush1.msra.mxu0 0.0
  %3871 = vmatprep.subr.mxu0 0.0
  %3872 = vmatpush1.msra.mxu0 0.0
  %3873 = vmatprep.subr.mxu0 0.0
  %3874 = vmatpush1.msra.mxu0 0.0
  %3875 = vmatprep.subr.mxu0 0.0
  %3876 = vmatpush1.msra.mxu0 0.0
  %3877 = vmatprep.subr.mxu0 0.0
  %3878 = vmatpush1.msra.mxu0 0.0
  %3879 = vmatprep.subr.mxu0 0.0
  %3880 = vmatpush1.msra.mxu0 %v3841
  %3881 = vmatprep.subr.mxu0 0.0
  %3882 = vmatpush1.msra.mxu0 %v3840
  %3883 = vmatprep.subr.mxu0 0.0
  %3884 = vmatpush1.msra.mxu0 %v3839
  %3885 = vmatprep.subr.mxu0 0.0
  %3886 = vmatpush1.msra.mxu0 %v3838
  %3887 = vmatprep.subr.mxu0 0.0
  %3888 = vmatpush2.msra.mxu0 0.0
  %3889 = vmatprep.subr.mxu0 0.0
  %3890 = vmatpush2.msra.mxu0 0.0
  %3891 = vmatprep.subr.mxu0 0.0
  %3892 = vmatpush2.msra.mxu0 0.0
  %3893 = vmatprep.subr.mxu0 0.0
  %3894 = vmatpush2.msra.mxu0 0.0
  %3895 = vmatprep.subr.mxu0 0.0
  %3896 = vmatpush2.msra.mxu0 0.0
  %3897 = vmatprep.subr.mxu0 0.0
  %3898 = vmatpush2.msra.mxu0 0.0
  %3899 = vmatprep.subr.mxu0 0.0
  %3900 = vmatpush2.msra.mxu0 0.0
  %3901 = vmatprep.subr.mxu0 0.0
  %3902 = vmatpush2.msra.mxu0 0.0
  %3903 = vmatprep.subr.mxu0 0.0
  %3904 = vmatpush2.msra.mxu0 0.0
  %3905 = vmatprep.subr.mxu0 0.0
  %3906 = vmatpush2.msra.mxu0 0.0
  %3907 = vmatprep.subr.mxu0 0.0
  %3908 = vmatpush2.msra.mxu0 0.0
  %3909 = vmatprep.subr.mxu0 0.0
  %3910 = vmatpush2.msra.mxu0 0.0
  %3911 = vmatprep.subr.mxu0 0.0
  %3912 = vmatpush2.msra.mxu0 0.0
  %3913 = vmatprep.subr.mxu0 0.0
  %3914 = vmatpush2.msra.mxu0 0.0
  %3915 = vmatprep.subr.mxu0 0.0
  %3916 = vmatpush2.msra.mxu0 0.0
  %3917 = vmatprep.subr.mxu0 0.0
  %3918 = vmatpush2.msra.mxu0 0.0
  %3919 = vmatprep.mubr.f32.mxu0 0.0
  %3920 = vmatmul.mubr.f32.gmra.mxu0 %v3850
  %v3921 = vpop.f32.mrf.mxu0
  %v3922 = vadd.f32 %v3847, %v3921
  %v3923 = vpop.f32.mrf.mxu0
  %3924 = vmatprep.mubr.f32.mxu0 0.0
  %3925 = vmatmul.mubr.f32.gmra.mxu0 %v3853
  %v3926 = vpop.f32.mrf.mxu0
  %v3927 = vadd.f32 %v3847, %v3926
  %v3928 = vpop.f32.mrf.mxu0
  %3929 = vdwg.mxu0
  %v3930 = vld [vmem:[%s2] sm:$0xff]
  %v3931 = vld [vmem:[%s2 + $0x8] sm:$0xff]
  %vm3932 = vcmp.gt.f32.partialorder %v3930, 0.0
  %vm3933 = vcmp.gt.f32.partialorder %v3931, 0.0
  %v3934 = vsel %vm3932, 1, 0
  %v3935 = vsel %vm3933, 1, 0
  %3936 = vset.pattern.permute.xlu0 0
  %3937 = vperm.xlu0 %3936, %v3934
  %v3938 = vpop.permute.xlu0 %3937
  %3939 = vset.pattern.permute.xlu0 0
  %3940 = vperm.xlu0 %3939, %v3935
  %v3941 = vpop.permute.xlu0 %3940
  %vm3942 = vcmp.eq.s32.totalorder %v3938, 1
  %vm3943 = vcmp.eq.s32.totalorder %v3941, 1
  %v3944 = vsel %vm3942, %v3922, -10000000.0
  %v3945 = vsel %vm3943, %v3927, -10000000.0
  %vm3946 = vcmask 15360
  %3947 = vst.msk [vmem:[%s19] sm:$0xff] %vm3946, %v3944
  %3948 = vst.msk [vmem:[%s19 + $0x8] sm:$0xff] %vm3946, %v3945
  // Predicated region
  $region78: #{bert_qa_forward.1} parent=0 // pred_check
    _
  $region79: #{bert_qa_forward.1} parent=0 // pred_check_branch
    %3950 = sbr.rel (0) target = $region81
  $region80: #{bert_qa_forward.1} parent=0 // pred_region
    _
  $region81: #{bert_qa_forward.1} parent=0 // pred_fallthru
    _
  // Predicated region
  $region82: #{bert_qa_forward.1} parent=0 // pred_check
    _
  $region83: #{bert_qa_forward.1} parent=0 // pred_check_branch
    %3952 = sbr.rel (0) target = $region85
  $region84: #{bert_qa_forward.1} parent=0 // pred_region
    _
  $region85: #{bert_qa_forward.1} parent=0 // pred_fallthru
    _

</llo_original>
